<compile_context>
chip_gen: v6e
topology: v6e:2x2x1
jax: 0.10.0
libtpu: 0.0.40
codegen_flags: <defaults>
</compile_context>

<pallas_src>
import functools

import jax
import jax.numpy as jnp
from jax import lax
from jax.experimental import pallas as pl
from jax.experimental.pallas import tpu as pltpu


# ----------------------------------------------------------------------------
# Fused kernel (one batch element per grid step; channel-first (C, H*W) layout)
# ----------------------------------------------------------------------------
def _fused_kernel(x_ref, bg_ref,
                  rw_ref, rb_ref,
                  kvw_ref, kvb_ref, kvpw_ref, kvpb_ref,
                  qw_ref, qb_ref, qpw_ref, qpb_ref,
                  ow_ref, ob_ref, owc_ref, obc_ref,
                  o_ref, *, W, nh, dq, dv):
    f32, bf16 = jnp.float32, jnp.bfloat16
    x = x_ref[0].astype(f32)            # (C, HW)   channel-first, spatial on lanes
    bg = bg_ref[0].astype(f32)          # (nbg, HW)
    C, HW = x.shape
    L = rw_ref.shape[0]

    # ---- element-wise helpers (f32; single exp per concat_elu) --------------
    def concat_elu(u):                   # (Cin, N) -> (2*Cin, N): sublane concat only
        em1 = jnp.exp(-jnp.abs(u)) - 1.0           # == elu(-|u|); shared by both halves
        pos = u > 0.0
        return jnp.concatenate([jnp.where(pos, u, em1),     # elu(u)
                                jnp.where(pos, em1, -u)],    # elu(-u)
                               axis=0)

    def lin(u, w, b):                    # 1x1 conv: bf16 MXU operands, f32 accumulate
        return jnp.dot(w, u.astype(bf16), preferred_element_type=f32) + b

    # ---- boundary masks for the causal 2x2 down-right conv taps (hoisted) ---
    lane = lax.broadcasted_iota(jnp.int32, (1, HW), 1)
    not_left = (lane % W != 0).astype(f32)          # zero where w == 0
    not_top = (lane >= W).astype(f32)               # zero where h == 0
    m_r = jnp.broadcast_to(not_left, (2 * C, HW))   # broadcast hoisted out of the loop
    m_d = jnp.broadcast_to(not_top, (2 * C, HW))
    m_dr = m_r * m_d

    def drc_conv(u, w, b):
        # u: (C, HW) f32.  w: (Cout, 8C) bf16, im2col tap order (h-1,w-1),(h-1,w),(h,w-1),(h,w).
        ce = concat_elu(u)                                          # (2C, HW) f32
        # Shifted taps via XLU lane rolls; wrap-around / padded positions zeroed in f32.
        t_dr = pltpu.roll(ce, shift=W + 1, axis=1) * m_dr           # x[h-1, w-1]
        t_d = pltpu.roll(ce, shift=W, axis=1) * m_d                 # x[h-1, w  ]
        t_r = pltpu.roll(ce, shift=1, axis=1) * m_r                 # x[h,   w-1]
        taps = jnp.concatenate([t_dr, t_d, t_r, ce], axis=0).astype(bf16)   # (8C, HW)
        return jnp.dot(w, taps, preferred_element_type=f32) + b

    # ---- input_gated_resnet: GatedResLayer(DownRightConv, (2,2)) x L --------
    ul = x
    for l in range(L):
        w12 = rw_ref[l]                  # (3C, 8C) bf16: rows [0:C]=c1, [C:3C]=c2
        b12 = rb_ref[l]                  # (3C, 1)  f32
        c1 = drc_conv(ul, w12[:C], b12[:C])                         # (C, HW)
        c2 = drc_conv(c1, w12[C:], b12[C:])                         # (2C, HW)
        ul = ul + c2[:C] * jax.nn.sigmoid(c2[C:])

    # ---- GatedResLayer with 1x1 convs (optionally with attention shortcut) --
    def gated_1x1(u, w12, b12, a=None, wc=None, bc=None):
        n = u.shape[0]
        c1 = lin(concat_elu(u), w12[:n], b12[:n])
        if a is not None:
            c1 = c1 + lin(concat_elu(a), wc, bc)
        c2 = lin(concat_elu(c1), w12[n:], b12[n:])
        return u + c2[:n] * jax.nn.sigmoid(c2[n:])

    # ---- in_proj_kv / in_proj_q (gated 1x1 + plain 1x1 projection) ----------
    kv = lin(gated_1x1(jnp.concatenate([x, ul, bg], axis=0), kvw_ref[...], kvb_ref[...]),
             kvpw_ref[...], kvpb_ref[...])                          # (dq+dv, HW)
    # 1/sqrt(dq/nh) is already folded into qpw/qpb host-side.
    q = lin(gated_1x1(jnp.concatenate([ul, bg], axis=0), qw_ref[...], qb_ref[...]),
            qpw_ref[...], qpb_ref[...])                             # (dq, HW)
    k, v = kv[:dq], kv[dq:dq + dv]

    # ---- causal multi-head attention ----------------------------------------
    # Additive causal bias generated in-kernel (no (HW,HW) input, no per-head select).
    rowi = lax.broadcasted_iota(jnp.int32, (HW, HW), 0)             # query index
    coli = lax.broadcasted_iota(jnp.int32, (HW, HW), 1)             # key index
    bias = jnp.where(coli <= rowi, jnp.float32(0.0), jnp.float32(-1e10))

    k_b = k.astype(bf16)
    v_b = v.astype(bf16)
    q_b = q.astype(bf16)
    dqh, dvh = dq // nh, dv // nh
    heads = []
    for h in range(nh):
        qh = q_b[h * dqh:(h + 1) * dqh]                             # (dqh, HW)
        kh = k_b[h * dqh:(h + 1) * dqh]                             # (dqh, HW)
        vh = v_b[h * dvh:(h + 1) * dvh]                             # (dvh, HW)
        # logits[i, j] = sum_c q[c, i] * k[c, j]  -- transposed-LHS MXU contraction.
        logits = lax.dot_general(qh, kh, (((0,), (0,)), ((), ())),
                                 preferred_element_type=f32) + bias           # (HW, HW)
        logits = logits - jnp.max(logits, axis=-1, keepdims=True)
        p = jnp.exp(logits)
        p = p * pl.reciprocal(jnp.sum(p, axis=-1, keepdims=True), approx=True)
        # channel-first PV: out[c, i] = sum_j p[i, j] * v[c, j]
        heads.append(lax.dot_general(vh, p.astype(bf16), (((1,), (1,)), ((), ())),
                                     preferred_element_type=f32))             # (dvh, HW)
    attn = jnp.concatenate(heads, axis=0)                                     # (dv, HW)

    # ---- out_proj: GatedResLayer (1x1) with attention shortcut --------------
    out = gated_1x1(ul, ow_ref[...], ob_ref[...],
                    a=attn, wc=owc_ref[...], bc=obc_ref[...])
    o_ref[0] = out.astype(o_ref.dtype)


# ----------------------------------------------------------------------------
# pallas_call wrapper (single fused call, grid over batch, "parallel" for v7x)
# ----------------------------------------------------------------------------
def attention_gated_residual_forward(params, x_nchw, bg_nchw, *, nh, dq, dv):
    B, C, H, W = x_nchw.shape
    nbg = bg_nchw.shape[1]
    HW = H * W
    x = x_nchw.reshape(B, C, HW)             # NCHW is already channel-first: free reshape
    bg = bg_nchw.reshape(B, nbg, HW)

    # --- coalesce weights: stack c1/c2 (same input width) per stage ----------
    rl = params['input_gated_resnet']
    rw = jnp.stack([jnp.concatenate([p['c1']['w'], p['c2']['w']], 0) for p in rl])  # (L,3C,8C)
    rb = jnp.stack([jnp.concatenate([p['c1']['b'], p['c2']['b']], 0) for p in rl])  # (L,3C,1)
    kvp, qp, op = params['in_proj_kv'], params['in_proj_q'], params['out_proj']
    kvw = jnp.concatenate([kvp['c1']['w'], kvp['c2']['w']], 0)
    kvb = jnp.concatenate([kvp['c1']['b'], kvp['c2']['b']], 0)
    qw = jnp.concatenate([qp['c1']['w'], qp['c2']['w']], 0)
    qb = jnp.concatenate([qp['c1']['b'], qp['c2']['b']], 0)
    ow = jnp.concatenate([op['c1']['w'], op['c2']['w']], 0)
    ob = jnp.concatenate([op['c1']['b'], op['c2']['b']], 0)
    # fold the attention scale 1/sqrt(dq/nh) into the q projection (host-side)
    scale = float(dq // nh) ** -0.5
    qpw = (qp['proj']['w'].astype(jnp.float32) * scale).astype(jnp.bfloat16)
    qpb = qp['proj']['b'] * scale

    weights = [rw, rb, kvw, kvb, kvp['proj']['w'], kvp['proj']['b'],
               qw, qb, qpw, qpb, ow, ob, op['c1c']['w'], op['c1c']['b']]

    def _full(arr):                      # grid-invariant array: same block every step
        nd = arr.ndim
        return pl.BlockSpec(arr.shape, lambda b, _nd=nd: (0,) * _nd)

    in_specs = ([pl.BlockSpec((1, C, HW), lambda b: (b, 0, 0)),
                 pl.BlockSpec((1, nbg, HW), lambda b: (b, 0, 0))]
                + [_full(w) for w in weights])

    kernel = functools.partial(_fused_kernel, W=W, nh=nh, dq=dq, dv=dv)
    out = pl.pallas_call(
        kernel,
        out_shape=jax.ShapeDtypeStruct((B, C, HW), x_nchw.dtype),
        grid=(B,),
        in_specs=in_specs,
        out_specs=pl.BlockSpec((1, C, HW), lambda b: (b, 0, 0)),
        compiler_params=pltpu.CompilerParams(
            dimension_semantics=("parallel",),
            vmem_limit_bytes=48 * 1024 * 1024),
    )(x, bg, *weights)
    return out.reshape(B, C, H, W)


# ----------------------------------------------------------------------------
# Parameter construction (deterministic; weight_norm applied analytically)
# ----------------------------------------------------------------------------
def init_conv_params(key, cin, cout, kh=1, kw=1):
    kv_, kg, kb = jax.random.split(key, 3)
    v = jax.random.normal(kv_, (cout, cin, kh, kw), jnp.float32) * 0.2
    g = jax.random.uniform(kg, (cout,), jnp.float32, minval=0.5, maxval=1.5)
    b = jax.random.normal(kb, (cout,), jnp.float32) * 0.05
    norm = jnp.sqrt(jnp.sum(v * v, axis=(1, 2, 3), keepdims=True))
    w = g.reshape(-1, 1, 1, 1) * v / norm          # weight_norm: w = g * v / ||v||
    # Channel-first matmul weight.  2x2 kernels flattened im2col-style, tap order
    # (h-1,w-1), (h-1,w), (h,w-1), (h,w) to match the in-kernel tap stacking.
    w_flat = jnp.transpose(w, (0, 2, 3, 1)).reshape(cout, kh * kw * cin)
    return {'w': w_flat.astype(jnp.bfloat16), 'b': b.reshape(cout, 1)}


def init_params(key, n_channels, n_background_ch, n_res_layers, nh, dq, dv):
    C = n_channels
    Ckv = 2 * C + n_background_ch
    Cq = C + n_background_ch
    keys = iter(jax.random.split(key, 4 * n_res_layers + 16))
    params = {'input_gated_resnet': []}
    for _ in range(n_res_layers):
        params['input_gated_resnet'].append({
            'c1': init_conv_params(next(keys), 2 * C, C, 2, 2),
            'c2': init_conv_params(next(keys), 2 * C, 2 * C, 2, 2),
        })
    params['in_proj_kv'] = {
        'c1': init_conv_params(next(keys), 2 * Ckv, Ckv),
        'c2': init_conv_params(next(keys), 2 * Ckv, 2 * Ckv),
        'proj': init_conv_params(next(keys), Ckv, dq + dv),
    }
    params['in_proj_q'] = {
        'c1': init_conv_params(next(keys), 2 * Cq, Cq),
        'c2': init_conv_params(next(keys), 2 * Cq, 2 * Cq),
        'proj': init_conv_params(next(keys), Cq, dq),
    }
    params['out_proj'] = {
        'c1': init_conv_params(next(keys), 2 * C, C),
        'c1c': init_conv_params(next(keys), 2 * dv, C),
        'c2': init_conv_params(next(keys), 2 * C, 2 * C),
    }
    return params


# ----------------------------------------------------------------------------
# Pure-JAX reference (mirrors the PyTorch module; same bf16 matmul operands)
# ----------------------------------------------------------------------------
def _ref_concat_elu(x):                      # NCHW
    v = jnp.concatenate([x, -x], axis=1)
    return jnp.where(v > 0, v, jnp.exp(jnp.minimum(v, 0.0)) - 1.0)


def _ref_conv1x1(x, w, b):                   # w: (Cout, Cin) bf16
    y = jnp.einsum('oc,bchw->bohw', w.astype(jnp.bfloat16), x.astype(jnp.bfloat16),
                   preferred_element_type=jnp.float32)
    return y + b.reshape(1, -1, 1, 1)


def _ref_drc_conv(x, w, b):                  # w: (Cout, 4*Cin) bf16 (taps dr, d, r, id)
    B, Cin, H, W = x.shape
    xp = jnp.pad(x, ((0, 0), (0, 0), (1, 0), (1, 0)))
    taps = jnp.concatenate([xp[:, :, 0:H, 0:W], xp[:, :, 0:H, 1:W + 1],
                            xp[:, :, 1:H + 1, 0:W], xp[:, :, 1:H + 1, 1:W + 1]], axis=1)
    y = jnp.einsum('oc,bchw->bohw', w.astype(jnp.bfloat16), taps.astype(jnp.bfloat16),
                   preferred_element_type=jnp.float32)
    return y + b.reshape(1, -1, 1, 1)


def _ref_gated(x, p, a=None, drc=False):
    conv = _ref_drc_conv if drc else _ref_conv1x1
    c1 = conv(_ref_concat_elu(x), p['c1']['w'], p['c1']['b'])
    if a is not None:
        c1 = c1 + _ref_conv1x1(_ref_concat_elu(a), p['c1c']['w'], p['c1c']['b'])
    c2 = conv(_ref_concat_elu(c1), p['c2']['w'], p['c2']['b'])
    C = x.shape[1]
    return x + c2[:, :C] * jax.nn.sigmoid(c2[:, C:])


def _ref_attention(k, q, v, mask, nh):
    B, dq_, H, W = q.shape
    dv_ = v.shape[1]
    HW = H * W
    dqh, dvh = dq_ // nh, dv_ // nh
    fq = q.reshape(B, nh, dqh, HW) * float(dqh) ** -0.5
    fk = k.reshape(B, nh, dqh, HW)
    fv = v.reshape(B, nh, dvh, HW)
    logits = jnp.einsum('bhcq,bhck->bhqk', fq.astype(jnp.bfloat16),
                        fk.astype(jnp.bfloat16), preferred_element_type=jnp.float32)
    logits = jnp.where(mask == 0, jnp.float32(-1e10), logits)
    wts = jax.nn.softmax(logits, axis=-1)
    out = jnp.einsum('bhqk,bhck->bhcq', wts.astype(jnp.bfloat16),
                     fv.astype(jnp.bfloat16), preferred_element_type=jnp.float32)
    return out.reshape(B, dv_, H, W)


def _ref_forward(params, x, bg, mask, *, nh, dq, dv):
    ul = x
    for p in params['input_gated_resnet']:
        ul = _ref_gated(ul, p, drc=True)
    hkv = _ref_gated(jnp.concatenate([x, ul, bg], axis=1), params['in_proj_kv'])
    kv = _ref_conv1x1(hkv, params['in_proj_kv']['proj']['w'],
                      params['in_proj_kv']['proj']['b'])
    k, v = kv[:, :dq], kv[:, dq:dq + dv]
    hq = _ref_gated(jnp.concatenate([ul, bg], axis=1), params['in_proj_q'])
    q = _ref_conv1x1(hq, params['in_proj_q']['proj']['w'],
                     params['in_proj_q']['proj']['b'])
    attn = _ref_attention(k, q, v, mask, nh)
    return _ref_gated(ul, params['out_proj'], a=attn)


# ----------------------------------------------------------------------------
if __name__ == "__main__":
    # Small but lane-dense demo: HW = 256 >= 128, B=4 gives >=2 grid steps per core.
    B, C, H, W = 4, 8, 16, 16
    n_background_ch = 2
    n_res_layers = 2
    nh, dq, dv = 2, 16, 16
    # drop_rate / attn_drop_rate behave as identity (eval mode); n_cond_classes=None.

    root = jax.random.PRNGKey(0)
    kparams, kx, kbg = jax.random.split(root, 3)

    params = init_params(kparams, C, n_background_ch, n_res_layers, nh, dq, dv)
    x = jax.random.normal(kx, (B, C, H, W), jnp.float32)
    background = jax.random.normal(kbg, (B, n_background_ch, H, W), jnp.float32)

    out = attention_gated_residual_forward(params, x, background, nh=nh, dq=dq, dv=dv)
    out = jax.block_until_ready(out)

    assert out.shape == (B, C, H, W), out.shape
    assert bool(jnp.all(jnp.isfinite(out)))

    attn_mask = jnp.tril(jnp.ones((H * W, H * W), jnp.float32))   # causal mask (ref only)
    ref = _ref_forward(params, x, background, attn_mask, nh=nh, dq=dq, dv=dv)
    err = float(jnp.max(jnp.abs(out - ref)))
    assert err < 1e-1, f"max abs err vs reference: {err}"
    print("KERNEL_OK")
</pallas_src>

<mosaic_0001>
module attributes {stable_mosaic.version = 11 : i64} {
  func.func @_fused_kernel(%arg0: i32, %arg1: memref<1x8x256xf32, #tpu.memory_space<vmem>>, %arg2: memref<1x2x256xf32, #tpu.memory_space<vmem>>, %arg3: memref<2x24x64xbf16, #tpu.memory_space<vmem>>, %arg4: memref<2x24x1xf32, #tpu.memory_space<vmem>>, %arg5: memref<54x36xbf16, #tpu.memory_space<vmem>>, %arg6: memref<54x1xf32, #tpu.memory_space<vmem>>, %arg7: memref<32x18xbf16, #tpu.memory_space<vmem>>, %arg8: memref<32x1xf32, #tpu.memory_space<vmem>>, %arg9: memref<30x20xbf16, #tpu.memory_space<vmem>>, %arg10: memref<30x1xf32, #tpu.memory_space<vmem>>, %arg11: memref<16x10xbf16, #tpu.memory_space<vmem>>, %arg12: memref<16x1xf32, #tpu.memory_space<vmem>>, %arg13: memref<24x16xbf16, #tpu.memory_space<vmem>>, %arg14: memref<24x1xf32, #tpu.memory_space<vmem>>, %arg15: memref<8x32xbf16, #tpu.memory_space<vmem>>, %arg16: memref<8x1xf32, #tpu.memory_space<vmem>>, %arg17: memref<1x8x256xf32, #tpu.memory_space<vmem>>) attributes {dimension_semantics = [#tpu.dimension_semantics<parallel>], iteration_bounds = array<i64: 4>, scalar_prefetch = 0 : i64, scratch_operands = 0 : i64, tpu.core_type = #tpu.core_type<tc>, window_params = [{transform_indices = @transform_0, window_bounds = array<i64: 1, 8, 256>}, {transform_indices = @transform_1, window_bounds = array<i64: 1, 2, 256>}, {pipeline_mode = #tpu.pipeline_mode<synchronous>, transform_indices = @transform_2, window_bounds = array<i64: 2, 24, 64>}, {pipeline_mode = #tpu.pipeline_mode<synchronous>, transform_indices = @transform_3, window_bounds = array<i64: 2, 24, 1>}, {pipeline_mode = #tpu.pipeline_mode<synchronous>, transform_indices = @transform_4, window_bounds = array<i64: 54, 36>}, {pipeline_mode = #tpu.pipeline_mode<synchronous>, transform_indices = @transform_5, window_bounds = array<i64: 54, 1>}, {pipeline_mode = #tpu.pipeline_mode<synchronous>, transform_indices = @transform_6, window_bounds = array<i64: 32, 18>}, {pipeline_mode = #tpu.pipeline_mode<synchronous>, transform_indices = @transform_7, window_bounds = array<i64: 32, 1>}, {pipeline_mode = #tpu.pipeline_mode<synchronous>, transform_indices = @transform_8, window_bounds = array<i64: 30, 20>}, {pipeline_mode = #tpu.pipeline_mode<synchronous>, transform_indices = @transform_9, window_bounds = array<i64: 30, 1>}, {pipeline_mode = #tpu.pipeline_mode<synchronous>, transform_indices = @transform_10, window_bounds = array<i64: 16, 10>}, {pipeline_mode = #tpu.pipeline_mode<synchronous>, transform_indices = @transform_11, window_bounds = array<i64: 16, 1>}, {pipeline_mode = #tpu.pipeline_mode<synchronous>, transform_indices = @transform_12, window_bounds = array<i64: 24, 16>}, {pipeline_mode = #tpu.pipeline_mode<synchronous>, transform_indices = @transform_13, window_bounds = array<i64: 24, 1>}, {pipeline_mode = #tpu.pipeline_mode<synchronous>, transform_indices = @transform_14, window_bounds = array<i64: 8, 32>}, {pipeline_mode = #tpu.pipeline_mode<synchronous>, transform_indices = @transform_15, window_bounds = array<i64: 8, 1>}, {transform_indices = @transform_16, window_bounds = array<i64: 1, 8, 256>}]} {
    %c0 = arith.constant 0 : index
    %c0_0 = arith.constant 0 : index
    %c0_1 = arith.constant 0 : index
    %0 = vector.load %arg1[%c0, %c0_0, %c0_1] : memref<1x8x256xf32, #tpu.memory_space<vmem>>, vector<1x8x256xf32>
    %1 = vector.shape_cast %0 : vector<1x8x256xf32> to vector<8x256xf32>
    %c0_2 = arith.constant 0 : index
    %c0_3 = arith.constant 0 : index
    %c0_4 = arith.constant 0 : index
    %2 = vector.load %arg2[%c0_2, %c0_3, %c0_4] : memref<1x2x256xf32, #tpu.memory_space<vmem>>, vector<1x2x256xf32>
    %3 = vector.shape_cast %2 : vector<1x2x256xf32> to vector<2x256xf32>
    %4 = tpu.iota {dimensions = array<i32: 1>} : vector<1x256xi32>
    %c16_i32 = arith.constant 16 : i32
    %c0_i32 = arith.constant 0 : i32
    %5 = arith.cmpi eq, %c16_i32, %c0_i32 : i32
    %c1_i32 = arith.constant 1 : i32
    %6 = arith.select %5, %c1_i32, %c16_i32 : i32
    %7 = vector.broadcast %6 : i32 to vector<1x256xi32>
    %8 = arith.remsi %4, %7 : vector<1x256xi32>
    %c0_i32_5 = arith.constant 0 : i32
    %9 = vector.broadcast %c0_i32_5 : i32 to vector<1x256xi32>
    %10 = arith.cmpi ne, %8, %9 : vector<1x256xi32>
    %c0_i32_6 = arith.constant 0 : i32
    %11 = vector.broadcast %c0_i32_6 : i32 to vector<1x256xi32>
    %12 = arith.cmpi slt, %8, %11 : vector<1x256xi32>
    %c0_i32_7 = arith.constant 0 : i32
    %13 = arith.cmpi slt, %6, %c0_i32_7 : i32
    %14 = vector.broadcast %13 : i1 to vector<1x256xi1>
    %15 = vector.broadcast %14 : vector<1x256xi1> to vector<1x256xi1>
    %16 = arith.xori %12, %15 : vector<1x256xi1>
    %17 = arith.andi %16, %10 : vector<1x256xi1>
    %18 = vector.broadcast %6 : i32 to vector<1x256xi32>
    %19 = arith.addi %8, %18 : vector<1x256xi32>
    %20 = arith.select %17, %19, %8 : vector<1x256xi1>, vector<1x256xi32>
    %c0_i32_8 = arith.constant 0 : i32
    %21 = vector.broadcast %c0_i32_8 : i32 to vector<1x256xi32>
    %22 = arith.cmpi ne, %20, %21 : vector<1x256xi32>
    %23 = arith.extui %22 : vector<1x256xi1> to vector<1x256xi32>
    %24 = arith.sitofp %23 : vector<1x256xi32> to vector<1x256xf32>
    %c16_i32_9 = arith.constant 16 : i32
    %25 = vector.broadcast %c16_i32_9 : i32 to vector<1x256xi32>
    %26 = arith.cmpi sge, %4, %25 : vector<1x256xi32>
    %27 = arith.extui %26 : vector<1x256xi1> to vector<1x256xi32>
    %28 = arith.sitofp %27 : vector<1x256xi32> to vector<1x256xf32>
    %29 = vector.shape_cast %24 : vector<1x256xf32> to vector<1x256xf32>
    %30 = vector.broadcast %29 : vector<1x256xf32> to vector<16x256xf32>
    %31 = vector.shape_cast %28 : vector<1x256xf32> to vector<1x256xf32>
    %32 = vector.broadcast %31 : vector<1x256xf32> to vector<16x256xf32>
    %33 = arith.mulf %30, %32 : vector<16x256xf32>
    %c0_10 = arith.constant 0 : index
    %c0_11 = arith.constant 0 : index
    %c0_12 = arith.constant 0 : index
    %34 = vector.load %arg3[%c0_10, %c0_11, %c0_12] : memref<2x24x64xbf16, #tpu.memory_space<vmem>>, vector<1x24x64xbf16>
    %35 = vector.shape_cast %34 : vector<1x24x64xbf16> to vector<24x64xbf16>
    %c0_13 = arith.constant 0 : index
    %c0_14 = arith.constant 0 : index
    %c0_15 = arith.constant 0 : index
    %36 = vector.load %arg4[%c0_13, %c0_14, %c0_15] : memref<2x24x1xf32, #tpu.memory_space<vmem>>, vector<1x24x1xf32>
    %37 = vector.shape_cast %36 : vector<1x24x1xf32> to vector<24x1xf32>
    %38 = vector.extract_strided_slice %35 {offsets = [0, 0], sizes = [8, 64], strides = [1, 1]} : vector<24x64xbf16> to vector<8x64xbf16>
    %39 = vector.extract_strided_slice %37 {offsets = [0, 0], sizes = [8, 1], strides = [1, 1]} : vector<24x1xf32> to vector<8x1xf32>
    %40 = math.absf %1 : vector<8x256xf32>
    %cst = arith.constant 0.000000e+00 : f32
    %41 = vector.broadcast %cst : f32 to vector<8x256xf32>
    %42 = arith.subf %41, %40 : vector<8x256xf32>
    %43 = math.exp %42 : vector<8x256xf32>
    %cst_16 = arith.constant 1.000000e+00 : f32
    %44 = vector.broadcast %cst_16 : f32 to vector<8x256xf32>
    %45 = arith.subf %43, %44 : vector<8x256xf32>
    %cst_17 = arith.constant 0.000000e+00 : f32
    %46 = vector.broadcast %cst_17 : f32 to vector<8x256xf32>
    %47 = arith.cmpf ogt, %1, %46 : vector<8x256xf32>
    %48 = arith.select %47, %1, %45 : vector<8x256xi1>, vector<8x256xf32>
    %cst_18 = arith.constant 0.000000e+00 : f32
    %49 = vector.broadcast %cst_18 : f32 to vector<8x256xf32>
    %50 = arith.subf %49, %1 : vector<8x256xf32>
    %51 = arith.select %47, %45, %50 : vector<8x256xi1>, vector<8x256xf32>
    %52 = tpu.concatenate %48, %51 in 0 : vector<8x256xf32>, vector<8x256xf32> -> vector<16x256xf32>
    %c17_i32 = arith.constant 17 : i32
    %53 = tpu.dynamic_rotate %52 by %c17_i32 dim 1 : vector<16x256xf32>, i32 -> vector<16x256xf32>
    %54 = arith.mulf %53, %33 : vector<16x256xf32>
    %c16_i32_19 = arith.constant 16 : i32
    %55 = tpu.dynamic_rotate %52 by %c16_i32_19 dim 1 : vector<16x256xf32>, i32 -> vector<16x256xf32>
    %56 = arith.mulf %55, %32 : vector<16x256xf32>
    %c1_i32_20 = arith.constant 1 : i32
    %57 = tpu.dynamic_rotate %52 by %c1_i32_20 dim 1 : vector<16x256xf32>, i32 -> vector<16x256xf32>
    %58 = arith.mulf %57, %30 : vector<16x256xf32>
    %59 = tpu.concatenate %54, %56, %58, %52 in 0 : vector<16x256xf32>, vector<16x256xf32>, vector<16x256xf32>, vector<16x256xf32> -> vector<64x256xf32>
    %60 = arith.truncf %59 : vector<64x256xf32> to vector<64x256xbf16>
    %cst_21 = arith.constant dense<0.000000e+00> : vector<8x256xf32>
    %61 = tpu.matmul %38, %60, %cst_21 {dimension_numbers = #tpu.dot_dimension_numbers<[1], [0], [0], [1], [0, 0, 1, 1], [], []>} : vector<8x64xbf16>, vector<64x256xbf16>, vector<8x256xf32> -> vector<8x256xf32>
    %62 = vector.broadcast %39 : vector<8x1xf32> to vector<8x256xf32>
    %63 = arith.addf %61, %62 : vector<8x256xf32>
    %64 = vector.extract_strided_slice %35 {offsets = [8, 0], sizes = [16, 64], strides = [1, 1]} : vector<24x64xbf16> to vector<16x64xbf16>
    %65 = vector.extract_strided_slice %37 {offsets = [8, 0], sizes = [16, 1], strides = [1, 1]} : vector<24x1xf32> to vector<16x1xf32>
    %66 = math.absf %63 : vector<8x256xf32>
    %cst_22 = arith.constant 0.000000e+00 : f32
    %67 = vector.broadcast %cst_22 : f32 to vector<8x256xf32>
    %68 = arith.subf %67, %66 : vector<8x256xf32>
    %69 = math.exp %68 : vector<8x256xf32>
    %cst_23 = arith.constant 1.000000e+00 : f32
    %70 = vector.broadcast %cst_23 : f32 to vector<8x256xf32>
    %71 = arith.subf %69, %70 : vector<8x256xf32>
    %cst_24 = arith.constant 0.000000e+00 : f32
    %72 = vector.broadcast %cst_24 : f32 to vector<8x256xf32>
    %73 = arith.cmpf ogt, %63, %72 : vector<8x256xf32>
    %74 = arith.select %73, %63, %71 : vector<8x256xi1>, vector<8x256xf32>
    %cst_25 = arith.constant 0.000000e+00 : f32
    %75 = vector.broadcast %cst_25 : f32 to vector<8x256xf32>
    %76 = arith.subf %75, %63 : vector<8x256xf32>
    %77 = arith.select %73, %71, %76 : vector<8x256xi1>, vector<8x256xf32>
    %78 = tpu.concatenate %74, %77 in 0 : vector<8x256xf32>, vector<8x256xf32> -> vector<16x256xf32>
    %c17_i32_26 = arith.constant 17 : i32
    %79 = tpu.dynamic_rotate %78 by %c17_i32_26 dim 1 : vector<16x256xf32>, i32 -> vector<16x256xf32>
    %80 = arith.mulf %79, %33 : vector<16x256xf32>
    %c16_i32_27 = arith.constant 16 : i32
    %81 = tpu.dynamic_rotate %78 by %c16_i32_27 dim 1 : vector<16x256xf32>, i32 -> vector<16x256xf32>
    %82 = arith.mulf %81, %32 : vector<16x256xf32>
    %c1_i32_28 = arith.constant 1 : i32
    %83 = tpu.dynamic_rotate %78 by %c1_i32_28 dim 1 : vector<16x256xf32>, i32 -> vector<16x256xf32>
    %84 = arith.mulf %83, %30 : vector<16x256xf32>
    %85 = tpu.concatenate %80, %82, %84, %78 in 0 : vector<16x256xf32>, vector<16x256xf32>, vector<16x256xf32>, vector<16x256xf32> -> vector<64x256xf32>
    %86 = arith.truncf %85 : vector<64x256xf32> to vector<64x256xbf16>
    %cst_29 = arith.constant dense<0.000000e+00> : vector<16x256xf32>
    %87 = tpu.matmul %64, %86, %cst_29 {dimension_numbers = #tpu.dot_dimension_numbers<[1], [0], [0], [1], [0, 0, 1, 1], [], []>} : vector<16x64xbf16>, vector<64x256xbf16>, vector<16x256xf32> -> vector<16x256xf32>
    %88 = vector.broadcast %65 : vector<16x1xf32> to vector<16x256xf32>
    %89 = arith.addf %87, %88 : vector<16x256xf32>
    %90 = vector.extract_strided_slice %89 {offsets = [0, 0], sizes = [8, 256], strides = [1, 1]} : vector<16x256xf32> to vector<8x256xf32>
    %91 = vector.extract_strided_slice %89 {offsets = [8, 0], sizes = [8, 256], strides = [1, 1]} : vector<16x256xf32> to vector<8x256xf32>
    %92 = arith.negf %91 : vector<8x256xf32>
    %93 = math.exp %92 : vector<8x256xf32>
    %cst_30 = arith.constant 1.000000e+00 : f32
    %94 = vector.broadcast %cst_30 : f32 to vector<8x256xf32>
    %95 = arith.addf %94, %93 : vector<8x256xf32>
    %96 = arith.divf %94, %95 : vector<8x256xf32>
    %97 = arith.mulf %90, %96 : vector<8x256xf32>
    %98 = arith.addf %1, %97 : vector<8x256xf32>
    %c1 = arith.constant 1 : index
    %c0_31 = arith.constant 0 : index
    %c0_32 = arith.constant 0 : index
    %99 = vector.load %arg3[%c1, %c0_31, %c0_32] : memref<2x24x64xbf16, #tpu.memory_space<vmem>>, vector<1x24x64xbf16>
    %100 = vector.shape_cast %99 : vector<1x24x64xbf16> to vector<24x64xbf16>
    %c1_33 = arith.constant 1 : index
    %c0_34 = arith.constant 0 : index
    %c0_35 = arith.constant 0 : index
    %101 = vector.load %arg4[%c1_33, %c0_34, %c0_35] : memref<2x24x1xf32, #tpu.memory_space<vmem>>, vector<1x24x1xf32>
    %102 = vector.shape_cast %101 : vector<1x24x1xf32> to vector<24x1xf32>
    %103 = vector.extract_strided_slice %100 {offsets = [0, 0], sizes = [8, 64], strides = [1, 1]} : vector<24x64xbf16> to vector<8x64xbf16>
    %104 = vector.extract_strided_slice %102 {offsets = [0, 0], sizes = [8, 1], strides = [1, 1]} : vector<24x1xf32> to vector<8x1xf32>
    %105 = math.absf %98 : vector<8x256xf32>
    %cst_36 = arith.constant 0.000000e+00 : f32
    %106 = vector.broadcast %cst_36 : f32 to vector<8x256xf32>
    %107 = arith.subf %106, %105 : vector<8x256xf32>
    %108 = math.exp %107 : vector<8x256xf32>
    %cst_37 = arith.constant 1.000000e+00 : f32
    %109 = vector.broadcast %cst_37 : f32 to vector<8x256xf32>
    %110 = arith.subf %108, %109 : vector<8x256xf32>
    %cst_38 = arith.constant 0.000000e+00 : f32
    %111 = vector.broadcast %cst_38 : f32 to vector<8x256xf32>
    %112 = arith.cmpf ogt, %98, %111 : vector<8x256xf32>
    %113 = arith.select %112, %98, %110 : vector<8x256xi1>, vector<8x256xf32>
    %cst_39 = arith.constant 0.000000e+00 : f32
    %114 = vector.broadcast %cst_39 : f32 to vector<8x256xf32>
    %115 = arith.subf %114, %98 : vector<8x256xf32>
    %116 = arith.select %112, %110, %115 : vector<8x256xi1>, vector<8x256xf32>
    %117 = tpu.concatenate %113, %116 in 0 : vector<8x256xf32>, vector<8x256xf32> -> vector<16x256xf32>
    %c17_i32_40 = arith.constant 17 : i32
    %118 = tpu.dynamic_rotate %117 by %c17_i32_40 dim 1 : vector<16x256xf32>, i32 -> vector<16x256xf32>
    %119 = arith.mulf %118, %33 : vector<16x256xf32>
    %c16_i32_41 = arith.constant 16 : i32
    %120 = tpu.dynamic_rotate %117 by %c16_i32_41 dim 1 : vector<16x256xf32>, i32 -> vector<16x256xf32>
    %121 = arith.mulf %120, %32 : vector<16x256xf32>
    %c1_i32_42 = arith.constant 1 : i32
    %122 = tpu.dynamic_rotate %117 by %c1_i32_42 dim 1 : vector<16x256xf32>, i32 -> vector<16x256xf32>
    %123 = arith.mulf %122, %30 : vector<16x256xf32>
    %124 = tpu.concatenate %119, %121, %123, %117 in 0 : vector<16x256xf32>, vector<16x256xf32>, vector<16x256xf32>, vector<16x256xf32> -> vector<64x256xf32>
    %125 = arith.truncf %124 : vector<64x256xf32> to vector<64x256xbf16>
    %cst_43 = arith.constant dense<0.000000e+00> : vector<8x256xf32>
    %126 = tpu.matmul %103, %125, %cst_43 {dimension_numbers = #tpu.dot_dimension_numbers<[1], [0], [0], [1], [0, 0, 1, 1], [], []>} : vector<8x64xbf16>, vector<64x256xbf16>, vector<8x256xf32> -> vector<8x256xf32>
    %127 = vector.broadcast %104 : vector<8x1xf32> to vector<8x256xf32>
    %128 = arith.addf %126, %127 : vector<8x256xf32>
    %129 = vector.extract_strided_slice %100 {offsets = [8, 0], sizes = [16, 64], strides = [1, 1]} : vector<24x64xbf16> to vector<16x64xbf16>
    %130 = vector.extract_strided_slice %102 {offsets = [8, 0], sizes = [16, 1], strides = [1, 1]} : vector<24x1xf32> to vector<16x1xf32>
    %131 = math.absf %128 : vector<8x256xf32>
    %cst_44 = arith.constant 0.000000e+00 : f32
    %132 = vector.broadcast %cst_44 : f32 to vector<8x256xf32>
    %133 = arith.subf %132, %131 : vector<8x256xf32>
    %134 = math.exp %133 : vector<8x256xf32>
    %cst_45 = arith.constant 1.000000e+00 : f32
    %135 = vector.broadcast %cst_45 : f32 to vector<8x256xf32>
    %136 = arith.subf %134, %135 : vector<8x256xf32>
    %cst_46 = arith.constant 0.000000e+00 : f32
    %137 = vector.broadcast %cst_46 : f32 to vector<8x256xf32>
    %138 = arith.cmpf ogt, %128, %137 : vector<8x256xf32>
    %139 = arith.select %138, %128, %136 : vector<8x256xi1>, vector<8x256xf32>
    %cst_47 = arith.constant 0.000000e+00 : f32
    %140 = vector.broadcast %cst_47 : f32 to vector<8x256xf32>
    %141 = arith.subf %140, %128 : vector<8x256xf32>
    %142 = arith.select %138, %136, %141 : vector<8x256xi1>, vector<8x256xf32>
    %143 = tpu.concatenate %139, %142 in 0 : vector<8x256xf32>, vector<8x256xf32> -> vector<16x256xf32>
    %c17_i32_48 = arith.constant 17 : i32
    %144 = tpu.dynamic_rotate %143 by %c17_i32_48 dim 1 : vector<16x256xf32>, i32 -> vector<16x256xf32>
    %145 = arith.mulf %144, %33 : vector<16x256xf32>
    %c16_i32_49 = arith.constant 16 : i32
    %146 = tpu.dynamic_rotate %143 by %c16_i32_49 dim 1 : vector<16x256xf32>, i32 -> vector<16x256xf32>
    %147 = arith.mulf %146, %32 : vector<16x256xf32>
    %c1_i32_50 = arith.constant 1 : i32
    %148 = tpu.dynamic_rotate %143 by %c1_i32_50 dim 1 : vector<16x256xf32>, i32 -> vector<16x256xf32>
    %149 = arith.mulf %148, %30 : vector<16x256xf32>
    %150 = tpu.concatenate %145, %147, %149, %143 in 0 : vector<16x256xf32>, vector<16x256xf32>, vector<16x256xf32>, vector<16x256xf32> -> vector<64x256xf32>
    %151 = arith.truncf %150 : vector<64x256xf32> to vector<64x256xbf16>
    %cst_51 = arith.constant dense<0.000000e+00> : vector<16x256xf32>
    %152 = tpu.matmul %129, %151, %cst_51 {dimension_numbers = #tpu.dot_dimension_numbers<[1], [0], [0], [1], [0, 0, 1, 1], [], []>} : vector<16x64xbf16>, vector<64x256xbf16>, vector<16x256xf32> -> vector<16x256xf32>
    %153 = vector.broadcast %130 : vector<16x1xf32> to vector<16x256xf32>
    %154 = arith.addf %152, %153 : vector<16x256xf32>
    %155 = vector.extract_strided_slice %154 {offsets = [0, 0], sizes = [8, 256], strides = [1, 1]} : vector<16x256xf32> to vector<8x256xf32>
    %156 = vector.extract_strided_slice %154 {offsets = [8, 0], sizes = [8, 256], strides = [1, 1]} : vector<16x256xf32> to vector<8x256xf32>
    %157 = arith.negf %156 : vector<8x256xf32>
    %158 = math.exp %157 : vector<8x256xf32>
    %cst_52 = arith.constant 1.000000e+00 : f32
    %159 = vector.broadcast %cst_52 : f32 to vector<8x256xf32>
    %160 = arith.addf %159, %158 : vector<8x256xf32>
    %161 = arith.divf %159, %160 : vector<8x256xf32>
    %162 = arith.mulf %155, %161 : vector<8x256xf32>
    %163 = arith.addf %98, %162 : vector<8x256xf32>
    %164 = tpu.concatenate %1, %163, %3 in 0 : vector<8x256xf32>, vector<8x256xf32>, vector<2x256xf32> -> vector<18x256xf32>
    %c0_53 = arith.constant 0 : index
    %c0_54 = arith.constant 0 : index
    %165 = vector.load %arg5[%c0_53, %c0_54] : memref<54x36xbf16, #tpu.memory_space<vmem>>, vector<54x36xbf16>
    %c0_55 = arith.constant 0 : index
    %c0_56 = arith.constant 0 : index
    %166 = vector.load %arg6[%c0_55, %c0_56] : memref<54x1xf32, #tpu.memory_space<vmem>>, vector<54x1xf32>
    %167 = math.absf %164 : vector<18x256xf32>
    %cst_57 = arith.constant 0.000000e+00 : f32
    %168 = vector.broadcast %cst_57 : f32 to vector<18x256xf32>
    %169 = arith.subf %168, %167 : vector<18x256xf32>
    %170 = math.exp %169 : vector<18x256xf32>
    %cst_58 = arith.constant 1.000000e+00 : f32
    %171 = vector.broadcast %cst_58 : f32 to vector<18x256xf32>
    %172 = arith.subf %170, %171 : vector<18x256xf32>
    %cst_59 = arith.constant 0.000000e+00 : f32
    %173 = vector.broadcast %cst_59 : f32 to vector<18x256xf32>
    %174 = arith.cmpf ogt, %164, %173 : vector<18x256xf32>
    %175 = arith.select %174, %164, %172 : vector<18x256xi1>, vector<18x256xf32>
    %cst_60 = arith.constant 0.000000e+00 : f32
    %176 = vector.broadcast %cst_60 : f32 to vector<18x256xf32>
    %177 = arith.subf %176, %164 : vector<18x256xf32>
    %178 = arith.select %174, %172, %177 : vector<18x256xi1>, vector<18x256xf32>
    %179 = tpu.concatenate %175, %178 in 0 : vector<18x256xf32>, vector<18x256xf32> -> vector<36x256xf32>
    %180 = vector.extract_strided_slice %165 {offsets = [0, 0], sizes = [18, 36], strides = [1, 1]} : vector<54x36xbf16> to vector<18x36xbf16>
    %181 = vector.extract_strided_slice %166 {offsets = [0, 0], sizes = [18, 1], strides = [1, 1]} : vector<54x1xf32> to vector<18x1xf32>
    %182 = arith.truncf %179 : vector<36x256xf32> to vector<36x256xbf16>
    %cst_61 = arith.constant dense<0.000000e+00> : vector<18x256xf32>
    %183 = tpu.matmul %180, %182, %cst_61 {dimension_numbers = #tpu.dot_dimension_numbers<[1], [0], [0], [1], [0, 0, 1, 1], [], []>} : vector<18x36xbf16>, vector<36x256xbf16>, vector<18x256xf32> -> vector<18x256xf32>
    %184 = vector.broadcast %181 : vector<18x1xf32> to vector<18x256xf32>
    %185 = arith.addf %183, %184 : vector<18x256xf32>
    %186 = math.absf %185 : vector<18x256xf32>
    %cst_62 = arith.constant 0.000000e+00 : f32
    %187 = vector.broadcast %cst_62 : f32 to vector<18x256xf32>
    %188 = arith.subf %187, %186 : vector<18x256xf32>
    %189 = math.exp %188 : vector<18x256xf32>
    %cst_63 = arith.constant 1.000000e+00 : f32
    %190 = vector.broadcast %cst_63 : f32 to vector<18x256xf32>
    %191 = arith.subf %189, %190 : vector<18x256xf32>
    %cst_64 = arith.constant 0.000000e+00 : f32
    %192 = vector.broadcast %cst_64 : f32 to vector<18x256xf32>
    %193 = arith.cmpf ogt, %185, %192 : vector<18x256xf32>
    %194 = arith.select %193, %185, %191 : vector<18x256xi1>, vector<18x256xf32>
    %cst_65 = arith.constant 0.000000e+00 : f32
    %195 = vector.broadcast %cst_65 : f32 to vector<18x256xf32>
    %196 = arith.subf %195, %185 : vector<18x256xf32>
    %197 = arith.select %193, %191, %196 : vector<18x256xi1>, vector<18x256xf32>
    %198 = tpu.concatenate %194, %197 in 0 : vector<18x256xf32>, vector<18x256xf32> -> vector<36x256xf32>
    %199 = vector.extract_strided_slice %165 {offsets = [18, 0], sizes = [36, 36], strides = [1, 1]} : vector<54x36xbf16> to vector<36x36xbf16>
    %200 = vector.extract_strided_slice %166 {offsets = [18, 0], sizes = [36, 1], strides = [1, 1]} : vector<54x1xf32> to vector<36x1xf32>
    %201 = arith.truncf %198 : vector<36x256xf32> to vector<36x256xbf16>
    %cst_66 = arith.constant dense<0.000000e+00> : vector<36x256xf32>
    %202 = tpu.matmul %199, %201, %cst_66 {dimension_numbers = #tpu.dot_dimension_numbers<[1], [0], [0], [1], [0, 0, 1, 1], [], []>} : vector<36x36xbf16>, vector<36x256xbf16>, vector<36x256xf32> -> vector<36x256xf32>
    %203 = vector.broadcast %200 : vector<36x1xf32> to vector<36x256xf32>
    %204 = arith.addf %202, %203 : vector<36x256xf32>
    %205 = vector.extract_strided_slice %204 {offsets = [0, 0], sizes = [18, 256], strides = [1, 1]} : vector<36x256xf32> to vector<18x256xf32>
    %206 = vector.extract_strided_slice %204 {offsets = [18, 0], sizes = [18, 256], strides = [1, 1]} : vector<36x256xf32> to vector<18x256xf32>
    %207 = arith.negf %206 : vector<18x256xf32>
    %208 = math.exp %207 : vector<18x256xf32>
    %cst_67 = arith.constant 1.000000e+00 : f32
    %209 = vector.broadcast %cst_67 : f32 to vector<18x256xf32>
    %210 = arith.addf %209, %208 : vector<18x256xf32>
    %211 = arith.divf %209, %210 : vector<18x256xf32>
    %212 = arith.mulf %205, %211 : vector<18x256xf32>
    %213 = arith.addf %164, %212 : vector<18x256xf32>
    %c0_68 = arith.constant 0 : index
    %c0_69 = arith.constant 0 : index
    %214 = vector.load %arg7[%c0_68, %c0_69] : memref<32x18xbf16, #tpu.memory_space<vmem>>, vector<32x18xbf16>
    %c0_70 = arith.constant 0 : index
    %c0_71 = arith.constant 0 : index
    %215 = vector.load %arg8[%c0_70, %c0_71] : memref<32x1xf32, #tpu.memory_space<vmem>>, vector<32x1xf32>
    %216 = arith.truncf %213 : vector<18x256xf32> to vector<18x256xbf16>
    %cst_72 = arith.constant dense<0.000000e+00> : vector<32x256xf32>
    %217 = tpu.matmul %214, %216, %cst_72 {dimension_numbers = #tpu.dot_dimension_numbers<[1], [0], [0], [1], [0, 0, 1, 1], [], []>} : vector<32x18xbf16>, vector<18x256xbf16>, vector<32x256xf32> -> vector<32x256xf32>
    %218 = vector.broadcast %215 : vector<32x1xf32> to vector<32x256xf32>
    %219 = arith.addf %217, %218 : vector<32x256xf32>
    %220 = tpu.concatenate %163, %3 in 0 : vector<8x256xf32>, vector<2x256xf32> -> vector<10x256xf32>
    %c0_73 = arith.constant 0 : index
    %c0_74 = arith.constant 0 : index
    %221 = vector.load %arg9[%c0_73, %c0_74] : memref<30x20xbf16, #tpu.memory_space<vmem>>, vector<30x20xbf16>
    %c0_75 = arith.constant 0 : index
    %c0_76 = arith.constant 0 : index
    %222 = vector.load %arg10[%c0_75, %c0_76] : memref<30x1xf32, #tpu.memory_space<vmem>>, vector<30x1xf32>
    %223 = math.absf %220 : vector<10x256xf32>
    %cst_77 = arith.constant 0.000000e+00 : f32
    %224 = vector.broadcast %cst_77 : f32 to vector<10x256xf32>
    %225 = arith.subf %224, %223 : vector<10x256xf32>
    %226 = math.exp %225 : vector<10x256xf32>
    %cst_78 = arith.constant 1.000000e+00 : f32
    %227 = vector.broadcast %cst_78 : f32 to vector<10x256xf32>
    %228 = arith.subf %226, %227 : vector<10x256xf32>
    %cst_79 = arith.constant 0.000000e+00 : f32
    %229 = vector.broadcast %cst_79 : f32 to vector<10x256xf32>
    %230 = arith.cmpf ogt, %220, %229 : vector<10x256xf32>
    %231 = arith.select %230, %220, %228 : vector<10x256xi1>, vector<10x256xf32>
    %cst_80 = arith.constant 0.000000e+00 : f32
    %232 = vector.broadcast %cst_80 : f32 to vector<10x256xf32>
    %233 = arith.subf %232, %220 : vector<10x256xf32>
    %234 = arith.select %230, %228, %233 : vector<10x256xi1>, vector<10x256xf32>
    %235 = tpu.concatenate %231, %234 in 0 : vector<10x256xf32>, vector<10x256xf32> -> vector<20x256xf32>
    %236 = vector.extract_strided_slice %221 {offsets = [0, 0], sizes = [10, 20], strides = [1, 1]} : vector<30x20xbf16> to vector<10x20xbf16>
    %237 = vector.extract_strided_slice %222 {offsets = [0, 0], sizes = [10, 1], strides = [1, 1]} : vector<30x1xf32> to vector<10x1xf32>
    %238 = arith.truncf %235 : vector<20x256xf32> to vector<20x256xbf16>
    %cst_81 = arith.constant dense<0.000000e+00> : vector<10x256xf32>
    %239 = tpu.matmul %236, %238, %cst_81 {dimension_numbers = #tpu.dot_dimension_numbers<[1], [0], [0], [1], [0, 0, 1, 1], [], []>} : vector<10x20xbf16>, vector<20x256xbf16>, vector<10x256xf32> -> vector<10x256xf32>
    %240 = vector.broadcast %237 : vector<10x1xf32> to vector<10x256xf32>
    %241 = arith.addf %239, %240 : vector<10x256xf32>
    %242 = math.absf %241 : vector<10x256xf32>
    %cst_82 = arith.constant 0.000000e+00 : f32
    %243 = vector.broadcast %cst_82 : f32 to vector<10x256xf32>
    %244 = arith.subf %243, %242 : vector<10x256xf32>
    %245 = math.exp %244 : vector<10x256xf32>
    %cst_83 = arith.constant 1.000000e+00 : f32
    %246 = vector.broadcast %cst_83 : f32 to vector<10x256xf32>
    %247 = arith.subf %245, %246 : vector<10x256xf32>
    %cst_84 = arith.constant 0.000000e+00 : f32
    %248 = vector.broadcast %cst_84 : f32 to vector<10x256xf32>
    %249 = arith.cmpf ogt, %241, %248 : vector<10x256xf32>
    %250 = arith.select %249, %241, %247 : vector<10x256xi1>, vector<10x256xf32>
    %cst_85 = arith.constant 0.000000e+00 : f32
    %251 = vector.broadcast %cst_85 : f32 to vector<10x256xf32>
    %252 = arith.subf %251, %241 : vector<10x256xf32>
    %253 = arith.select %249, %247, %252 : vector<10x256xi1>, vector<10x256xf32>
    %254 = tpu.concatenate %250, %253 in 0 : vector<10x256xf32>, vector<10x256xf32> -> vector<20x256xf32>
    %255 = vector.extract_strided_slice %221 {offsets = [10, 0], sizes = [20, 20], strides = [1, 1]} : vector<30x20xbf16> to vector<20x20xbf16>
    %256 = vector.extract_strided_slice %222 {offsets = [10, 0], sizes = [20, 1], strides = [1, 1]} : vector<30x1xf32> to vector<20x1xf32>
    %257 = arith.truncf %254 : vector<20x256xf32> to vector<20x256xbf16>
    %cst_86 = arith.constant dense<0.000000e+00> : vector<20x256xf32>
    %258 = tpu.matmul %255, %257, %cst_86 {dimension_numbers = #tpu.dot_dimension_numbers<[1], [0], [0], [1], [0, 0, 1, 1], [], []>} : vector<20x20xbf16>, vector<20x256xbf16>, vector<20x256xf32> -> vector<20x256xf32>
    %259 = vector.broadcast %256 : vector<20x1xf32> to vector<20x256xf32>
    %260 = arith.addf %258, %259 : vector<20x256xf32>
    %261 = vector.extract_strided_slice %260 {offsets = [0, 0], sizes = [10, 256], strides = [1, 1]} : vector<20x256xf32> to vector<10x256xf32>
    %262 = vector.extract_strided_slice %260 {offsets = [10, 0], sizes = [10, 256], strides = [1, 1]} : vector<20x256xf32> to vector<10x256xf32>
    %263 = arith.negf %262 : vector<10x256xf32>
    %264 = math.exp %263 : vector<10x256xf32>
    %cst_87 = arith.constant 1.000000e+00 : f32
    %265 = vector.broadcast %cst_87 : f32 to vector<10x256xf32>
    %266 = arith.addf %265, %264 : vector<10x256xf32>
    %267 = arith.divf %265, %266 : vector<10x256xf32>
    %268 = arith.mulf %261, %267 : vector<10x256xf32>
    %269 = arith.addf %220, %268 : vector<10x256xf32>
    %c0_88 = arith.constant 0 : index
    %c0_89 = arith.constant 0 : index
    %270 = vector.load %arg11[%c0_88, %c0_89] : memref<16x10xbf16, #tpu.memory_space<vmem>>, vector<16x10xbf16>
    %c0_90 = arith.constant 0 : index
    %c0_91 = arith.constant 0 : index
    %271 = vector.load %arg12[%c0_90, %c0_91] : memref<16x1xf32, #tpu.memory_space<vmem>>, vector<16x1xf32>
    %272 = arith.truncf %269 : vector<10x256xf32> to vector<10x256xbf16>
    %cst_92 = arith.constant dense<0.000000e+00> : vector<16x256xf32>
    %273 = tpu.matmul %270, %272, %cst_92 {dimension_numbers = #tpu.dot_dimension_numbers<[1], [0], [0], [1], [0, 0, 1, 1], [], []>} : vector<16x10xbf16>, vector<10x256xbf16>, vector<16x256xf32> -> vector<16x256xf32>
    %274 = vector.broadcast %271 : vector<16x1xf32> to vector<16x256xf32>
    %275 = arith.addf %273, %274 : vector<16x256xf32>
    %276 = vector.extract_strided_slice %219 {offsets = [0, 0], sizes = [16, 256], strides = [1, 1]} : vector<32x256xf32> to vector<16x256xf32>
    %277 = vector.extract_strided_slice %219 {offsets = [16, 0], sizes = [16, 256], strides = [1, 1]} : vector<32x256xf32> to vector<16x256xf32>
    %278 = tpu.iota {dimensions = array<i32: 0>} : vector<256x256xi32>
    %279 = tpu.iota {dimensions = array<i32: 1>} : vector<256x256xi32>
    %280 = arith.cmpi sle, %279, %278 : vector<256x256xi32>
    %cst_93 = arith.constant 0.000000e+00 : f32
    %cst_94 = arith.constant -1.000000e+10 : f32
    %281 = vector.broadcast %cst_93 : f32 to vector<256x256xf32>
    %282 = vector.broadcast %cst_94 : f32 to vector<256x256xf32>
    %283 = arith.select %280, %281, %282 : vector<256x256xi1>, vector<256x256xf32>
    %284 = arith.truncf %276 : vector<16x256xf32> to vector<16x256xbf16>
    %285 = arith.truncf %277 : vector<16x256xf32> to vector<16x256xbf16>
    %286 = arith.truncf %275 : vector<16x256xf32> to vector<16x256xbf16>
    %287 = vector.extract_strided_slice %286 {offsets = [0, 0], sizes = [8, 256], strides = [1, 1]} : vector<16x256xbf16> to vector<8x256xbf16>
    %288 = vector.extract_strided_slice %284 {offsets = [0, 0], sizes = [8, 256], strides = [1, 1]} : vector<16x256xbf16> to vector<8x256xbf16>
    %289 = vector.extract_strided_slice %285 {offsets = [0, 0], sizes = [8, 256], strides = [1, 1]} : vector<16x256xbf16> to vector<8x256xbf16>
    %cst_95 = arith.constant dense<0.000000e+00> : vector<256x256xf32>
    %290 = tpu.matmul %287, %288, %cst_95 {dimension_numbers = #tpu.dot_dimension_numbers<[0], [0], [1], [1], [0, 1, 1, 1], [], []>} : vector<8x256xbf16>, vector<8x256xbf16>, vector<256x256xf32> -> vector<256x256xf32>
    %291 = arith.addf %290, %283 : vector<256x256xf32>
    %cst_96 = arith.constant dense<0xFF800000> : vector<256xf32>
    %292 = vector.multi_reduction <maximumf>, %291, %cst_96 [1] : vector<256x256xf32> to vector<256xf32>
    %293 = vector.shape_cast %292 : vector<256xf32> to vector<256x1xf32>
    %294 = vector.broadcast %293 : vector<256x1xf32> to vector<256x256xf32>
    %295 = arith.subf %291, %294 : vector<256x256xf32>
    %296 = math.exp %295 : vector<256x256xf32>
    %cst_97 = arith.constant dense<0.000000e+00> : vector<256xf32>
    %297 = vector.multi_reduction <add>, %296, %cst_97 [1] : vector<256x256xf32> to vector<256xf32>
    %298 = vector.shape_cast %297 : vector<256xf32> to vector<256x1xf32>
    %299 = tpu.reciprocal %298 {approx = true} : vector<256x1xf32> -> vector<256x1xf32>
    %300 = vector.broadcast %299 : vector<256x1xf32> to vector<256x256xf32>
    %301 = arith.mulf %296, %300 : vector<256x256xf32>
    %302 = arith.truncf %301 : vector<256x256xf32> to vector<256x256xbf16>
    %cst_98 = arith.constant dense<0.000000e+00> : vector<8x256xf32>
    %303 = tpu.matmul %289, %302, %cst_98 {dimension_numbers = #tpu.dot_dimension_numbers<[1], [1], [0], [0], [0, 0, 1, 0], [], []>} : vector<8x256xbf16>, vector<256x256xbf16>, vector<8x256xf32> -> vector<8x256xf32>
    %304 = vector.extract_strided_slice %286 {offsets = [8, 0], sizes = [8, 256], strides = [1, 1]} : vector<16x256xbf16> to vector<8x256xbf16>
    %305 = vector.extract_strided_slice %284 {offsets = [8, 0], sizes = [8, 256], strides = [1, 1]} : vector<16x256xbf16> to vector<8x256xbf16>
    %306 = vector.extract_strided_slice %285 {offsets = [8, 0], sizes = [8, 256], strides = [1, 1]} : vector<16x256xbf16> to vector<8x256xbf16>
    %cst_99 = arith.constant dense<0.000000e+00> : vector<256x256xf32>
    %307 = tpu.matmul %304, %305, %cst_99 {dimension_numbers = #tpu.dot_dimension_numbers<[0], [0], [1], [1], [0, 1, 1, 1], [], []>} : vector<8x256xbf16>, vector<8x256xbf16>, vector<256x256xf32> -> vector<256x256xf32>
    %308 = arith.addf %307, %283 : vector<256x256xf32>
    %cst_100 = arith.constant dense<0xFF800000> : vector<256xf32>
    %309 = vector.multi_reduction <maximumf>, %308, %cst_100 [1] : vector<256x256xf32> to vector<256xf32>
    %310 = vector.shape_cast %309 : vector<256xf32> to vector<256x1xf32>
    %311 = vector.broadcast %310 : vector<256x1xf32> to vector<256x256xf32>
    %312 = arith.subf %308, %311 : vector<256x256xf32>
    %313 = math.exp %312 : vector<256x256xf32>
    %cst_101 = arith.constant dense<0.000000e+00> : vector<256xf32>
    %314 = vector.multi_reduction <add>, %313, %cst_101 [1] : vector<256x256xf32> to vector<256xf32>
    %315 = vector.shape_cast %314 : vector<256xf32> to vector<256x1xf32>
    %316 = tpu.reciprocal %315 {approx = true} : vector<256x1xf32> -> vector<256x1xf32>
    %317 = vector.broadcast %316 : vector<256x1xf32> to vector<256x256xf32>
    %318 = arith.mulf %313, %317 : vector<256x256xf32>
    %319 = arith.truncf %318 : vector<256x256xf32> to vector<256x256xbf16>
    %cst_102 = arith.constant dense<0.000000e+00> : vector<8x256xf32>
    %320 = tpu.matmul %306, %319, %cst_102 {dimension_numbers = #tpu.dot_dimension_numbers<[1], [1], [0], [0], [0, 0, 1, 0], [], []>} : vector<8x256xbf16>, vector<256x256xbf16>, vector<8x256xf32> -> vector<8x256xf32>
    %321 = tpu.concatenate %303, %320 in 0 : vector<8x256xf32>, vector<8x256xf32> -> vector<16x256xf32>
    %c0_103 = arith.constant 0 : index
    %c0_104 = arith.constant 0 : index
    %322 = vector.load %arg13[%c0_103, %c0_104] : memref<24x16xbf16, #tpu.memory_space<vmem>>, vector<24x16xbf16>
    %c0_105 = arith.constant 0 : index
    %c0_106 = arith.constant 0 : index
    %323 = vector.load %arg14[%c0_105, %c0_106] : memref<24x1xf32, #tpu.memory_space<vmem>>, vector<24x1xf32>
    %c0_107 = arith.constant 0 : index
    %c0_108 = arith.constant 0 : index
    %324 = vector.load %arg15[%c0_107, %c0_108] : memref<8x32xbf16, #tpu.memory_space<vmem>>, vector<8x32xbf16>
    %c0_109 = arith.constant 0 : index
    %c0_110 = arith.constant 0 : index
    %325 = vector.load %arg16[%c0_109, %c0_110] : memref<8x1xf32, #tpu.memory_space<vmem>>, vector<8x1xf32>
    %326 = math.absf %163 : vector<8x256xf32>
    %cst_111 = arith.constant 0.000000e+00 : f32
    %327 = vector.broadcast %cst_111 : f32 to vector<8x256xf32>
    %328 = arith.subf %327, %326 : vector<8x256xf32>
    %329 = math.exp %328 : vector<8x256xf32>
    %cst_112 = arith.constant 1.000000e+00 : f32
    %330 = vector.broadcast %cst_112 : f32 to vector<8x256xf32>
    %331 = arith.subf %329, %330 : vector<8x256xf32>
    %cst_113 = arith.constant 0.000000e+00 : f32
    %332 = vector.broadcast %cst_113 : f32 to vector<8x256xf32>
    %333 = arith.cmpf ogt, %163, %332 : vector<8x256xf32>
    %334 = arith.select %333, %163, %331 : vector<8x256xi1>, vector<8x256xf32>
    %cst_114 = arith.constant 0.000000e+00 : f32
    %335 = vector.broadcast %cst_114 : f32 to vector<8x256xf32>
    %336 = arith.subf %335, %163 : vector<8x256xf32>
    %337 = arith.select %333, %331, %336 : vector<8x256xi1>, vector<8x256xf32>
    %338 = tpu.concatenate %334, %337 in 0 : vector<8x256xf32>, vector<8x256xf32> -> vector<16x256xf32>
    %339 = vector.extract_strided_slice %322 {offsets = [0, 0], sizes = [8, 16], strides = [1, 1]} : vector<24x16xbf16> to vector<8x16xbf16>
    %340 = vector.extract_strided_slice %323 {offsets = [0, 0], sizes = [8, 1], strides = [1, 1]} : vector<24x1xf32> to vector<8x1xf32>
    %341 = arith.truncf %338 : vector<16x256xf32> to vector<16x256xbf16>
    %cst_115 = arith.constant dense<0.000000e+00> : vector<8x256xf32>
    %342 = tpu.matmul %339, %341, %cst_115 {dimension_numbers = #tpu.dot_dimension_numbers<[1], [0], [0], [1], [0, 0, 1, 1], [], []>} : vector<8x16xbf16>, vector<16x256xbf16>, vector<8x256xf32> -> vector<8x256xf32>
    %343 = vector.broadcast %340 : vector<8x1xf32> to vector<8x256xf32>
    %344 = arith.addf %342, %343 : vector<8x256xf32>
    %345 = math.absf %321 : vector<16x256xf32>
    %cst_116 = arith.constant 0.000000e+00 : f32
    %346 = vector.broadcast %cst_116 : f32 to vector<16x256xf32>
    %347 = arith.subf %346, %345 : vector<16x256xf32>
    %348 = math.exp %347 : vector<16x256xf32>
    %cst_117 = arith.constant 1.000000e+00 : f32
    %349 = vector.broadcast %cst_117 : f32 to vector<16x256xf32>
    %350 = arith.subf %348, %349 : vector<16x256xf32>
    %cst_118 = arith.constant 0.000000e+00 : f32
    %351 = vector.broadcast %cst_118 : f32 to vector<16x256xf32>
    %352 = arith.cmpf ogt, %321, %351 : vector<16x256xf32>
    %353 = arith.select %352, %321, %350 : vector<16x256xi1>, vector<16x256xf32>
    %cst_119 = arith.constant 0.000000e+00 : f32
    %354 = vector.broadcast %cst_119 : f32 to vector<16x256xf32>
    %355 = arith.subf %354, %321 : vector<16x256xf32>
    %356 = arith.select %352, %350, %355 : vector<16x256xi1>, vector<16x256xf32>
    %357 = tpu.concatenate %353, %356 in 0 : vector<16x256xf32>, vector<16x256xf32> -> vector<32x256xf32>
    %358 = arith.truncf %357 : vector<32x256xf32> to vector<32x256xbf16>
    %cst_120 = arith.constant dense<0.000000e+00> : vector<8x256xf32>
    %359 = tpu.matmul %324, %358, %cst_120 {dimension_numbers = #tpu.dot_dimension_numbers<[1], [0], [0], [1], [0, 0, 1, 1], [], []>} : vector<8x32xbf16>, vector<32x256xbf16>, vector<8x256xf32> -> vector<8x256xf32>
    %360 = vector.broadcast %325 : vector<8x1xf32> to vector<8x256xf32>
    %361 = arith.addf %359, %360 : vector<8x256xf32>
    %362 = arith.addf %344, %361 : vector<8x256xf32>
    %363 = math.absf %362 : vector<8x256xf32>
    %cst_121 = arith.constant 0.000000e+00 : f32
    %364 = vector.broadcast %cst_121 : f32 to vector<8x256xf32>
    %365 = arith.subf %364, %363 : vector<8x256xf32>
    %366 = math.exp %365 : vector<8x256xf32>
    %cst_122 = arith.constant 1.000000e+00 : f32
    %367 = vector.broadcast %cst_122 : f32 to vector<8x256xf32>
    %368 = arith.subf %366, %367 : vector<8x256xf32>
    %cst_123 = arith.constant 0.000000e+00 : f32
    %369 = vector.broadcast %cst_123 : f32 to vector<8x256xf32>
    %370 = arith.cmpf ogt, %362, %369 : vector<8x256xf32>
    %371 = arith.select %370, %362, %368 : vector<8x256xi1>, vector<8x256xf32>
    %cst_124 = arith.constant 0.000000e+00 : f32
    %372 = vector.broadcast %cst_124 : f32 to vector<8x256xf32>
    %373 = arith.subf %372, %362 : vector<8x256xf32>
    %374 = arith.select %370, %368, %373 : vector<8x256xi1>, vector<8x256xf32>
    %375 = tpu.concatenate %371, %374 in 0 : vector<8x256xf32>, vector<8x256xf32> -> vector<16x256xf32>
    %376 = vector.extract_strided_slice %322 {offsets = [8, 0], sizes = [16, 16], strides = [1, 1]} : vector<24x16xbf16> to vector<16x16xbf16>
    %377 = vector.extract_strided_slice %323 {offsets = [8, 0], sizes = [16, 1], strides = [1, 1]} : vector<24x1xf32> to vector<16x1xf32>
    %378 = arith.truncf %375 : vector<16x256xf32> to vector<16x256xbf16>
    %cst_125 = arith.constant dense<0.000000e+00> : vector<16x256xf32>
    %379 = tpu.matmul %376, %378, %cst_125 {dimension_numbers = #tpu.dot_dimension_numbers<[1], [0], [0], [1], [0, 0, 1, 1], [], []>} : vector<16x16xbf16>, vector<16x256xbf16>, vector<16x256xf32> -> vector<16x256xf32>
    %380 = vector.broadcast %377 : vector<16x1xf32> to vector<16x256xf32>
    %381 = arith.addf %379, %380 : vector<16x256xf32>
    %382 = vector.extract_strided_slice %381 {offsets = [0, 0], sizes = [8, 256], strides = [1, 1]} : vector<16x256xf32> to vector<8x256xf32>
    %383 = vector.extract_strided_slice %381 {offsets = [8, 0], sizes = [8, 256], strides = [1, 1]} : vector<16x256xf32> to vector<8x256xf32>
    %384 = arith.negf %383 : vector<8x256xf32>
    %385 = math.exp %384 : vector<8x256xf32>
    %cst_126 = arith.constant 1.000000e+00 : f32
    %386 = vector.broadcast %cst_126 : f32 to vector<8x256xf32>
    %387 = arith.addf %386, %385 : vector<8x256xf32>
    %388 = arith.divf %386, %387 : vector<8x256xf32>
    %389 = arith.mulf %382, %388 : vector<8x256xf32>
    %390 = arith.addf %163, %389 : vector<8x256xf32>
    %c0_127 = arith.constant 0 : index
    %c0_128 = arith.constant 0 : index
    %c0_129 = arith.constant 0 : index
    %391 = vector.load %arg17[%c0_127, %c0_128, %c0_129] : memref<1x8x256xf32, #tpu.memory_space<vmem>>, vector<1x8x256xf32>
    %392 = vector.shape_cast %391 : vector<1x8x256xf32> to vector<8x256xf32>
    %393 = vector.shape_cast %390 : vector<8x256xf32> to vector<1x8x256xf32>
    tpu.vector_store %arg17[%c0_127, %c0_128, %c0_129], %393 {strides = array<i32>} : memref<1x8x256xf32, #tpu.memory_space<vmem>>, vector<1x8x256xf32>,
    return
  }
  func.func @transform_0(%arg0: i32) -> (i32, i32, i32) {
    %c0_i32 = arith.constant 0 : i32
    %c0_i32_0 = arith.constant 0 : i32
    %c0_i32_1 = arith.constant 0 : i32
    return %arg0, %c0_i32, %c0_i32_0 : i32, i32, i32
  }
  func.func @transform_1(%arg0: i32) -> (i32, i32, i32) {
    %c0_i32 = arith.constant 0 : i32
    %c0_i32_0 = arith.constant 0 : i32
    %c0_i32_1 = arith.constant 0 : i32
    return %arg0, %c0_i32, %c0_i32_0 : i32, i32, i32
  }
  func.func @transform_2(%arg0: i32) -> (i32, i32, i32) {
    %c0_i32 = arith.constant 0 : i32
    %c0_i32_0 = arith.constant 0 : i32
    %c0_i32_1 = arith.constant 0 : i32
    %c0_i32_2 = arith.constant 0 : i32
    return %c0_i32, %c0_i32_0, %c0_i32_1 : i32, i32, i32
  }
  func.func @transform_3(%arg0: i32) -> (i32, i32, i32) {
    %c0_i32 = arith.constant 0 : i32
    %c0_i32_0 = arith.constant 0 : i32
    %c0_i32_1 = arith.constant 0 : i32
    %c0_i32_2 = arith.constant 0 : i32
    return %c0_i32, %c0_i32_0, %c0_i32_1 : i32, i32, i32
  }
  func.func @transform_4(%arg0: i32) -> (i32, i32) {
    %c0_i32 = arith.constant 0 : i32
    %c0_i32_0 = arith.constant 0 : i32
    %c0_i32_1 = arith.constant 0 : i32
    return %c0_i32, %c0_i32_0 : i32, i32
  }
  func.func @transform_5(%arg0: i32) -> (i32, i32) {
    %c0_i32 = arith.constant 0 : i32
    %c0_i32_0 = arith.constant 0 : i32
    %c0_i32_1 = arith.constant 0 : i32
    return %c0_i32, %c0_i32_0 : i32, i32
  }
  func.func @transform_6(%arg0: i32) -> (i32, i32) {
    %c0_i32 = arith.constant 0 : i32
    %c0_i32_0 = arith.constant 0 : i32
    %c0_i32_1 = arith.constant 0 : i32
    return %c0_i32, %c0_i32_0 : i32, i32
  }
  func.func @transform_7(%arg0: i32) -> (i32, i32) {
    %c0_i32 = arith.constant 0 : i32
    %c0_i32_0 = arith.constant 0 : i32
    %c0_i32_1 = arith.constant 0 : i32
    return %c0_i32, %c0_i32_0 : i32, i32
  }
  func.func @transform_8(%arg0: i32) -> (i32, i32) {
    %c0_i32 = arith.constant 0 : i32
    %c0_i32_0 = arith.constant 0 : i32
    %c0_i32_1 = arith.constant 0 : i32
    return %c0_i32, %c0_i32_0 : i32, i32
  }
  func.func @transform_9(%arg0: i32) -> (i32, i32) {
    %c0_i32 = arith.constant 0 : i32
    %c0_i32_0 = arith.constant 0 : i32
    %c0_i32_1 = arith.constant 0 : i32
    return %c0_i32, %c0_i32_0 : i32, i32
  }
  func.func @transform_10(%arg0: i32) -> (i32, i32) {
    %c0_i32 = arith.constant 0 : i32
    %c0_i32_0 = arith.constant 0 : i32
    %c0_i32_1 = arith.constant 0 : i32
    return %c0_i32, %c0_i32_0 : i32, i32
  }
  func.func @transform_11(%arg0: i32) -> (i32, i32) {
    %c0_i32 = arith.constant 0 : i32
    %c0_i32_0 = arith.constant 0 : i32
    %c0_i32_1 = arith.constant 0 : i32
    return %c0_i32, %c0_i32_0 : i32, i32
  }
  func.func @transform_12(%arg0: i32) -> (i32, i32) {
    %c0_i32 = arith.constant 0 : i32
    %c0_i32_0 = arith.constant 0 : i32
    %c0_i32_1 = arith.constant 0 : i32
    return %c0_i32, %c0_i32_0 : i32, i32
  }
  func.func @transform_13(%arg0: i32) -> (i32, i32) {
    %c0_i32 = arith.constant 0 : i32
    %c0_i32_0 = arith.constant 0 : i32
    %c0_i32_1 = arith.constant 0 : i32
    return %c0_i32, %c0_i32_0 : i32, i32
  }
  func.func @transform_14(%arg0: i32) -> (i32, i32) {
    %c0_i32 = arith.constant 0 : i32
    %c0_i32_0 = arith.constant 0 : i32
    %c0_i32_1 = arith.constant 0 : i32
    return %c0_i32, %c0_i32_0 : i32, i32
  }
  func.func @transform_15(%arg0: i32) -> (i32, i32) {
    %c0_i32 = arith.constant 0 : i32
    %c0_i32_0 = arith.constant 0 : i32
    %c0_i32_1 = arith.constant 0 : i32
    return %c0_i32, %c0_i32_0 : i32, i32
  }
  func.func @transform_16(%arg0: i32) -> (i32, i32, i32) {
    %c0_i32 = arith.constant 0 : i32
    %c0_i32_0 = arith.constant 0 : i32
    %c0_i32_1 = arith.constant 0 : i32
    return %arg0, %c0_i32, %c0_i32_0 : i32, i32, i32
  }
}

</mosaic_0001>

<llo_original>
// kernel: tpu_custom_call.1
$region0: #{tpu_custom_call.1}
  #allocation0 [shape = 'u32[]', space=smem, size = 0x4, offset = 0x4, fixed_abs, tag = 'smem constant byte address 0x4 - core index']
  #allocation1 [shape = 'u32[144,128]{1,0:T(1,128)}', space=vmem, size = 0x12000, scoped, tag = 'internal scratch']
  %s0 = inlined_call_operand.vmem [shape: f32[4,8,256], index: 0, kind: input, shape index: {}]
  %s1 = inlined_call_operand.vmem [shape: f32[4,2,256], index: 1, kind: input, shape index: {}]
  %s2 = inlined_call_operand.vmem [shape: bf16[2,24,64], index: 2, kind: input, shape index: {}]
  %s3 = inlined_call_operand.vmem [shape: f32[2,24,1], index: 3, kind: input, shape index: {}]
  %s4 = inlined_call_operand.vmem [shape: bf16[54,36], index: 4, kind: input, shape index: {}]
  %s5 = inlined_call_operand.vmem [shape: f32[54,1], index: 5, kind: input, shape index: {}]
  %s6 = inlined_call_operand.vmem [shape: bf16[32,18], index: 6, kind: input, shape index: {}]
  %s7 = inlined_call_operand.vmem [shape: f32[32,1], index: 7, kind: input, shape index: {}]
  %s8 = inlined_call_operand.vmem [shape: bf16[30,20], index: 8, kind: input, shape index: {}]
  %s9 = inlined_call_operand.vmem [shape: f32[30,1], index: 9, kind: input, shape index: {}]
  %s10 = inlined_call_operand.vmem [shape: bf16[16,10], index: 10, kind: input, shape index: {}]
  %s11 = inlined_call_operand.vmem [shape: f32[16,1], index: 11, kind: input, shape index: {}]
  %s12 = inlined_call_operand.vmem [shape: bf16[24,16], index: 12, kind: input, shape index: {}]
  %s13 = inlined_call_operand.vmem [shape: f32[24,1], index: 13, kind: input, shape index: {}]
  %s14 = inlined_call_operand.vmem [shape: bf16[8,32], index: 14, kind: input, shape index: {}]
  %s15 = inlined_call_operand.vmem [shape: f32[8,1], index: 15, kind: input, shape index: {}]
  %s16 = inlined_call_operand.hbm [shape: f32[4,8,256], index: 16, kind: output, shape index: {}]
  %s17 = sld [smem:[#allocation0]]
  $region97: #{tpu_custom_call.1} parent=0
    _
  %s19 = ssub.s32 1, %s17
  %s20 = scalar_select 0, %s19, %s17
  $region1: #{tpu_custom_call.1} parent=0
    #allocation2 [shape = 'u8[16384]{0}', space=vmem, size = 0x4000, scoped, tag = 'output window, operand 0']
    #allocation3 [shape = 's32[2]{0}', space=sflag, size = 0x8, scoped, tag = 'scoped memory for tpu_custom_call.1']
    %21 = vsyncpa [#allocation3], 0
    %s22 = scalar_lea.sflag [#allocation3], 1
    %23 = vsyncpa %s22, 0
    loop: start=0, step=1, limit=6
    $region2: #{tpu_custom_call.1} parent=1 // loop_pre_header
      _
    $region3: #{tpu_custom_call.1} parent=1 // loop_header
      %s25 = sphi 0, %s29
      %p26 = scmp.ge.s32.totalorder %s25, 6
      %s35 = sphi 0, %s37
      %s38 = sphi 0, %s35
      %s39 = sphi 0, %s38
      %s55 = sphi 0, %s39
      %s61 = sphi 0, %s63
      %s64 = sphi 0, %s61
      %s65 = sphi 0, %s64
      %s81 = sphi 0, %s65
      %s85 = sphi 0, %s85
      %s87 = sphi 0, %s85
      %s88 = sphi 0, %s87
      %s102 = sphi 0, %s88
      %s106 = sphi 0, %s106
      %s108 = sphi 0, %s106
      %s109 = sphi 0, %s108
      %s123 = sphi 0, %s109
      %s127 = sphi 0, %s127
      %s129 = sphi 0, %s127
      %s130 = sphi 0, %s129
      %s144 = sphi 0, %s130
      %s148 = sphi 0, %s148
      %s150 = sphi 0, %s148
      %s151 = sphi 0, %s150
      %s165 = sphi 0, %s151
      %s169 = sphi 0, %s169
      %s171 = sphi 0, %s169
      %s172 = sphi 0, %s171
      %s186 = sphi 0, %s172
      %s190 = sphi 0, %s190
      %s192 = sphi 0, %s190
      %s193 = sphi 0, %s192
      %s207 = sphi 0, %s193
      %s211 = sphi 0, %s211
      %s213 = sphi 0, %s211
      %s214 = sphi 0, %s213
      %s228 = sphi 0, %s214
      %s232 = sphi 0, %s232
      %s234 = sphi 0, %s232
      %s235 = sphi 0, %s234
      %s249 = sphi 0, %s235
      %s253 = sphi 0, %s253
      %s255 = sphi 0, %s253
      %s256 = sphi 0, %s255
      %s270 = sphi 0, %s256
      %s274 = sphi 0, %s274
      %s276 = sphi 0, %s274
      %s277 = sphi 0, %s276
      %s291 = sphi 0, %s277
      %s295 = sphi 0, %s295
      %s297 = sphi 0, %s295
      %s298 = sphi 0, %s297
      %s312 = sphi 0, %s298
      %s316 = sphi 0, %s316
      %s318 = sphi 0, %s316
      %s319 = sphi 0, %s318
      %s333 = sphi 0, %s319
      %s337 = sphi 0, %s337
      %s339 = sphi 0, %s337
      %s340 = sphi 0, %s339
      %s354 = sphi 0, %s340
      %s358 = sphi 0, %s358
      %s360 = sphi 0, %s358
      %s361 = sphi 0, %s360
      %s375 = sphi 0, %s361
      %s381 = sphi 0, %s383
      %s384 = sphi 0, %s381
      %s385 = sphi 0, %s384
      %s401 = sphi 0, %s385
    $region4: #{tpu_custom_call.1} parent=1 // loop_header_branch
      %28 = sbr.rel (%p26) target = $region8
    $region5: #{tpu_custom_call.1} parent=1 // loop_body
      %s30 = ssub.s32 %s25, 1
      %s31 = ssub.s32 %s25, 2
      %s32 = sadd.s32 %s25, 1
      %s33 = ssub.s32 %s25, %s32
      %p34 = scmp.eq.s32.totalorder %s33, 0
      %s36 = sadd.s32 %s35, 1
      %s37 = scalar_select %p34, %s35, %s36
      %p40 = pneg %p34
      %p41 = scmp.eq.s32.totalorder %s25, 3
      %p42 = por %p40, %p41
      %p43 = scmp.ne.s32.totalorder %s35, %s38
      %p44 = scmp.eq.s32.totalorder %s25, 0
      %p45 = por %p43, %p44
      %p46 = scmp.ne.s32.totalorder %s35, %s38
      %p47 = scmp.eq.s32.totalorder %s30, 3
      %p48 = por %p46, %p47
      %p49 = scmp.ne.s32.totalorder %s38, %s39
      %p50 = scmp.eq.s32.totalorder %s30, 0
      %p51 = por %p49, %p50
      %p52 = scmp.ne.s32.totalorder %s38, %s39
      %p53 = scmp.eq.s32.totalorder %s31, 3
      %p54 = por %p52, %p53
      %p56 = scmp.ne.s32.totalorder %s39, %s55
      %p57 = scmp.eq.s32.totalorder %s31, 0
      %p58 = por %p56, %p57
      %s59 = ssub.s32 %s25, %s32
      %p60 = scmp.eq.s32.totalorder %s59, 0
      %s62 = sadd.s32 %s61, 1
      %s63 = scalar_select %p60, %s61, %s62
      %p66 = pneg %p60
      %p67 = scmp.eq.s32.totalorder %s25, 3
      %p68 = por %p66, %p67
      %p69 = scmp.ne.s32.totalorder %s61, %s64
      %p70 = scmp.eq.s32.totalorder %s25, 0
      %p71 = por %p69, %p70
      %p72 = scmp.ne.s32.totalorder %s61, %s64
      %p73 = scmp.eq.s32.totalorder %s30, 3
      %p74 = por %p72, %p73
      %p75 = scmp.ne.s32.totalorder %s64, %s65
      %p76 = scmp.eq.s32.totalorder %s30, 0
      %p77 = por %p75, %p76
      %p78 = scmp.ne.s32.totalorder %s64, %s65
      %p79 = scmp.eq.s32.totalorder %s31, 3
      %p80 = por %p78, %p79
      %p82 = scmp.ne.s32.totalorder %s65, %s81
      %p83 = scmp.eq.s32.totalorder %s31, 0
      %p84 = por %p82, %p83
      %s86 = sadd.s32 %s85, 1
      %p89 = scmp.eq.s32.totalorder %s25, 3
      %p90 = scmp.ne.s32.totalorder %s85, %s87
      %p91 = scmp.eq.s32.totalorder %s25, 0
      %p92 = por %p90, %p91
      %p93 = scmp.ne.s32.totalorder %s85, %s87
      %p94 = scmp.eq.s32.totalorder %s30, 3
      %p95 = por %p93, %p94
      %p96 = scmp.ne.s32.totalorder %s87, %s88
      %p97 = scmp.eq.s32.totalorder %s30, 0
      %p98 = por %p96, %p97
      %p99 = scmp.ne.s32.totalorder %s87, %s88
      %p100 = scmp.eq.s32.totalorder %s31, 3
      %p101 = por %p99, %p100
      %p103 = scmp.ne.s32.totalorder %s88, %s102
      %p104 = scmp.eq.s32.totalorder %s31, 0
      %p105 = por %p103, %p104
      %s107 = sadd.s32 %s106, 1
      %p110 = scmp.eq.s32.totalorder %s25, 3
      %p111 = scmp.ne.s32.totalorder %s106, %s108
      %p112 = scmp.eq.s32.totalorder %s25, 0
      %p113 = por %p111, %p112
      %p114 = scmp.ne.s32.totalorder %s106, %s108
      %p115 = scmp.eq.s32.totalorder %s30, 3
      %p116 = por %p114, %p115
      %p117 = scmp.ne.s32.totalorder %s108, %s109
      %p118 = scmp.eq.s32.totalorder %s30, 0
      %p119 = por %p117, %p118
      %p120 = scmp.ne.s32.totalorder %s108, %s109
      %p121 = scmp.eq.s32.totalorder %s31, 3
      %p122 = por %p120, %p121
      %p124 = scmp.ne.s32.totalorder %s109, %s123
      %p125 = scmp.eq.s32.totalorder %s31, 0
      %p126 = por %p124, %p125
      %s128 = sadd.s32 %s127, 1
      %p131 = scmp.eq.s32.totalorder %s25, 3
      %p132 = scmp.ne.s32.totalorder %s127, %s129
      %p133 = scmp.eq.s32.totalorder %s25, 0
      %p134 = por %p132, %p133
      %p135 = scmp.ne.s32.totalorder %s127, %s129
      %p136 = scmp.eq.s32.totalorder %s30, 3
      %p137 = por %p135, %p136
      %p138 = scmp.ne.s32.totalorder %s129, %s130
      %p139 = scmp.eq.s32.totalorder %s30, 0
      %p140 = por %p138, %p139
      %p141 = scmp.ne.s32.totalorder %s129, %s130
      %p142 = scmp.eq.s32.totalorder %s31, 3
      %p143 = por %p141, %p142
      %p145 = scmp.ne.s32.totalorder %s130, %s144
      %p146 = scmp.eq.s32.totalorder %s31, 0
      %p147 = por %p145, %p146
      %s149 = sadd.s32 %s148, 1
      %p152 = scmp.eq.s32.totalorder %s25, 3
      %p153 = scmp.ne.s32.totalorder %s148, %s150
      %p154 = scmp.eq.s32.totalorder %s25, 0
      %p155 = por %p153, %p154
      %p156 = scmp.ne.s32.totalorder %s148, %s150
      %p157 = scmp.eq.s32.totalorder %s30, 3
      %p158 = por %p156, %p157
      %p159 = scmp.ne.s32.totalorder %s150, %s151
      %p160 = scmp.eq.s32.totalorder %s30, 0
      %p161 = por %p159, %p160
      %p162 = scmp.ne.s32.totalorder %s150, %s151
      %p163 = scmp.eq.s32.totalorder %s31, 3
      %p164 = por %p162, %p163
      %p166 = scmp.ne.s32.totalorder %s151, %s165
      %p167 = scmp.eq.s32.totalorder %s31, 0
      %p168 = por %p166, %p167
      %s170 = sadd.s32 %s169, 1
      %p173 = scmp.eq.s32.totalorder %s25, 3
      %p174 = scmp.ne.s32.totalorder %s169, %s171
      %p175 = scmp.eq.s32.totalorder %s25, 0
      %p176 = por %p174, %p175
      %p177 = scmp.ne.s32.totalorder %s169, %s171
      %p178 = scmp.eq.s32.totalorder %s30, 3
      %p179 = por %p177, %p178
      %p180 = scmp.ne.s32.totalorder %s171, %s172
      %p181 = scmp.eq.s32.totalorder %s30, 0
      %p182 = por %p180, %p181
      %p183 = scmp.ne.s32.totalorder %s171, %s172
      %p184 = scmp.eq.s32.totalorder %s31, 3
      %p185 = por %p183, %p184
      %p187 = scmp.ne.s32.totalorder %s172, %s186
      %p188 = scmp.eq.s32.totalorder %s31, 0
      %p189 = por %p187, %p188
      %s191 = sadd.s32 %s190, 1
      %p194 = scmp.eq.s32.totalorder %s25, 3
      %p195 = scmp.ne.s32.totalorder %s190, %s192
      %p196 = scmp.eq.s32.totalorder %s25, 0
      %p197 = por %p195, %p196
      %p198 = scmp.ne.s32.totalorder %s190, %s192
      %p199 = scmp.eq.s32.totalorder %s30, 3
      %p200 = por %p198, %p199
      %p201 = scmp.ne.s32.totalorder %s192, %s193
      %p202 = scmp.eq.s32.totalorder %s30, 0
      %p203 = por %p201, %p202
      %p204 = scmp.ne.s32.totalorder %s192, %s193
      %p205 = scmp.eq.s32.totalorder %s31, 3
      %p206 = por %p204, %p205
      %p208 = scmp.ne.s32.totalorder %s193, %s207
      %p209 = scmp.eq.s32.totalorder %s31, 0
      %p210 = por %p208, %p209
      %s212 = sadd.s32 %s211, 1
      %p215 = scmp.eq.s32.totalorder %s25, 3
      %p216 = scmp.ne.s32.totalorder %s211, %s213
      %p217 = scmp.eq.s32.totalorder %s25, 0
      %p218 = por %p216, %p217
      %p219 = scmp.ne.s32.totalorder %s211, %s213
      %p220 = scmp.eq.s32.totalorder %s30, 3
      %p221 = por %p219, %p220
      %p222 = scmp.ne.s32.totalorder %s213, %s214
      %p223 = scmp.eq.s32.totalorder %s30, 0
      %p224 = por %p222, %p223
      %p225 = scmp.ne.s32.totalorder %s213, %s214
      %p226 = scmp.eq.s32.totalorder %s31, 3
      %p227 = por %p225, %p226
      %p229 = scmp.ne.s32.totalorder %s214, %s228
      %p230 = scmp.eq.s32.totalorder %s31, 0
      %p231 = por %p229, %p230
      %s233 = sadd.s32 %s232, 1
      %p236 = scmp.eq.s32.totalorder %s25, 3
      %p237 = scmp.ne.s32.totalorder %s232, %s234
      %p238 = scmp.eq.s32.totalorder %s25, 0
      %p239 = por %p237, %p238
      %p240 = scmp.ne.s32.totalorder %s232, %s234
      %p241 = scmp.eq.s32.totalorder %s30, 3
      %p242 = por %p240, %p241
      %p243 = scmp.ne.s32.totalorder %s234, %s235
      %p244 = scmp.eq.s32.totalorder %s30, 0
      %p245 = por %p243, %p244
      %p246 = scmp.ne.s32.totalorder %s234, %s235
      %p247 = scmp.eq.s32.totalorder %s31, 3
      %p248 = por %p246, %p247
      %p250 = scmp.ne.s32.totalorder %s235, %s249
      %p251 = scmp.eq.s32.totalorder %s31, 0
      %p252 = por %p250, %p251
      %s254 = sadd.s32 %s253, 1
      %p257 = scmp.eq.s32.totalorder %s25, 3
      %p258 = scmp.ne.s32.totalorder %s253, %s255
      %p259 = scmp.eq.s32.totalorder %s25, 0
      %p260 = por %p258, %p259
      %p261 = scmp.ne.s32.totalorder %s253, %s255
      %p262 = scmp.eq.s32.totalorder %s30, 3
      %p263 = por %p261, %p262
      %p264 = scmp.ne.s32.totalorder %s255, %s256
      %p265 = scmp.eq.s32.totalorder %s30, 0
      %p266 = por %p264, %p265
      %p267 = scmp.ne.s32.totalorder %s255, %s256
      %p268 = scmp.eq.s32.totalorder %s31, 3
      %p269 = por %p267, %p268
      %p271 = scmp.ne.s32.totalorder %s256, %s270
      %p272 = scmp.eq.s32.totalorder %s31, 0
      %p273 = por %p271, %p272
      %s275 = sadd.s32 %s274, 1
      %p278 = scmp.eq.s32.totalorder %s25, 3
      %p279 = scmp.ne.s32.totalorder %s274, %s276
      %p280 = scmp.eq.s32.totalorder %s25, 0
      %p281 = por %p279, %p280
      %p282 = scmp.ne.s32.totalorder %s274, %s276
      %p283 = scmp.eq.s32.totalorder %s30, 3
      %p284 = por %p282, %p283
      %p285 = scmp.ne.s32.totalorder %s276, %s277
      %p286 = scmp.eq.s32.totalorder %s30, 0
      %p287 = por %p285, %p286
      %p288 = scmp.ne.s32.totalorder %s276, %s277
      %p289 = scmp.eq.s32.totalorder %s31, 3
      %p290 = por %p288, %p289
      %p292 = scmp.ne.s32.totalorder %s277, %s291
      %p293 = scmp.eq.s32.totalorder %s31, 0
      %p294 = por %p292, %p293
      %s296 = sadd.s32 %s295, 1
      %p299 = scmp.eq.s32.totalorder %s25, 3
      %p300 = scmp.ne.s32.totalorder %s295, %s297
      %p301 = scmp.eq.s32.totalorder %s25, 0
      %p302 = por %p300, %p301
      %p303 = scmp.ne.s32.totalorder %s295, %s297
      %p304 = scmp.eq.s32.totalorder %s30, 3
      %p305 = por %p303, %p304
      %p306 = scmp.ne.s32.totalorder %s297, %s298
      %p307 = scmp.eq.s32.totalorder %s30, 0
      %p308 = por %p306, %p307
      %p309 = scmp.ne.s32.totalorder %s297, %s298
      %p310 = scmp.eq.s32.totalorder %s31, 3
      %p311 = por %p309, %p310
      %p313 = scmp.ne.s32.totalorder %s298, %s312
      %p314 = scmp.eq.s32.totalorder %s31, 0
      %p315 = por %p313, %p314
      %s317 = sadd.s32 %s316, 1
      %p320 = scmp.eq.s32.totalorder %s25, 3
      %p321 = scmp.ne.s32.totalorder %s316, %s318
      %p322 = scmp.eq.s32.totalorder %s25, 0
      %p323 = por %p321, %p322
      %p324 = scmp.ne.s32.totalorder %s316, %s318
      %p325 = scmp.eq.s32.totalorder %s30, 3
      %p326 = por %p324, %p325
      %p327 = scmp.ne.s32.totalorder %s318, %s319
      %p328 = scmp.eq.s32.totalorder %s30, 0
      %p329 = por %p327, %p328
      %p330 = scmp.ne.s32.totalorder %s318, %s319
      %p331 = scmp.eq.s32.totalorder %s31, 3
      %p332 = por %p330, %p331
      %p334 = scmp.ne.s32.totalorder %s319, %s333
      %p335 = scmp.eq.s32.totalorder %s31, 0
      %p336 = por %p334, %p335
      %s338 = sadd.s32 %s337, 1
      %p341 = scmp.eq.s32.totalorder %s25, 3
      %p342 = scmp.ne.s32.totalorder %s337, %s339
      %p343 = scmp.eq.s32.totalorder %s25, 0
      %p344 = por %p342, %p343
      %p345 = scmp.ne.s32.totalorder %s337, %s339
      %p346 = scmp.eq.s32.totalorder %s30, 3
      %p347 = por %p345, %p346
      %p348 = scmp.ne.s32.totalorder %s339, %s340
      %p349 = scmp.eq.s32.totalorder %s30, 0
      %p350 = por %p348, %p349
      %p351 = scmp.ne.s32.totalorder %s339, %s340
      %p352 = scmp.eq.s32.totalorder %s31, 3
      %p353 = por %p351, %p352
      %p355 = scmp.ne.s32.totalorder %s340, %s354
      %p356 = scmp.eq.s32.totalorder %s31, 0
      %p357 = por %p355, %p356
      %s359 = sadd.s32 %s358, 1
      %p362 = scmp.eq.s32.totalorder %s25, 3
      %p363 = scmp.ne.s32.totalorder %s358, %s360
      %p364 = scmp.eq.s32.totalorder %s25, 0
      %p365 = por %p363, %p364
      %p366 = scmp.ne.s32.totalorder %s358, %s360
      %p367 = scmp.eq.s32.totalorder %s30, 3
      %p368 = por %p366, %p367
      %p369 = scmp.ne.s32.totalorder %s360, %s361
      %p370 = scmp.eq.s32.totalorder %s30, 0
      %p371 = por %p369, %p370
      %p372 = scmp.ne.s32.totalorder %s360, %s361
      %p373 = scmp.eq.s32.totalorder %s31, 3
      %p374 = por %p372, %p373
      %p376 = scmp.ne.s32.totalorder %s361, %s375
      %p377 = scmp.eq.s32.totalorder %s31, 0
      %p378 = por %p376, %p377
      %s379 = ssub.s32 %s25, %s32
      %p380 = scmp.eq.s32.totalorder %s379, 0
      %s382 = sadd.s32 %s381, 1
      %s383 = scalar_select %p380, %s381, %s382
      %p386 = pneg %p380
      %p387 = scmp.eq.s32.totalorder %s25, 3
      %p388 = por %p386, %p387
      %p389 = scmp.ne.s32.totalorder %s381, %s384
      %p390 = scmp.eq.s32.totalorder %s25, 0
      %p391 = por %p389, %p390
      %p392 = scmp.ne.s32.totalorder %s381, %s384
      %p393 = scmp.eq.s32.totalorder %s30, 3
      %p394 = por %p392, %p393
      %p395 = scmp.ne.s32.totalorder %s384, %s385
      %p396 = scmp.eq.s32.totalorder %s30, 0
      %p397 = por %p395, %p396
      %p398 = scmp.ne.s32.totalorder %s384, %s385
      %p399 = scmp.eq.s32.totalorder %s31, 3
      %p400 = por %p398, %p399
      %p402 = scmp.ne.s32.totalorder %s385, %s401
      %p403 = scmp.eq.s32.totalorder %s31, 0
      %p404 = por %p402, %p403
      %p405 = scmp.le.s32.totalorder 1, %s25
      %p406 = scmp.lt.s32.totalorder %s25, 5
      %p407 = pnand %p405, %p406
      %p408 = pneg %p407
      // Predicated region
      $region9: #{tpu_custom_call.1} parent=5 // pred_check
        _
      $region10: #{tpu_custom_call.1} parent=5 // pred_check_branch
        %410 = sbr.rel (%p407) target = $region12
      $region11: #{tpu_custom_call.1} parent=5 // pred_region
        %s411 = ssub.s32 %s25, 1
        // Predicated region
        $region13: #{tpu_custom_call.1} parent=11 // pred_check
          %p412 = pneg %p98
        $region14: #{tpu_custom_call.1} parent=11 // pred_check_branch
          %414 = sbr.rel (%p412) target = $region16
        $region15: #{tpu_custom_call.1} parent=11 // pred_region
          _
        $region16: #{tpu_custom_call.1} parent=11 // pred_fallthru
          _
        // Predicated region
        $region17: #{tpu_custom_call.1} parent=11 // pred_check
          %p415 = pneg %p119
        $region18: #{tpu_custom_call.1} parent=11 // pred_check_branch
          %417 = sbr.rel (%p415) target = $region20
        $region19: #{tpu_custom_call.1} parent=11 // pred_region
          _
        $region20: #{tpu_custom_call.1} parent=11 // pred_fallthru
          _
        // Predicated region
        $region21: #{tpu_custom_call.1} parent=11 // pred_check
          %p418 = pneg %p140
        $region22: #{tpu_custom_call.1} parent=11 // pred_check_branch
          %420 = sbr.rel (%p418) target = $region24
        $region23: #{tpu_custom_call.1} parent=11 // pred_region
          _
        $region24: #{tpu_custom_call.1} parent=11 // pred_fallthru
          _
        // Predicated region
        $region25: #{tpu_custom_call.1} parent=11 // pred_check
          %p421 = pneg %p161
        $region26: #{tpu_custom_call.1} parent=11 // pred_check_branch
          %423 = sbr.rel (%p421) target = $region28
        $region27: #{tpu_custom_call.1} parent=11 // pred_region
          _
        $region28: #{tpu_custom_call.1} parent=11 // pred_fallthru
          _
        // Predicated region
        $region29: #{tpu_custom_call.1} parent=11 // pred_check
          %p424 = pneg %p182
        $region30: #{tpu_custom_call.1} parent=11 // pred_check_branch
          %426 = sbr.rel (%p424) target = $region32
        $region31: #{tpu_custom_call.1} parent=11 // pred_region
          _
        $region32: #{tpu_custom_call.1} parent=11 // pred_fallthru
          _
        // Predicated region
        $region33: #{tpu_custom_call.1} parent=11 // pred_check
          %p427 = pneg %p203
        $region34: #{tpu_custom_call.1} parent=11 // pred_check_branch
          %429 = sbr.rel (%p427) target = $region36
        $region35: #{tpu_custom_call.1} parent=11 // pred_region
          _
        $region36: #{tpu_custom_call.1} parent=11 // pred_fallthru
          _
        // Predicated region
        $region37: #{tpu_custom_call.1} parent=11 // pred_check
          %p430 = pneg %p224
        $region38: #{tpu_custom_call.1} parent=11 // pred_check_branch
          %432 = sbr.rel (%p430) target = $region40
        $region39: #{tpu_custom_call.1} parent=11 // pred_region
          _
        $region40: #{tpu_custom_call.1} parent=11 // pred_fallthru
          _
        // Predicated region
        $region41: #{tpu_custom_call.1} parent=11 // pred_check
          %p433 = pneg %p245
        $region42: #{tpu_custom_call.1} parent=11 // pred_check_branch
          %435 = sbr.rel (%p433) target = $region44
        $region43: #{tpu_custom_call.1} parent=11 // pred_region
          _
        $region44: #{tpu_custom_call.1} parent=11 // pred_fallthru
          _
        // Predicated region
        $region45: #{tpu_custom_call.1} parent=11 // pred_check
          %p436 = pneg %p266
        $region46: #{tpu_custom_call.1} parent=11 // pred_check_branch
          %438 = sbr.rel (%p436) target = $region48
        $region47: #{tpu_custom_call.1} parent=11 // pred_region
          _
        $region48: #{tpu_custom_call.1} parent=11 // pred_fallthru
          _
        // Predicated region
        $region49: #{tpu_custom_call.1} parent=11 // pred_check
          %p439 = pneg %p287
        $region50: #{tpu_custom_call.1} parent=11 // pred_check_branch
          %441 = sbr.rel (%p439) target = $region52
        $region51: #{tpu_custom_call.1} parent=11 // pred_region
          _
        $region52: #{tpu_custom_call.1} parent=11 // pred_fallthru
          _
        // Predicated region
        $region53: #{tpu_custom_call.1} parent=11 // pred_check
          %p442 = pneg %p308
        $region54: #{tpu_custom_call.1} parent=11 // pred_check_branch
          %444 = sbr.rel (%p442) target = $region56
        $region55: #{tpu_custom_call.1} parent=11 // pred_region
          _
        $region56: #{tpu_custom_call.1} parent=11 // pred_fallthru
          _
        // Predicated region
        $region57: #{tpu_custom_call.1} parent=11 // pred_check
          %p445 = pneg %p329
        $region58: #{tpu_custom_call.1} parent=11 // pred_check_branch
          %447 = sbr.rel (%p445) target = $region60
        $region59: #{tpu_custom_call.1} parent=11 // pred_region
          _
        $region60: #{tpu_custom_call.1} parent=11 // pred_fallthru
          _
        // Predicated region
        $region61: #{tpu_custom_call.1} parent=11 // pred_check
          %p448 = pneg %p350
        $region62: #{tpu_custom_call.1} parent=11 // pred_check_branch
          %450 = sbr.rel (%p448) target = $region64
        $region63: #{tpu_custom_call.1} parent=11 // pred_region
          _
        $region64: #{tpu_custom_call.1} parent=11 // pred_fallthru
          _
        // Predicated region
        $region65: #{tpu_custom_call.1} parent=11 // pred_check
          %p451 = pneg %p371
        $region66: #{tpu_custom_call.1} parent=11 // pred_check_branch
          %453 = sbr.rel (%p451) target = $region68
        $region67: #{tpu_custom_call.1} parent=11 // pred_region
          _
        $region68: #{tpu_custom_call.1} parent=11 // pred_fallthru
          _
      $region12: #{tpu_custom_call.1} parent=5 // pred_fallthru
        _
      %p454 = scmp.lt.s32.totalorder %s25, 4
      // Predicated region
      $region69: #{tpu_custom_call.1} parent=5 // pred_check
        %p455 = pneg %p454
      $region70: #{tpu_custom_call.1} parent=5 // pred_check_branch
        %457 = sbr.rel (%p455) target = $region72
      $region71: #{tpu_custom_call.1} parent=5 // pred_region
        // Predicated region
        $region73: #{tpu_custom_call.1} parent=71 // pred_check
          %p458 = pneg %p45
        $region74: #{tpu_custom_call.1} parent=71 // pred_check_branch
          %460 = sbr.rel (%p458) target = $region76
        $region75: #{tpu_custom_call.1} parent=71 // pred_region
          %p461 = scmp.lt.s32.totalorder %s25, 3
          %s462 = scalar_select %p461, %s25, 3
          %s463 = smul.addr %s462, 2
          %s464 = smul.addr %s463, 8
          %s465 = scalar_lea.vmem %s0, %s464
        $region76: #{tpu_custom_call.1} parent=71 // pred_fallthru
          _
        // Predicated region
        $region77: #{tpu_custom_call.1} parent=71 // pred_check
          %p466 = pneg %p71
        $region78: #{tpu_custom_call.1} parent=71 // pred_check_branch
          %468 = sbr.rel (%p466) target = $region80
        $region79: #{tpu_custom_call.1} parent=71 // pred_region
          %p469 = scmp.lt.s32.totalorder %s25, 3
          %s470 = scalar_select %p469, %s25, 3
          %s471 = smul.addr %s470, 2
          %s472 = smul.addr %s471, 2
          %s473 = scalar_lea.vmem %s1, %s472
        $region80: #{tpu_custom_call.1} parent=71 // pred_fallthru
          _
      $region72: #{tpu_custom_call.1} parent=5 // pred_fallthru
        _
      %p474 = scmp.le.s32.totalorder 1, %s25
      %p475 = scmp.lt.s32.totalorder %s25, 5
      %p476 = pnand %p474, %p475
      %p477 = pneg %p476
      // Predicated region
      $region81: #{tpu_custom_call.1} parent=5 // pred_check
        _
      $region82: #{tpu_custom_call.1} parent=5 // pred_check_branch
        %479 = sbr.rel (%p476) target = $region84
      $region83: #{tpu_custom_call.1} parent=5 // pred_region
        %s480 = ssub.s32 %s25, 1
        %p481 = scmp.lt.s32.totalorder %s30, 3
        %s482 = scalar_select %p481, %s30, 3
        %s483 = smul.addr %s482, 2
        %s484 = smul.addr %s483, 8
        %s485 = scalar_lea.vmem %s0, %s484
        %p486 = pneg %p51
        %p487 = pneg %p48
        %p488 = scmp.lt.s32.totalorder %s30, 3
        %s489 = scalar_select %p488, %s30, 3
        %s490 = smul.addr %s489, 2
        %s491 = smul.addr %s490, 2
        %s492 = scalar_lea.vmem %s1, %s491
        %p493 = pneg %p77
        %p494 = pneg %p74
        %p495 = pneg %p98
        %p496 = pneg %p95
        %p497 = pneg %p119
        %p498 = pneg %p116
        %p499 = pneg %p140
        %p500 = pneg %p137
        %p501 = pneg %p161
        %p502 = pneg %p158
        %p503 = pneg %p182
        %p504 = pneg %p179
        %p505 = pneg %p203
        %p506 = pneg %p200
        %p507 = pneg %p224
        %p508 = pneg %p221
        %p509 = pneg %p245
        %p510 = pneg %p242
        %p511 = pneg %p266
        %p512 = pneg %p263
        %p513 = pneg %p287
        %p514 = pneg %p284
        %p515 = pneg %p308
        %p516 = pneg %p305
        %p517 = pneg %p329
        %p518 = pneg %p326
        %p519 = pneg %p350
        %p520 = pneg %p347
        %p521 = pneg %p371
        %p522 = pneg %p368
        %p523 = pneg %p397
        %p524 = pneg %p394
        %s525 = sand.u32 %s384, 1
        %s526 = scalar_lea.sflag [#allocation3], %s525
        %s527 = sand.u32 %s384, 1
        %s528 = smul.addr %s527, 16
        %s529 = scalar_lea.vmem [#allocation2], %s528
        %p530 = scmp.lt.s32.totalorder %s30, 3
        %s531 = scalar_select %p530, %s30, 3
        %s532 = smul.addr %s531, 2
        %s533 = smul.addr %s532, 8
        %s534 = scalar_lea.vmem %s0, %s533
        %p535 = scmp.lt.s32.totalorder %s30, 3
        %s536 = scalar_select %p535, %s30, 3
        %s537 = smul.addr %s536, 2
        %s538 = smul.addr %s537, 2
        %s539 = scalar_lea.vmem %s1, %s538
        %v541 = vld [vmem:[%s534] sm:$0xff]
        %v542 = vld [vmem:[%s534 + $0x8] sm:$0xff]
        %v543 = vld [vmem:[%s539] sm:$0xf]
        %v544 = vlaneseq
        %v545 = vand.u32 %v544, 127
        %v546 = vadd.s32 %v545, 128
        %vm547 = vcmp.lt.s32.totalorder %v545, 0
        %v548 = vsub.s32 0, %v545
        %v549 = vsel %vm547, %v548, %v545
        %v550 = vshrl.u32 %v549, 4
        %v551 = vand.u32 %v549, 15
        %v552 = vsub.s32 0, %v551
        %v553 = vsel %vm547, %v552, %v551
        %vm554 = vcmp.lt.s32.totalorder %v546, 0
        %v555 = vsub.s32 0, %v546
        %v556 = vsel %vm554, %v555, %v546
        %v557 = vshrl.u32 %v556, 4
        %v558 = vand.u32 %v556, 15
        %v559 = vsub.s32 0, %v558
        %v560 = vsel %vm554, %v559, %v558
        %vm561 = vcmp.ne.s32.totalorder %v553, 0
        %vm562 = vcmp.ne.s32.totalorder %v560, 0
        %vm563 = vcmp.lt.s32.totalorder %v553, 0
        %vm564 = vcmp.lt.s32.totalorder %v560, 0
        %vm565 = vmand %vm563, %vm561
        %vm566 = vmand %vm564, %vm562
        %v567 = vadd.s32 %v553, 16
        %v568 = vadd.s32 %v560, 16
        %v569 = vsel %vm565, %v567, %v553
        %v570 = vsel %vm566, %v568, %v560
        %vm571 = vcmp.ne.s32.totalorder %v569, 0
        %vm572 = vcmp.ne.s32.totalorder %v570, 0
        %v573 = vsel %vm571, 1, 0
        %v574 = vsel %vm572, 1, 0
        %v575 = vcvt.s32.f32 %v573
        %v576 = vcvt.s32.f32 %v574
        %vm577 = vcmp.ge.s32.totalorder %v545, 16
        %vm578 = vcmp.ge.s32.totalorder %v546, 16
        %v579 = vsel %vm577, 1, 0
        %v580 = vsel %vm578, 1, 0
        %v581 = vcvt.s32.f32 %v579
        %v582 = vcvt.s32.f32 %v580
        %v583 = vmul.f32 %v575, %v581
        %v584 = vmul.f32 %v576, %v582
        %v585 = vld [vmem:[%s2] sm:$0xf]
        %v586 = vld [vmem:[%s2 + $0x4] sm:$0xf]
        %v587 = vld [vmem:[%s2 + $0x8] sm:$0xf]
        %v588 = vld [vmem:[%s3] sm:$0xff]
        %v589 = vld [vmem:[%s3 + $0x8] sm:$0xff]
        %v590 = vld [vmem:[%s3 + $0x10] sm:$0xff]
        %v591 = vand.u32 2147483647, %v541
        %v592 = vand.u32 2147483647, %v542
        %v593 = vsub.f32 0.0, %v591
        %v594 = vsub.f32 0.0, %v592
        %v595 = vmul.f32 %v593, 1.442695
        %v596 = vpow.pop %v595
        %v597 = vmul.f32 %v594, 1.442695
        %v598 = vpow.pop %v597
        %v599 = vsub.f32 %v596, 1.0
        %v600 = vsub.f32 %v598, 1.0
        %vm601 = vcmp.gt.f32.partialorder %v541, 0.0
        %vm602 = vcmp.gt.f32.partialorder %v542, 0.0
        %v603 = vsel %vm601, %v541, %v599
        %v604 = vsel %vm602, %v542, %v600
        %v605 = vsub.f32 0.0, %v541
        %v606 = vsub.f32 0.0, %v542
        %v607 = vsel %vm601, %v599, %v605
        %v608 = vsel %vm602, %v600, %v606
        %609 = vrot.lane.b32.xlu0 %v603, 17
        %v610 = vpop.permute.xlu0 %609
        %611 = vrot.lane.b32.xlu0 %v607, 17
        %v612 = vpop.permute.xlu0 %611
        %613 = vrot.lane.b32.xlu0 %v604, 17
        %v614 = vpop.permute.xlu0 %613
        %615 = vrot.lane.b32.xlu0 %v608, 17
        %v616 = vpop.permute.xlu0 %615
        %vm617 = vcmp.lt.s32.totalorder %v545, 17
        %v618 = vsel %vm617, %v610, %v614
        %v619 = vsel %vm617, %v612, %v616
        %v620 = vsel %vm617, %v614, %v610
        %v621 = vsel %vm617, %v616, %v612
        %v622 = vmul.f32 %v620, %v583
        %v623 = vmul.f32 %v618, %v584
        %v624 = vmul.f32 %v621, %v583
        %v625 = vmul.f32 %v619, %v584
        %626 = vrot.lane.b32.xlu0 %v603, 16
        %v627 = vpop.permute.xlu0 %626
        %628 = vrot.lane.b32.xlu0 %v607, 16
        %v629 = vpop.permute.xlu0 %628
        %630 = vrot.lane.b32.xlu0 %v604, 16
        %v631 = vpop.permute.xlu0 %630
        %632 = vrot.lane.b32.xlu0 %v608, 16
        %v633 = vpop.permute.xlu0 %632
        %vm634 = vcmp.lt.s32.totalorder %v545, 16
        %v635 = vsel %vm634, %v627, %v631
        %v636 = vsel %vm634, %v629, %v633
        %v637 = vsel %vm634, %v631, %v627
        %v638 = vsel %vm634, %v633, %v629
        %v639 = vmul.f32 %v637, %v581
        %v640 = vmul.f32 %v635, %v582
        %v641 = vmul.f32 %v638, %v581
        %v642 = vmul.f32 %v636, %v582
        %643 = vrot.lane.b32.xlu0 %v603, 1
        %v644 = vpop.permute.xlu0 %643
        %645 = vrot.lane.b32.xlu0 %v607, 1
        %v646 = vpop.permute.xlu0 %645
        %647 = vrot.lane.b32.xlu0 %v604, 1
        %v648 = vpop.permute.xlu0 %647
        %649 = vrot.lane.b32.xlu0 %v608, 1
        %v650 = vpop.permute.xlu0 %649
        %vm651 = vcmp.lt.s32.totalorder %v545, 1
        %v652 = vsel %vm651, %v644, %v648
        %v653 = vsel %vm651, %v646, %v650
        %v654 = vsel %vm651, %v648, %v644
        %v655 = vsel %vm651, %v650, %v646
        %v656 = vmul.f32 %v654, %v575
        %v657 = vmul.f32 %v652, %v576
        %v658 = vmul.f32 %v655, %v575
        %v659 = vmul.f32 %v653, %v576
        %v660 = vpack.c.bf16 %v624, %v622
        %v661 = vpack.c.bf16 %v625, %v623
        %v662 = vpack.c.bf16 %v641, %v639
        %v663 = vpack.c.bf16 %v642, %v640
        %v664 = vpack.c.bf16 %v658, %v656
        %v665 = vpack.c.bf16 %v659, %v657
        %v666 = vpack.c.bf16 %v607, %v603
        %v667 = vpack.c.bf16 %v608, %v604
        %669 = vset.pattern.permute.xlu0 0
        %670 = vperm.xlu0 %669, %v588
        %v671 = vpop.permute.xlu0 %670
        %vm673 = vcmask 523264
        %v675 = vsel %vm673, %v585, 0
        %677 = vmatprep.subr.bf16.mxu0 0
        %678 = vmatpush1.bf16.msra.mxu0 0
        %679 = vmatprep.subr.bf16.mxu0 0
        %680 = vmatpush1.bf16.msra.mxu0 0
        %681 = vmatprep.subr.bf16.mxu0 0
        %682 = vmatpush1.bf16.msra.mxu0 0
        %683 = vmatprep.subr.bf16.mxu0 0
        %684 = vmatpush1.bf16.msra.mxu0 0
        %685 = vmatprep.subr.bf16.mxu0 %v667
        %686 = vmatpush1.bf16.msra.mxu0 %v666
        %687 = vmatprep.subr.bf16.mxu0 %v665
        %688 = vmatpush1.bf16.msra.mxu0 %v664
        %689 = vmatprep.subr.bf16.mxu0 %v663
        %690 = vmatpush1.bf16.msra.mxu0 %v662
        %691 = vmatprep.subr.bf16.mxu0 %v661
        %692 = vmatpush1.bf16.msra.mxu0 %v660
        %693 = vmatprep.subr.bf16.mxu0 0
        %694 = vmatpush2.bf16.msra.mxu0 0
        %695 = vmatprep.subr.bf16.mxu0 0
        %696 = vmatpush2.bf16.msra.mxu0 0
        %697 = vmatprep.subr.bf16.mxu0 0
        %698 = vmatpush2.bf16.msra.mxu0 0
        %699 = vmatprep.subr.bf16.mxu0 0
        %700 = vmatpush2.bf16.msra.mxu0 0
        %701 = vmatprep.subr.bf16.mxu0 0
        %702 = vmatpush2.bf16.msra.mxu0 0
        %703 = vmatprep.subr.bf16.mxu0 0
        %704 = vmatpush2.bf16.msra.mxu0 0
        %705 = vmatprep.subr.bf16.mxu0 0
        %706 = vmatpush2.bf16.msra.mxu0 0
        %707 = vmatprep.subr.bf16.mxu0 0
        %708 = vmatpush2.bf16.msra.mxu0 0
        %709 = vmatprep.mubr.bf16.mxu0 0
        %710 = vmatmul.mubr.bf16.gmra.mxu0 %v675
        %v711 = vpop.f32.mrf.mxu0
        %v712 = vadd.f32 %v671, %v711
        %v713 = vpop.f32.mrf.mxu0
        %v714 = vadd.f32 %v671, %v713
        %v715 = vpop.f32.mrf.mxu0
        %v716 = vpop.f32.mrf.mxu0
        %717 = vdwg.mxu0
        %v718 = vand.u32 2147483647, %v712
        %v719 = vand.u32 2147483647, %v714
        %v720 = vsub.f32 0.0, %v718
        %v721 = vsub.f32 0.0, %v719
        %v722 = vmul.f32 %v720, 1.442695
        %v723 = vpow.pop %v722
        %v724 = vmul.f32 %v721, 1.442695
        %v725 = vpow.pop %v724
        %v726 = vsub.f32 %v723, 1.0
        %v727 = vsub.f32 %v725, 1.0
        %vm728 = vcmp.gt.f32.partialorder %v712, 0.0
        %vm729 = vcmp.gt.f32.partialorder %v714, 0.0
        %v730 = vsel %vm728, %v712, %v726
        %v731 = vsel %vm729, %v714, %v727
        %v732 = vsub.f32 0.0, %v712
        %v733 = vsub.f32 0.0, %v714
        %v734 = vsel %vm728, %v726, %v732
        %v735 = vsel %vm729, %v727, %v733
        %736 = vrot.lane.b32.xlu0 %v730, 17
        %v737 = vpop.permute.xlu0 %736
        %738 = vrot.lane.b32.xlu0 %v734, 17
        %v739 = vpop.permute.xlu0 %738
        %740 = vrot.lane.b32.xlu0 %v731, 17
        %v741 = vpop.permute.xlu0 %740
        %742 = vrot.lane.b32.xlu0 %v735, 17
        %v743 = vpop.permute.xlu0 %742
        %v744 = vsel %vm617, %v737, %v741
        %v745 = vsel %vm617, %v739, %v743
        %v746 = vsel %vm617, %v741, %v737
        %v747 = vsel %vm617, %v743, %v739
        %v748 = vmul.f32 %v746, %v583
        %v749 = vmul.f32 %v744, %v584
        %v750 = vmul.f32 %v747, %v583
        %v751 = vmul.f32 %v745, %v584
        %752 = vrot.lane.b32.xlu0 %v730, 16
        %v753 = vpop.permute.xlu0 %752
        %754 = vrot.lane.b32.xlu0 %v734, 16
        %v755 = vpop.permute.xlu0 %754
        %756 = vrot.lane.b32.xlu0 %v731, 16
        %v757 = vpop.permute.xlu0 %756
        %758 = vrot.lane.b32.xlu0 %v735, 16
        %v759 = vpop.permute.xlu0 %758
        %v760 = vsel %vm634, %v753, %v757
        %v761 = vsel %vm634, %v755, %v759
        %v762 = vsel %vm634, %v757, %v753
        %v763 = vsel %vm634, %v759, %v755
        %v764 = vmul.f32 %v762, %v581
        %v765 = vmul.f32 %v760, %v582
        %v766 = vmul.f32 %v763, %v581
        %v767 = vmul.f32 %v761, %v582
        %768 = vrot.lane.b32.xlu0 %v730, 1
        %v769 = vpop.permute.xlu0 %768
        %770 = vrot.lane.b32.xlu0 %v734, 1
        %v771 = vpop.permute.xlu0 %770
        %772 = vrot.lane.b32.xlu0 %v731, 1
        %v773 = vpop.permute.xlu0 %772
        %774 = vrot.lane.b32.xlu0 %v735, 1
        %v775 = vpop.permute.xlu0 %774
        %v776 = vsel %vm651, %v769, %v773
        %v777 = vsel %vm651, %v771, %v775
        %v778 = vsel %vm651, %v773, %v769
        %v779 = vsel %vm651, %v775, %v771
        %v780 = vmul.f32 %v778, %v575
        %v781 = vmul.f32 %v776, %v576
        %v782 = vmul.f32 %v779, %v575
        %v783 = vmul.f32 %v777, %v576
        %v784 = vpack.c.bf16 %v750, %v748
        %v785 = vpack.c.bf16 %v751, %v749
        %v786 = vpack.c.bf16 %v766, %v764
        %v787 = vpack.c.bf16 %v767, %v765
        %v788 = vpack.c.bf16 %v782, %v780
        %v789 = vpack.c.bf16 %v783, %v781
        %v790 = vpack.c.bf16 %v734, %v730
        %v791 = vpack.c.bf16 %v735, %v731
        %793 = vset.pattern.permute.xlu0 0
        %794 = vperm.xlu0 %793, %v589
        %v795 = vpop.permute.xlu0 %794
        %798 = vset.pattern.permute.xlu0 0
        %799 = vperm.xlu0 %798, %v590
        %v800 = vpop.permute.xlu0 %799
        %v804 = vunpack.c.l.b16 %v586
        %v805 = vunpack.c.l.b16 %v587
        %v806 = vpack.c.b16 %v805, %v804
        %v808 = vsel %vm673, %v806, 0
        %810 = vmatprep.subr.bf16.mxu0 0
        %811 = vmatpush1.bf16.msra.mxu0 0
        %812 = vmatprep.subr.bf16.mxu0 0
        %813 = vmatpush1.bf16.msra.mxu0 0
        %814 = vmatprep.subr.bf16.mxu0 0
        %815 = vmatpush1.bf16.msra.mxu0 0
        %816 = vmatprep.subr.bf16.mxu0 0
        %817 = vmatpush1.bf16.msra.mxu0 0
        %818 = vmatprep.subr.bf16.mxu0 %v791
        %819 = vmatpush1.bf16.msra.mxu0 %v790
        %820 = vmatprep.subr.bf16.mxu0 %v789
        %821 = vmatpush1.bf16.msra.mxu0 %v788
        %822 = vmatprep.subr.bf16.mxu0 %v787
        %823 = vmatpush1.bf16.msra.mxu0 %v786
        %824 = vmatprep.subr.bf16.mxu0 %v785
        %825 = vmatpush1.bf16.msra.mxu0 %v784
        %826 = vmatprep.subr.bf16.mxu0 0
        %827 = vmatpush2.bf16.msra.mxu0 0
        %828 = vmatprep.subr.bf16.mxu0 0
        %829 = vmatpush2.bf16.msra.mxu0 0
        %830 = vmatprep.subr.bf16.mxu0 0
        %831 = vmatpush2.bf16.msra.mxu0 0
        %832 = vmatprep.subr.bf16.mxu0 0
        %833 = vmatpush2.bf16.msra.mxu0 0
        %834 = vmatprep.subr.bf16.mxu0 0
        %835 = vmatpush2.bf16.msra.mxu0 0
        %836 = vmatprep.subr.bf16.mxu0 0
        %837 = vmatpush2.bf16.msra.mxu0 0
        %838 = vmatprep.subr.bf16.mxu0 0
        %839 = vmatpush2.bf16.msra.mxu0 0
        %840 = vmatprep.subr.bf16.mxu0 0
        %841 = vmatpush2.bf16.msra.mxu0 0
        %842 = vmatprep.mubr.bf16.mxu0 0
        %843 = vmatmul.mubr.bf16.gmra.mxu0 %v808
        %v844 = vpop.f32.mrf.mxu0
        %v845 = vadd.f32 %v795, %v844
        %v846 = vpop.f32.mrf.mxu0
        %v847 = vadd.f32 %v795, %v846
        %v848 = vpop.f32.mrf.mxu0
        %v849 = vadd.f32 %v800, %v848
        %v850 = vpop.f32.mrf.mxu0
        %v851 = vadd.f32 %v800, %v850
        %852 = vdwg.mxu0
        %v853 = vxor.u32 %v849, 2147483648
        %v854 = vxor.u32 %v851, 2147483648
        %v855 = vmul.f32 %v853, 1.442695
        %v856 = vpow.pop %v855
        %v857 = vmul.f32 %v854, 1.442695
        %v858 = vpow.pop %v857
        %v859 = vadd.f32 %v856, 1.0
        %v860 = vadd.f32 %v858, 1.0
        %v861 = vrcp.pop %v859
        %v862 = vmul.f32 1.0, %v861
        %v863 = vrcp.pop %v860
        %v864 = vmul.f32 1.0, %v863
        %v865 = vmul.f32 %v845, %v862
        %v866 = vmul.f32 %v847, %v864
        %v867 = vadd.f32 %v541, %v865
        %v868 = vadd.f32 %v542, %v866
        %s869 = scalar_lea.vmem %s2, 12
        %v870 = vld [vmem:[%s869] sm:$0xf]
        %v871 = vld [vmem:[%s869 + $0x4] sm:$0xf]
        %v872 = vld [vmem:[%s869 + $0x8] sm:$0xf]
        %s873 = scalar_lea.vmem %s3, 24
        %v874 = vld [vmem:[%s873] sm:$0xff]
        %v875 = vld [vmem:[%s873 + $0x8] sm:$0xff]
        %v876 = vld [vmem:[%s873 + $0x10] sm:$0xff]
        %v877 = vand.u32 2147483647, %v867
        %v878 = vand.u32 2147483647, %v868
        %v879 = vsub.f32 0.0, %v877
        %v880 = vsub.f32 0.0, %v878
        %v881 = vmul.f32 %v879, 1.442695
        %v882 = vpow.pop %v881
        %v883 = vmul.f32 %v880, 1.442695
        %v884 = vpow.pop %v883
        %v885 = vsub.f32 %v882, 1.0
        %v886 = vsub.f32 %v884, 1.0
        %vm887 = vcmp.gt.f32.partialorder %v867, 0.0
        %vm888 = vcmp.gt.f32.partialorder %v868, 0.0
        %v889 = vsel %vm887, %v867, %v885
        %v890 = vsel %vm888, %v868, %v886
        %v891 = vsub.f32 0.0, %v867
        %v892 = vsub.f32 0.0, %v868
        %v893 = vsel %vm887, %v885, %v891
        %v894 = vsel %vm888, %v886, %v892
        %895 = vrot.lane.b32.xlu0 %v889, 17
        %v896 = vpop.permute.xlu0 %895
        %897 = vrot.lane.b32.xlu0 %v893, 17
        %v898 = vpop.permute.xlu0 %897
        %899 = vrot.lane.b32.xlu0 %v890, 17
        %v900 = vpop.permute.xlu0 %899
        %901 = vrot.lane.b32.xlu0 %v894, 17
        %v902 = vpop.permute.xlu0 %901
        %v903 = vsel %vm617, %v896, %v900
        %v904 = vsel %vm617, %v898, %v902
        %v905 = vsel %vm617, %v900, %v896
        %v906 = vsel %vm617, %v902, %v898
        %v907 = vmul.f32 %v905, %v583
        %v908 = vmul.f32 %v903, %v584
        %v909 = vmul.f32 %v906, %v583
        %v910 = vmul.f32 %v904, %v584
        %911 = vrot.lane.b32.xlu0 %v889, 16
        %v912 = vpop.permute.xlu0 %911
        %913 = vrot.lane.b32.xlu0 %v893, 16
        %v914 = vpop.permute.xlu0 %913
        %915 = vrot.lane.b32.xlu0 %v890, 16
        %v916 = vpop.permute.xlu0 %915
        %917 = vrot.lane.b32.xlu0 %v894, 16
        %v918 = vpop.permute.xlu0 %917
        %v919 = vsel %vm634, %v912, %v916
        %v920 = vsel %vm634, %v914, %v918
        %v921 = vsel %vm634, %v916, %v912
        %v922 = vsel %vm634, %v918, %v914
        %v923 = vmul.f32 %v921, %v581
        %v924 = vmul.f32 %v919, %v582
        %v925 = vmul.f32 %v922, %v581
        %v926 = vmul.f32 %v920, %v582
        %927 = vrot.lane.b32.xlu0 %v889, 1
        %v928 = vpop.permute.xlu0 %927
        %929 = vrot.lane.b32.xlu0 %v893, 1
        %v930 = vpop.permute.xlu0 %929
        %931 = vrot.lane.b32.xlu0 %v890, 1
        %v932 = vpop.permute.xlu0 %931
        %933 = vrot.lane.b32.xlu0 %v894, 1
        %v934 = vpop.permute.xlu0 %933
        %v935 = vsel %vm651, %v928, %v932
        %v936 = vsel %vm651, %v930, %v934
        %v937 = vsel %vm651, %v932, %v928
        %v938 = vsel %vm651, %v934, %v930
        %v939 = vmul.f32 %v937, %v575
        %v940 = vmul.f32 %v935, %v576
        %v941 = vmul.f32 %v938, %v575
        %v942 = vmul.f32 %v936, %v576
        %v943 = vpack.c.bf16 %v909, %v907
        %v944 = vpack.c.bf16 %v910, %v908
        %v945 = vpack.c.bf16 %v925, %v923
        %v946 = vpack.c.bf16 %v926, %v924
        %v947 = vpack.c.bf16 %v941, %v939
        %v948 = vpack.c.bf16 %v942, %v940
        %v949 = vpack.c.bf16 %v893, %v889
        %v950 = vpack.c.bf16 %v894, %v890
        %952 = vset.pattern.permute.xlu0 0
        %953 = vperm.xlu0 %952, %v874
        %v954 = vpop.permute.xlu0 %953
        %v957 = vsel %vm673, %v870, 0
        %959 = vmatprep.subr.bf16.mxu0 0
        %960 = vmatpush1.bf16.msra.mxu0 0
        %961 = vmatprep.subr.bf16.mxu0 0
        %962 = vmatpush1.bf16.msra.mxu0 0
        %963 = vmatprep.subr.bf16.mxu0 0
        %964 = vmatpush1.bf16.msra.mxu0 0
        %965 = vmatprep.subr.bf16.mxu0 0
        %966 = vmatpush1.bf16.msra.mxu0 0
        %967 = vmatprep.subr.bf16.mxu0 %v950
        %968 = vmatpush1.bf16.msra.mxu0 %v949
        %969 = vmatprep.subr.bf16.mxu0 %v948
        %970 = vmatpush1.bf16.msra.mxu0 %v947
        %971 = vmatprep.subr.bf16.mxu0 %v946
        %972 = vmatpush1.bf16.msra.mxu0 %v945
        %973 = vmatprep.subr.bf16.mxu0 %v944
        %974 = vmatpush1.bf16.msra.mxu0 %v943
        %975 = vmatprep.subr.bf16.mxu0 0
        %976 = vmatpush2.bf16.msra.mxu0 0
        %977 = vmatprep.subr.bf16.mxu0 0
        %978 = vmatpush2.bf16.msra.mxu0 0
        %979 = vmatprep.subr.bf16.mxu0 0
        %980 = vmatpush2.bf16.msra.mxu0 0
        %981 = vmatprep.subr.bf16.mxu0 0
        %982 = vmatpush2.bf16.msra.mxu0 0
        %983 = vmatprep.subr.bf16.mxu0 0
        %984 = vmatpush2.bf16.msra.mxu0 0
        %985 = vmatprep.subr.bf16.mxu0 0
        %986 = vmatpush2.bf16.msra.mxu0 0
        %987 = vmatprep.subr.bf16.mxu0 0
        %988 = vmatpush2.bf16.msra.mxu0 0
        %989 = vmatprep.subr.bf16.mxu0 0
        %990 = vmatpush2.bf16.msra.mxu0 0
        %991 = vmatprep.mubr.bf16.mxu0 0
        %992 = vmatmul.mubr.bf16.gmra.mxu0 %v957
        %v993 = vpop.f32.mrf.mxu0
        %v994 = vadd.f32 %v954, %v993
        %v995 = vpop.f32.mrf.mxu0
        %v996 = vadd.f32 %v954, %v995
        %v997 = vpop.f32.mrf.mxu0
        %v998 = vpop.f32.mrf.mxu0
        %999 = vdwg.mxu0
        %v1000 = vand.u32 2147483647, %v994
        %v1001 = vand.u32 2147483647, %v996
        %v1002 = vsub.f32 0.0, %v1000
        %v1003 = vsub.f32 0.0, %v1001
        %v1004 = vmul.f32 %v1002, 1.442695
        %v1005 = vpow.pop %v1004
        %v1006 = vmul.f32 %v1003, 1.442695
        %v1007 = vpow.pop %v1006
        %v1008 = vsub.f32 %v1005, 1.0
        %v1009 = vsub.f32 %v1007, 1.0
        %vm1010 = vcmp.gt.f32.partialorder %v994, 0.0
        %vm1011 = vcmp.gt.f32.partialorder %v996, 0.0
        %v1012 = vsel %vm1010, %v994, %v1008
        %v1013 = vsel %vm1011, %v996, %v1009
        %v1014 = vsub.f32 0.0, %v994
        %v1015 = vsub.f32 0.0, %v996
        %v1016 = vsel %vm1010, %v1008, %v1014
        %v1017 = vsel %vm1011, %v1009, %v1015
        %1018 = vrot.lane.b32.xlu0 %v1012, 17
        %v1019 = vpop.permute.xlu0 %1018
        %1020 = vrot.lane.b32.xlu0 %v1016, 17
        %v1021 = vpop.permute.xlu0 %1020
        %1022 = vrot.lane.b32.xlu0 %v1013, 17
        %v1023 = vpop.permute.xlu0 %1022
        %1024 = vrot.lane.b32.xlu0 %v1017, 17
        %v1025 = vpop.permute.xlu0 %1024
        %v1026 = vsel %vm617, %v1019, %v1023
        %v1027 = vsel %vm617, %v1021, %v1025
        %v1028 = vsel %vm617, %v1023, %v1019
        %v1029 = vsel %vm617, %v1025, %v1021
        %v1030 = vmul.f32 %v1028, %v583
        %v1031 = vmul.f32 %v1026, %v584
        %v1032 = vmul.f32 %v1029, %v583
        %v1033 = vmul.f32 %v1027, %v584
        %1034 = vrot.lane.b32.xlu0 %v1012, 16
        %v1035 = vpop.permute.xlu0 %1034
        %1036 = vrot.lane.b32.xlu0 %v1016, 16
        %v1037 = vpop.permute.xlu0 %1036
        %1038 = vrot.lane.b32.xlu0 %v1013, 16
        %v1039 = vpop.permute.xlu0 %1038
        %1040 = vrot.lane.b32.xlu0 %v1017, 16
        %v1041 = vpop.permute.xlu0 %1040
        %v1042 = vsel %vm634, %v1035, %v1039
        %v1043 = vsel %vm634, %v1037, %v1041
        %v1044 = vsel %vm634, %v1039, %v1035
        %v1045 = vsel %vm634, %v1041, %v1037
        %v1046 = vmul.f32 %v1044, %v581
        %v1047 = vmul.f32 %v1042, %v582
        %v1048 = vmul.f32 %v1045, %v581
        %v1049 = vmul.f32 %v1043, %v582
        %1050 = vrot.lane.b32.xlu0 %v1012, 1
        %v1051 = vpop.permute.xlu0 %1050
        %1052 = vrot.lane.b32.xlu0 %v1016, 1
        %v1053 = vpop.permute.xlu0 %1052
        %1054 = vrot.lane.b32.xlu0 %v1013, 1
        %v1055 = vpop.permute.xlu0 %1054
        %1056 = vrot.lane.b32.xlu0 %v1017, 1
        %v1057 = vpop.permute.xlu0 %1056
        %v1058 = vsel %vm651, %v1051, %v1055
        %v1059 = vsel %vm651, %v1053, %v1057
        %v1060 = vsel %vm651, %v1055, %v1051
        %v1061 = vsel %vm651, %v1057, %v1053
        %v1062 = vmul.f32 %v1060, %v575
        %v1063 = vmul.f32 %v1058, %v576
        %v1064 = vmul.f32 %v1061, %v575
        %v1065 = vmul.f32 %v1059, %v576
        %v1066 = vpack.c.bf16 %v1032, %v1030
        %v1067 = vpack.c.bf16 %v1033, %v1031
        %v1068 = vpack.c.bf16 %v1048, %v1046
        %v1069 = vpack.c.bf16 %v1049, %v1047
        %v1070 = vpack.c.bf16 %v1064, %v1062
        %v1071 = vpack.c.bf16 %v1065, %v1063
        %v1072 = vpack.c.bf16 %v1016, %v1012
        %v1073 = vpack.c.bf16 %v1017, %v1013
        %1075 = vset.pattern.permute.xlu0 0
        %1076 = vperm.xlu0 %1075, %v875
        %v1077 = vpop.permute.xlu0 %1076
        %1080 = vset.pattern.permute.xlu0 0
        %1081 = vperm.xlu0 %1080, %v876
        %v1082 = vpop.permute.xlu0 %1081
        %v1086 = vunpack.c.l.b16 %v871
        %v1087 = vunpack.c.l.b16 %v872
        %v1088 = vpack.c.b16 %v1087, %v1086
        %v1090 = vsel %vm673, %v1088, 0
        %1092 = vmatprep.subr.bf16.mxu0 0
        %1093 = vmatpush1.bf16.msra.mxu0 0
        %1094 = vmatprep.subr.bf16.mxu0 0
        %1095 = vmatpush1.bf16.msra.mxu0 0
        %1096 = vmatprep.subr.bf16.mxu0 0
        %1097 = vmatpush1.bf16.msra.mxu0 0
        %1098 = vmatprep.subr.bf16.mxu0 0
        %1099 = vmatpush1.bf16.msra.mxu0 0
        %1100 = vmatprep.subr.bf16.mxu0 %v1073
        %1101 = vmatpush1.bf16.msra.mxu0 %v1072
        %1102 = vmatprep.subr.bf16.mxu0 %v1071
        %1103 = vmatpush1.bf16.msra.mxu0 %v1070
        %1104 = vmatprep.subr.bf16.mxu0 %v1069
        %1105 = vmatpush1.bf16.msra.mxu0 %v1068
        %1106 = vmatprep.subr.bf16.mxu0 %v1067
        %1107 = vmatpush1.bf16.msra.mxu0 %v1066
        %1108 = vmatprep.subr.bf16.mxu0 0
        %1109 = vmatpush2.bf16.msra.mxu0 0
        %1110 = vmatprep.subr.bf16.mxu0 0
        %1111 = vmatpush2.bf16.msra.mxu0 0
        %1112 = vmatprep.subr.bf16.mxu0 0
        %1113 = vmatpush2.bf16.msra.mxu0 0
        %1114 = vmatprep.subr.bf16.mxu0 0
        %1115 = vmatpush2.bf16.msra.mxu0 0
        %1116 = vmatprep.subr.bf16.mxu0 0
        %1117 = vmatpush2.bf16.msra.mxu0 0
        %1118 = vmatprep.subr.bf16.mxu0 0
        %1119 = vmatpush2.bf16.msra.mxu0 0
        %1120 = vmatprep.subr.bf16.mxu0 0
        %1121 = vmatpush2.bf16.msra.mxu0 0
        %1122 = vmatprep.subr.bf16.mxu0 0
        %1123 = vmatpush2.bf16.msra.mxu0 0
        %1124 = vmatprep.mubr.bf16.mxu0 0
        %1125 = vmatmul.mubr.bf16.gmra.mxu0 %v1090
        %v1126 = vpop.f32.mrf.mxu0
        %v1127 = vadd.f32 %v1077, %v1126
        %v1128 = vpop.f32.mrf.mxu0
        %v1129 = vadd.f32 %v1077, %v1128
        %v1130 = vpop.f32.mrf.mxu0
        %v1131 = vadd.f32 %v1082, %v1130
        %v1132 = vpop.f32.mrf.mxu0
        %v1133 = vadd.f32 %v1082, %v1132
        %1134 = vdwg.mxu0
        %v1135 = vxor.u32 %v1131, 2147483648
        %v1136 = vxor.u32 %v1133, 2147483648
        %v1137 = vmul.f32 %v1135, 1.442695
        %v1138 = vpow.pop %v1137
        %v1139 = vmul.f32 %v1136, 1.442695
        %v1140 = vpow.pop %v1139
        %v1141 = vadd.f32 %v1138, 1.0
        %v1142 = vadd.f32 %v1140, 1.0
        %v1143 = vrcp.pop %v1141
        %v1144 = vmul.f32 1.0, %v1143
        %v1145 = vrcp.pop %v1142
        %v1146 = vmul.f32 1.0, %v1145
        %v1147 = vmul.f32 %v1127, %v1144
        %v1148 = vmul.f32 %v1129, %v1146
        %v1149 = vadd.f32 %v867, %v1147
        %v1150 = vadd.f32 %v868, %v1148
        %v1153 = vunpack.c.l.s4 1983009808
        %v1154 = vunpack.c.0.s8 %v1153
        %v1155 = vlaneseq
        %v1156 = vshrl.u32 %v1155, 7
        %v1157 = vsub.s32 %v1154, %v1156
        %v1158 = vrot.slane %v543, %v1157
        %v1159 = vcombine.high %v1158, %v1158
        %v1162 = vld [vmem:[%s4] sm:$0xf]
        %v1163 = vld [vmem:[%s4 + $0x4] sm:$0xf]
        %v1164 = vld [vmem:[%s4 + $0x8] sm:$0xf]
        %v1165 = vld [vmem:[%s4 + $0xc] sm:$0xf]
        %v1166 = vld [vmem:[%s4 + $0x10] sm:$0xf]
        %v1167 = vld [vmem:[%s4 + $0x14] sm:$0xf]
        %v1168 = vld [vmem:[%s4 + $0x18] sm:$0x7]
        %v1169 = vld [vmem:[%s5] sm:$0xff]
        %v1170 = vld [vmem:[%s5 + $0x8] sm:$0xff]
        %v1171 = vld [vmem:[%s5 + $0x10] sm:$0xff]
        %v1172 = vld [vmem:[%s5 + $0x18] sm:$0xff]
        %v1173 = vld [vmem:[%s5 + $0x20] sm:$0xff]
        %v1174 = vld [vmem:[%s5 + $0x28] sm:$0xff]
        %v1175 = vld [vmem:[%s5 + $0x30] sm:$0x3f]
        %v1176 = vand.u32 2147483647, %v1149
        %v1177 = vand.u32 2147483647, %v1150
        %v1178 = vand.u32 2147483647, %v1158
        %v1179 = vand.u32 2147483647, %v1159
        %v1180 = vsub.f32 0.0, %v1176
        %v1181 = vsub.f32 0.0, %v1177
        %v1182 = vsub.f32 0.0, %v1178
        %v1183 = vsub.f32 0.0, %v1179
        %v1184 = vmul.f32 %v1180, 1.442695
        %v1185 = vpow.pop %v1184
        %v1186 = vmul.f32 %v1181, 1.442695
        %v1187 = vpow.pop %v1186
        %v1188 = vmul.f32 %v1182, 1.442695
        %v1189 = vpow.pop %v1188
        %v1190 = vmul.f32 %v1183, 1.442695
        %v1191 = vpow.pop %v1190
        %v1192 = vsub.f32 %v1185, 1.0
        %v1193 = vsub.f32 %v1187, 1.0
        %v1194 = vsub.f32 %v1189, 1.0
        %v1195 = vsub.f32 %v1191, 1.0
        %vm1196 = vcmp.gt.f32.partialorder %v1149, 0.0
        %vm1197 = vcmp.gt.f32.partialorder %v1150, 0.0
        %vm1198 = vcmp.gt.f32.partialorder %v1158, 0.0
        %vm1199 = vcmp.gt.f32.partialorder %v1159, 0.0
        %v1200 = vsel %vm1196, %v1149, %v1192
        %v1201 = vsel %vm1197, %v1150, %v1193
        %v1202 = vsel %vm1198, %v1158, %v1194
        %v1203 = vsel %vm1199, %v1159, %v1195
        %v1204 = vsub.f32 0.0, %v1149
        %v1205 = vsub.f32 0.0, %v1150
        %v1206 = vsub.f32 0.0, %v1158
        %v1207 = vsub.f32 0.0, %v1159
        %v1208 = vsel %vm1196, %v1192, %v1204
        %v1209 = vsel %vm1197, %v1193, %v1205
        %v1210 = vsel %vm1198, %v1194, %v1206
        %v1211 = vsel %vm1199, %v1195, %v1207
        %vm1218 = vcmask 1041408
        %v1219 = vrot.slane %v607, 6
        %v1220 = vrot.slane %v608, 6
        %v1221 = vrot.slane %v1208, 6
        %v1222 = vsel %vm1218, %v1219, %v1221
        %v1223 = vrot.slane %v1209, 6
        %v1224 = vsel %vm1218, %v1220, %v1223
        %v1225 = vrot.slane %v1210, 6
        %v1226 = vsel %vm1218, %v1221, %v1225
        %v1227 = vrot.slane %v1211, 6
        %v1228 = vsel %vm1218, %v1223, %v1227
        %v1235 = vsel %vm1218, %v1202, %v1219
        %v1236 = vsel %vm1218, %v1203, %v1220
        %v1237 = vpack.c.bf16 %v1200, %v603
        %v1238 = vpack.c.bf16 %v1201, %v604
        %v1239 = vpack.c.bf16 %v1222, %v1235
        %v1240 = vpack.c.bf16 %v1224, %v1236
        %v1241 = vpack.c.bf16 %v1226, %v1226
        %v1242 = vpack.c.bf16 %v1228, %v1228
        %1244 = vset.pattern.permute.xlu0 0
        %1245 = vperm.xlu0 %1244, %v1169
        %v1246 = vpop.permute.xlu0 %1245
        %1249 = vset.pattern.permute.xlu0 0
        %1250 = vperm.xlu0 %1249, %v1170
        %v1251 = vpop.permute.xlu0 %1250
        %1254 = vset.pattern.permute.xlu0 0
        %1255 = vperm.xlu0 %1254, %v1171
        %v1256 = vpop.permute.xlu0 %1255
        %v1261 = vunpack.c.l.b16 %v1162
        %v1262 = vunpack.c.l.b16 %v1163
        %v1263 = vunpack.c.l.b16 %v1164
        %v1264 = vpack.c.b16 %v1262, %v1261
        %v1265 = vpack.c.b16 %v1263, %v1263
        %vm1266 = vcmask 293888
        %v1268 = vsel %vm1266, %v1264, 0
        %v1271 = vsel %vm1266, %v1265, 0
        %v1274 = vsel %vm1218, %v1241, 0
        %v1277 = vsel %vm1218, %v1242, 0
        %1279 = vmatprep.subr.bf16.mxu0 0
        %1280 = vmatpush1.bf16.msra.mxu0 0
        %1281 = vmatprep.subr.bf16.mxu0 0
        %1282 = vmatpush1.bf16.msra.mxu0 0
        %1283 = vmatprep.subr.bf16.mxu0 0
        %1284 = vmatpush1.bf16.msra.mxu0 0
        %1285 = vmatprep.subr.bf16.mxu0 0
        %1286 = vmatpush1.bf16.msra.mxu0 0
        %1287 = vmatprep.subr.bf16.mxu0 0
        %1288 = vmatpush1.bf16.msra.mxu0 0
        %1289 = vmatprep.subr.bf16.mxu0 %v1277
        %1290 = vmatpush1.bf16.msra.mxu0 %v1274
        %1291 = vmatprep.subr.bf16.mxu0 %v1240
        %1292 = vmatpush1.bf16.msra.mxu0 %v1239
        %1293 = vmatprep.subr.bf16.mxu0 %v1238
        %1294 = vmatpush1.bf16.msra.mxu0 %v1237
        %1295 = vmatprep.subr.bf16.mxu0 0
        %1296 = vmatpush2.bf16.msra.mxu0 0
        %1297 = vmatprep.subr.bf16.mxu0 0
        %1298 = vmatpush2.bf16.msra.mxu0 0
        %1299 = vmatprep.subr.bf16.mxu0 0
        %1300 = vmatpush2.bf16.msra.mxu0 0
        %1301 = vmatprep.subr.bf16.mxu0 0
        %1302 = vmatpush2.bf16.msra.mxu0 0
        %1303 = vmatprep.subr.bf16.mxu0 0
        %1304 = vmatpush2.bf16.msra.mxu0 0
        %1305 = vmatprep.subr.bf16.mxu0 0
        %1306 = vmatpush2.bf16.msra.mxu0 0
        %1307 = vmatprep.subr.bf16.mxu0 0
        %1308 = vmatpush2.bf16.msra.mxu0 0
        %1309 = vmatprep.subr.bf16.mxu0 0
        %1310 = vmatpush2.bf16.msra.mxu0 0
        %1311 = vmatprep.mubr.bf16.mxu0 0
        %1312 = vmatmul.mubr.bf16.gmra.mxu0 %v1268
        %v1313 = vpop.f32.mrf.mxu0
        %v1314 = vadd.f32 %v1246, %v1313
        %v1315 = vpop.f32.mrf.mxu0
        %v1316 = vadd.f32 %v1246, %v1315
        %v1317 = vpop.f32.mrf.mxu0
        %v1318 = vadd.f32 %v1251, %v1317
        %v1319 = vpop.f32.mrf.mxu0
        %v1320 = vadd.f32 %v1251, %v1319
        %1321 = vmatprep.mubr.bf16.mxu0 0
        %1322 = vmatmul.mubr.bf16.gmra.mxu0 %v1271
        %v1323 = vpop.f32.mrf.mxu0
        %v1324 = vadd.f32 %v1256, %v1323
        %v1325 = vpop.f32.mrf.mxu0
        %v1326 = vadd.f32 %v1256, %v1325
        %v1327 = vpop.f32.mrf.mxu0
        %v1328 = vpop.f32.mrf.mxu0
        %1329 = vdwg.mxu0
        %v1330 = vand.u32 2147483647, %v1314
        %v1331 = vand.u32 2147483647, %v1316
        %v1332 = vand.u32 2147483647, %v1318
        %v1333 = vand.u32 2147483647, %v1320
        %v1334 = vand.u32 2147483647, %v1324
        %v1335 = vand.u32 2147483647, %v1326
        %v1336 = vsub.f32 0.0, %v1330
        %v1337 = vsub.f32 0.0, %v1331
        %v1338 = vsub.f32 0.0, %v1332
        %v1339 = vsub.f32 0.0, %v1333
        %v1340 = vsub.f32 0.0, %v1334
        %v1341 = vsub.f32 0.0, %v1335
        %v1342 = vmul.f32 %v1336, 1.442695
        %v1343 = vpow.pop %v1342
        %v1344 = vmul.f32 %v1337, 1.442695
        %v1345 = vpow.pop %v1344
        %v1346 = vmul.f32 %v1338, 1.442695
        %v1347 = vpow.pop %v1346
        %v1348 = vmul.f32 %v1339, 1.442695
        %v1349 = vpow.pop %v1348
        %v1350 = vmul.f32 %v1340, 1.442695
        %v1351 = vpow.pop %v1350
        %v1352 = vmul.f32 %v1341, 1.442695
        %v1353 = vpow.pop %v1352
        %v1354 = vsub.f32 %v1343, 1.0
        %v1355 = vsub.f32 %v1345, 1.0
        %v1356 = vsub.f32 %v1347, 1.0
        %v1357 = vsub.f32 %v1349, 1.0
        %v1358 = vsub.f32 %v1351, 1.0
        %v1359 = vsub.f32 %v1353, 1.0
        %vm1360 = vcmp.gt.f32.partialorder %v1314, 0.0
        %vm1361 = vcmp.gt.f32.partialorder %v1316, 0.0
        %vm1362 = vcmp.gt.f32.partialorder %v1318, 0.0
        %vm1363 = vcmp.gt.f32.partialorder %v1320, 0.0
        %vm1364 = vcmp.gt.f32.partialorder %v1324, 0.0
        %vm1365 = vcmp.gt.f32.partialorder %v1326, 0.0
        %v1366 = vsel %vm1360, %v1314, %v1354
        %v1367 = vsel %vm1361, %v1316, %v1355
        %v1368 = vsel %vm1362, %v1318, %v1356
        %v1369 = vsel %vm1363, %v1320, %v1357
        %v1370 = vsel %vm1364, %v1324, %v1358
        %v1371 = vsel %vm1365, %v1326, %v1359
        %v1372 = vsub.f32 0.0, %v1314
        %v1373 = vsub.f32 0.0, %v1316
        %v1374 = vsub.f32 0.0, %v1318
        %v1375 = vsub.f32 0.0, %v1320
        %v1376 = vsub.f32 0.0, %v1324
        %v1377 = vsub.f32 0.0, %v1326
        %v1378 = vsel %vm1360, %v1354, %v1372
        %v1379 = vsel %vm1361, %v1355, %v1373
        %v1380 = vsel %vm1362, %v1356, %v1374
        %v1381 = vsel %vm1363, %v1357, %v1375
        %v1382 = vsel %vm1364, %v1358, %v1376
        %v1383 = vsel %vm1365, %v1359, %v1377
        %v1390 = vrot.slane %v1378, 6
        %v1391 = vrot.slane %v1379, 6
        %v1392 = vrot.slane %v1380, 6
        %v1393 = vsel %vm1218, %v1390, %v1392
        %v1394 = vrot.slane %v1381, 6
        %v1395 = vsel %vm1218, %v1391, %v1394
        %v1396 = vrot.slane %v1382, 6
        %v1397 = vsel %vm1218, %v1392, %v1396
        %v1398 = vrot.slane %v1383, 6
        %v1399 = vsel %vm1218, %v1394, %v1398
        %v1406 = vsel %vm1218, %v1370, %v1390
        %v1407 = vsel %vm1218, %v1371, %v1391
        %v1408 = vpack.c.bf16 %v1368, %v1366
        %v1409 = vpack.c.bf16 %v1369, %v1367
        %v1410 = vpack.c.bf16 %v1393, %v1406
        %v1411 = vpack.c.bf16 %v1395, %v1407
        %v1412 = vpack.c.bf16 %v1397, %v1397
        %v1413 = vpack.c.bf16 %v1399, %v1399
        %1415 = vset.pattern.permute.xlu0 0
        %1416 = vperm.xlu0 %1415, %v1172
        %v1417 = vpop.permute.xlu0 %1416
        %1419 = vset.pattern.permute.xlu0 0
        %1420 = vperm.xlu0 %1419, %v1173
        %v1421 = vpop.permute.xlu0 %1420
        %1423 = vset.pattern.permute.xlu0 0
        %1424 = vperm.xlu0 %1423, %v1174
        %v1425 = vpop.permute.xlu0 %1424
        %1427 = vset.pattern.permute.xlu0 0
        %1428 = vperm.xlu0 %1427, %v1175
        %v1429 = vpop.permute.xlu0 %1428
        %v1434 = vunpack.c.l.b16 %v1165
        %v1435 = vunpack.c.l.b16 %v1166
        %v1436 = vunpack.c.l.b16 %v1167
        %v1437 = vunpack.c.l.b16 %v1168
        %v1438 = vpack.c.b16 %v1434, %v1263
        %v1439 = vpack.c.b16 %v1436, %v1435
        %v1440 = vpack.c.b16 %v1437, %v1437
        %vm1441 = vcmask 1046528
        %v1442 = vrot.slane %v1438, 1
        %v1443 = vrot.slane %v1439, 1
        %v1444 = vsel %vm1441, %v1442, %v1443
        %v1445 = vrot.slane %v1440, 1
        %v1446 = vsel %vm1441, %v1443, %v1445
        %vm1447 = vcmask 1045504
        %v1448 = vrot.slane %v1256, 2
        %v1449 = vrot.slane %v1417, 2
        %v1450 = vsel %vm1447, %v1448, %v1449
        %v1451 = vrot.slane %v1421, 2
        %v1452 = vsel %vm1447, %v1449, %v1451
        %v1453 = vrot.slane %v1425, 2
        %v1454 = vsel %vm1447, %v1451, %v1453
        %v1455 = vrot.slane %v1429, 2
        %v1456 = vsel %vm1447, %v1453, %v1455
        %v1463 = vsel %vm1266, %v1444, 0
        %v1466 = vsel %vm1266, %v1446, 0
        %v1469 = vsel %vm1266, %v1445, 0
        %v1472 = vsel %vm1218, %v1412, 0
        %v1475 = vsel %vm1218, %v1413, 0
        %1477 = vmatprep.subr.bf16.mxu0 0
        %1478 = vmatpush1.bf16.msra.mxu0 0
        %1479 = vmatprep.subr.bf16.mxu0 0
        %1480 = vmatpush1.bf16.msra.mxu0 0
        %1481 = vmatprep.subr.bf16.mxu0 0
        %1482 = vmatpush1.bf16.msra.mxu0 0
        %1483 = vmatprep.subr.bf16.mxu0 0
        %1484 = vmatpush1.bf16.msra.mxu0 0
        %1485 = vmatprep.subr.bf16.mxu0 0
        %1486 = vmatpush1.bf16.msra.mxu0 0
        %1487 = vmatprep.subr.bf16.mxu0 %v1475
        %1488 = vmatpush1.bf16.msra.mxu0 %v1472
        %1489 = vmatprep.subr.bf16.mxu0 %v1411
        %1490 = vmatpush1.bf16.msra.mxu0 %v1410
        %1491 = vmatprep.subr.bf16.mxu0 %v1409
        %1492 = vmatpush1.bf16.msra.mxu0 %v1408
        %1493 = vmatprep.subr.bf16.mxu0 0
        %1494 = vmatpush2.bf16.msra.mxu0 0
        %1495 = vmatprep.subr.bf16.mxu0 0
        %1496 = vmatpush2.bf16.msra.mxu0 0
        %1497 = vmatprep.subr.bf16.mxu0 0
        %1498 = vmatpush2.bf16.msra.mxu0 0
        %1499 = vmatprep.subr.bf16.mxu0 0
        %1500 = vmatpush2.bf16.msra.mxu0 0
        %1501 = vmatprep.subr.bf16.mxu0 0
        %1502 = vmatpush2.bf16.msra.mxu0 0
        %1503 = vmatprep.subr.bf16.mxu0 0
        %1504 = vmatpush2.bf16.msra.mxu0 0
        %1505 = vmatprep.subr.bf16.mxu0 0
        %1506 = vmatpush2.bf16.msra.mxu0 0
        %1507 = vmatprep.subr.bf16.mxu0 0
        %1508 = vmatpush2.bf16.msra.mxu0 0
        %1509 = vmatprep.mubr.bf16.mxu0 0
        %1510 = vmatmul.mubr.bf16.gmra.mxu0 %v1463
        %v1511 = vpop.f32.mrf.mxu0
        %v1512 = vadd.f32 %v1450, %v1511
        %v1513 = vpop.f32.mrf.mxu0
        %v1514 = vadd.f32 %v1450, %v1513
        %v1515 = vpop.f32.mrf.mxu0
        %v1516 = vadd.f32 %v1452, %v1515
        %v1517 = vpop.f32.mrf.mxu0
        %v1518 = vadd.f32 %v1452, %v1517
        %1519 = vmatprep.mubr.bf16.mxu0 0
        %1520 = vmatmul.mubr.bf16.gmra.mxu0 %v1466
        %v1521 = vpop.f32.mrf.mxu0
        %v1522 = vadd.f32 %v1454, %v1521
        %v1523 = vpop.f32.mrf.mxu0
        %v1524 = vadd.f32 %v1454, %v1523
        %v1525 = vpop.f32.mrf.mxu0
        %v1526 = vadd.f32 %v1456, %v1525
        %v1527 = vpop.f32.mrf.mxu0
        %v1528 = vadd.f32 %v1456, %v1527
        %1529 = vmatprep.mubr.bf16.mxu0 0
        %1530 = vmatmul.mubr.bf16.gmra.mxu0 %v1469
        %v1531 = vpop.f32.mrf.mxu0
        %v1532 = vadd.f32 %v1455, %v1531
        %v1533 = vpop.f32.mrf.mxu0
        %v1534 = vadd.f32 %v1455, %v1533
        %v1535 = vpop.f32.mrf.mxu0
        %v1536 = vpop.f32.mrf.mxu0
        %1537 = vdwg.mxu0
        %v1538 = vxor.u32 %v1522, 2147483648
        %v1539 = vxor.u32 %v1524, 2147483648
        %v1540 = vxor.u32 %v1526, 2147483648
        %v1541 = vxor.u32 %v1528, 2147483648
        %v1542 = vxor.u32 %v1532, 2147483648
        %v1543 = vxor.u32 %v1534, 2147483648
        %v1544 = vmul.f32 %v1538, 1.442695
        %v1545 = vpow.pop %v1544
        %v1546 = vmul.f32 %v1539, 1.442695
        %v1547 = vpow.pop %v1546
        %v1548 = vmul.f32 %v1540, 1.442695
        %v1549 = vpow.pop %v1548
        %v1550 = vmul.f32 %v1541, 1.442695
        %v1551 = vpow.pop %v1550
        %v1552 = vmul.f32 %v1542, 1.442695
        %v1553 = vpow.pop %v1552
        %v1554 = vmul.f32 %v1543, 1.442695
        %v1555 = vpow.pop %v1554
        %v1556 = vadd.f32 %v1545, 1.0
        %v1557 = vadd.f32 %v1547, 1.0
        %v1558 = vadd.f32 %v1549, 1.0
        %v1559 = vadd.f32 %v1551, 1.0
        %v1560 = vadd.f32 %v1553, 1.0
        %v1561 = vadd.f32 %v1555, 1.0
        %v1562 = vrcp.pop %v1556
        %v1563 = vmul.f32 1.0, %v1562
        %v1564 = vrcp.pop %v1557
        %v1565 = vmul.f32 1.0, %v1564
        %v1566 = vrcp.pop %v1558
        %v1567 = vmul.f32 1.0, %v1566
        %v1568 = vrcp.pop %v1559
        %v1569 = vmul.f32 1.0, %v1568
        %v1570 = vrcp.pop %v1560
        %v1571 = vmul.f32 1.0, %v1570
        %v1572 = vrcp.pop %v1561
        %v1573 = vmul.f32 1.0, %v1572
        %v1580 = vrot.slane %v1563, 2
        %v1581 = vrot.slane %v1567, 2
        %v1582 = vsel %vm1447, %v1580, %v1581
        %v1583 = vrot.slane %v1565, 2
        %v1584 = vrot.slane %v1569, 2
        %v1585 = vsel %vm1447, %v1583, %v1584
        %v1586 = vrot.slane %v1571, 2
        %v1587 = vsel %vm1447, %v1581, %v1586
        %v1588 = vrot.slane %v1573, 2
        %v1589 = vsel %vm1447, %v1584, %v1588
        %v1596 = vmul.f32 %v1512, %v1582
        %v1597 = vmul.f32 %v1514, %v1585
        %v1598 = vmul.f32 %v1516, %v1587
        %v1599 = vmul.f32 %v1518, %v1589
        %v1600 = vmul.f32 %v1522, %v1586
        %v1601 = vmul.f32 %v1524, %v1588
        %v1602 = vadd.f32 %v541, %v1596
        %v1603 = vadd.f32 %v542, %v1597
        %v1604 = vadd.f32 %v1149, %v1598
        %v1605 = vadd.f32 %v1150, %v1599
        %v1606 = vadd.f32 %v1158, %v1600
        %v1607 = vadd.f32 %v1159, %v1601
        %v1608 = vld [vmem:[%s6] sm:$0xf]
        %v1609 = vld [vmem:[%s6 + $0x4] sm:$0xf]
        %v1610 = vld [vmem:[%s6 + $0x8] sm:$0xf]
        %v1611 = vld [vmem:[%s6 + $0xc] sm:$0xf]
        %v1612 = vld [vmem:[%s7] sm:$0xff]
        %v1613 = vld [vmem:[%s7 + $0x8] sm:$0xff]
        %v1614 = vld [vmem:[%s7 + $0x10] sm:$0xff]
        %v1615 = vld [vmem:[%s7 + $0x18] sm:$0xff]
        %v1616 = vpack.c.bf16 %v1604, %v1602
        %v1617 = vpack.c.bf16 %v1605, %v1603
        %v1618 = vpack.c.bf16 %v1606, %v1606
        %v1619 = vpack.c.bf16 %v1607, %v1607
        %1621 = vset.pattern.permute.xlu0 0
        %1622 = vperm.xlu0 %1621, %v1612
        %v1623 = vpop.permute.xlu0 %1622
        %1626 = vset.pattern.permute.xlu0 0
        %1627 = vperm.xlu0 %1626, %v1613
        %v1628 = vpop.permute.xlu0 %1627
        %1631 = vset.pattern.permute.xlu0 0
        %1632 = vperm.xlu0 %1631, %v1614
        %v1633 = vpop.permute.xlu0 %1632
        %1636 = vset.pattern.permute.xlu0 0
        %1637 = vperm.xlu0 %1636, %v1615
        %v1638 = vpop.permute.xlu0 %1637
        %v1644 = vunpack.c.l.b16 %v1608
        %v1645 = vunpack.c.l.b16 %v1609
        %v1646 = vunpack.c.l.b16 %v1610
        %v1647 = vunpack.c.l.b16 %v1611
        %v1648 = vpack.c.b16 %v1645, %v1644
        %v1649 = vpack.c.b16 %v1647, %v1646
        %vm1650 = vcmask 146432
        %v1652 = vsel %vm1650, %v1648, 0
        %v1655 = vsel %vm1650, %v1649, 0
        %vm1657 = vcmask 1040384
        %v1659 = vsel %vm1657, %v1618, 0
        %v1662 = vsel %vm1657, %v1619, 0
        %1664 = vmatprep.subr.bf16.mxu0 0
        %1665 = vmatpush1.bf16.msra.mxu0 0
        %1666 = vmatprep.subr.bf16.mxu0 0
        %1667 = vmatpush1.bf16.msra.mxu0 0
        %1668 = vmatprep.subr.bf16.mxu0 0
        %1669 = vmatpush1.bf16.msra.mxu0 0
        %1670 = vmatprep.subr.bf16.mxu0 0
        %1671 = vmatpush1.bf16.msra.mxu0 0
        %1672 = vmatprep.subr.bf16.mxu0 0
        %1673 = vmatpush1.bf16.msra.mxu0 0
        %1674 = vmatprep.subr.bf16.mxu0 0
        %1675 = vmatpush1.bf16.msra.mxu0 0
        %1676 = vmatprep.subr.bf16.mxu0 %v1662
        %1677 = vmatpush1.bf16.msra.mxu0 %v1659
        %1678 = vmatprep.subr.bf16.mxu0 %v1617
        %1679 = vmatpush1.bf16.msra.mxu0 %v1616
        %1680 = vmatprep.subr.bf16.mxu0 0
        %1681 = vmatpush2.bf16.msra.mxu0 0
        %1682 = vmatprep.subr.bf16.mxu0 0
        %1683 = vmatpush2.bf16.msra.mxu0 0
        %1684 = vmatprep.subr.bf16.mxu0 0
        %1685 = vmatpush2.bf16.msra.mxu0 0
        %1686 = vmatprep.subr.bf16.mxu0 0
        %1687 = vmatpush2.bf16.msra.mxu0 0
        %1688 = vmatprep.subr.bf16.mxu0 0
        %1689 = vmatpush2.bf16.msra.mxu0 0
        %1690 = vmatprep.subr.bf16.mxu0 0
        %1691 = vmatpush2.bf16.msra.mxu0 0
        %1692 = vmatprep.subr.bf16.mxu0 0
        %1693 = vmatpush2.bf16.msra.mxu0 0
        %1694 = vmatprep.subr.bf16.mxu0 0
        %1695 = vmatpush2.bf16.msra.mxu0 0
        %1696 = vmatprep.mubr.bf16.mxu0 0
        %1697 = vmatmul.mubr.bf16.gmra.mxu0 %v1652
        %v1698 = vpop.f32.mrf.mxu0
        %v1699 = vadd.f32 %v1623, %v1698
        %v1700 = vpop.f32.mrf.mxu0
        %v1701 = vadd.f32 %v1623, %v1700
        %v1702 = vpop.f32.mrf.mxu0
        %v1703 = vadd.f32 %v1628, %v1702
        %v1704 = vpop.f32.mrf.mxu0
        %v1705 = vadd.f32 %v1628, %v1704
        %1706 = vmatprep.mubr.bf16.mxu0 0
        %1707 = vmatmul.mubr.bf16.gmra.mxu0 %v1655
        %v1708 = vpop.f32.mrf.mxu0
        %v1709 = vadd.f32 %v1633, %v1708
        %v1710 = vpop.f32.mrf.mxu0
        %v1711 = vadd.f32 %v1633, %v1710
        %v1712 = vpop.f32.mrf.mxu0
        %v1713 = vadd.f32 %v1638, %v1712
        %v1714 = vpop.f32.mrf.mxu0
        %v1715 = vadd.f32 %v1638, %v1714
        %1716 = vdwg.mxu0
        %v1717 = vld [vmem:[%s8] sm:$0xf]
        %v1718 = vld [vmem:[%s8 + $0x4] sm:$0xf]
        %v1719 = vld [vmem:[%s8 + $0x8] sm:$0xf]
        %v1720 = vld [vmem:[%s8 + $0xc] sm:$0x7]
        %v1721 = vld [vmem:[%s9] sm:$0xff]
        %v1722 = vld [vmem:[%s9 + $0x8] sm:$0xff]
        %v1723 = vld [vmem:[%s9 + $0x10] sm:$0xff]
        %v1724 = vld [vmem:[%s9 + $0x18] sm:$0x3f]
        %v1727 = vsel %vm1218, %v1202, %v1221
        %v1728 = vsel %vm1218, %v1203, %v1223
        %v1729 = vpack.c.bf16 %v1727, %v1200
        %v1730 = vpack.c.bf16 %v1728, %v1201
        %1732 = vset.pattern.permute.xlu0 0
        %1733 = vperm.xlu0 %1732, %v1721
        %v1734 = vpop.permute.xlu0 %1733
        %1737 = vset.pattern.permute.xlu0 0
        %1738 = vperm.xlu0 %1737, %v1722
        %v1739 = vpop.permute.xlu0 %1738
        %v1743 = vunpack.c.l.b16 %v1717
        %v1744 = vunpack.c.l.b16 %v1718
        %v1745 = vpack.c.b16 %v1744, %v1743
        %vm1746 = vcmask 162816
        %v1748 = vsel %vm1746, %v1745, 0
        %1750 = vmatprep.subr.bf16.mxu0 0
        %1751 = vmatpush1.bf16.msra.mxu0 0
        %1752 = vmatprep.subr.bf16.mxu0 0
        %1753 = vmatpush1.bf16.msra.mxu0 0
        %1754 = vmatprep.subr.bf16.mxu0 0
        %1755 = vmatpush1.bf16.msra.mxu0 0
        %1756 = vmatprep.subr.bf16.mxu0 0
        %1757 = vmatpush1.bf16.msra.mxu0 0
        %1758 = vmatprep.subr.bf16.mxu0 0
        %1759 = vmatpush1.bf16.msra.mxu0 0
        %1760 = vmatprep.subr.bf16.mxu0 0
        %1761 = vmatpush1.bf16.msra.mxu0 0
        %1762 = vmatprep.subr.bf16.mxu0 %v1277
        %1763 = vmatpush1.bf16.msra.mxu0 %v1274
        %1764 = vmatprep.subr.bf16.mxu0 %v1730
        %1765 = vmatpush1.bf16.msra.mxu0 %v1729
        %1766 = vmatprep.subr.bf16.mxu0 0
        %1767 = vmatpush2.bf16.msra.mxu0 0
        %1768 = vmatprep.subr.bf16.mxu0 0
        %1769 = vmatpush2.bf16.msra.mxu0 0
        %1770 = vmatprep.subr.bf16.mxu0 0
        %1771 = vmatpush2.bf16.msra.mxu0 0
        %1772 = vmatprep.subr.bf16.mxu0 0
        %1773 = vmatpush2.bf16.msra.mxu0 0
        %1774 = vmatprep.subr.bf16.mxu0 0
        %1775 = vmatpush2.bf16.msra.mxu0 0
        %1776 = vmatprep.subr.bf16.mxu0 0
        %1777 = vmatpush2.bf16.msra.mxu0 0
        %1778 = vmatprep.subr.bf16.mxu0 0
        %1779 = vmatpush2.bf16.msra.mxu0 0
        %1780 = vmatprep.subr.bf16.mxu0 0
        %1781 = vmatpush2.bf16.msra.mxu0 0
        %1782 = vmatprep.mubr.bf16.mxu0 0
        %1783 = vmatmul.mubr.bf16.gmra.mxu0 %v1748
        %v1784 = vpop.f32.mrf.mxu0
        %v1785 = vadd.f32 %v1734, %v1784
        %v1786 = vpop.f32.mrf.mxu0
        %v1787 = vadd.f32 %v1734, %v1786
        %v1788 = vpop.f32.mrf.mxu0
        %v1789 = vadd.f32 %v1739, %v1788
        %v1790 = vpop.f32.mrf.mxu0
        %v1791 = vadd.f32 %v1739, %v1790
        %1792 = vdwg.mxu0
        %v1793 = vand.u32 2147483647, %v1785
        %v1794 = vand.u32 2147483647, %v1787
        %v1795 = vand.u32 2147483647, %v1789
        %v1796 = vand.u32 2147483647, %v1791
        %v1797 = vsub.f32 0.0, %v1793
        %v1798 = vsub.f32 0.0, %v1794
        %v1799 = vsub.f32 0.0, %v1795
        %v1800 = vsub.f32 0.0, %v1796
        %v1801 = vmul.f32 %v1797, 1.442695
        %v1802 = vpow.pop %v1801
        %v1803 = vmul.f32 %v1798, 1.442695
        %v1804 = vpow.pop %v1803
        %v1805 = vmul.f32 %v1799, 1.442695
        %v1806 = vpow.pop %v1805
        %v1807 = vmul.f32 %v1800, 1.442695
        %v1808 = vpow.pop %v1807
        %v1809 = vsub.f32 %v1802, 1.0
        %v1810 = vsub.f32 %v1804, 1.0
        %v1811 = vsub.f32 %v1806, 1.0
        %v1812 = vsub.f32 %v1808, 1.0
        %vm1813 = vcmp.gt.f32.partialorder %v1785, 0.0
        %vm1814 = vcmp.gt.f32.partialorder %v1787, 0.0
        %vm1815 = vcmp.gt.f32.partialorder %v1789, 0.0
        %vm1816 = vcmp.gt.f32.partialorder %v1791, 0.0
        %v1817 = vsel %vm1813, %v1785, %v1809
        %v1818 = vsel %vm1814, %v1787, %v1810
        %v1819 = vsel %vm1815, %v1789, %v1811
        %v1820 = vsel %vm1816, %v1791, %v1812
        %v1821 = vsub.f32 0.0, %v1785
        %v1822 = vsub.f32 0.0, %v1787
        %v1823 = vsub.f32 0.0, %v1789
        %v1824 = vsub.f32 0.0, %v1791
        %v1825 = vsel %vm1813, %v1809, %v1821
        %v1826 = vsel %vm1814, %v1810, %v1822
        %v1827 = vsel %vm1815, %v1811, %v1823
        %v1828 = vsel %vm1816, %v1812, %v1824
        %v1833 = vrot.slane %v1825, 6
        %v1834 = vrot.slane %v1826, 6
        %v1835 = vrot.slane %v1827, 6
        %v1836 = vsel %vm1218, %v1833, %v1835
        %v1837 = vrot.slane %v1828, 6
        %v1838 = vsel %vm1218, %v1834, %v1837
        %v1843 = vsel %vm1218, %v1819, %v1833
        %v1844 = vsel %vm1218, %v1820, %v1834
        %v1845 = vpack.c.bf16 %v1843, %v1817
        %v1846 = vpack.c.bf16 %v1844, %v1818
        %v1847 = vpack.c.bf16 %v1836, %v1836
        %v1848 = vpack.c.bf16 %v1838, %v1838
        %1850 = vset.pattern.permute.xlu0 0
        %1851 = vperm.xlu0 %1850, %v1723
        %v1852 = vpop.permute.xlu0 %1851
        %1854 = vset.pattern.permute.xlu0 0
        %1855 = vperm.xlu0 %1854, %v1724
        %v1856 = vpop.permute.xlu0 %1855
        %v1859 = vunpack.c.l.b16 %v1719
        %v1860 = vunpack.c.l.b16 %v1720
        %v1861 = vpack.c.b16 %v1859, %v1744
        %v1862 = vpack.c.b16 %v1860, %v1860
        %v1863 = vrot.slane %v1861, 1
        %v1864 = vrot.slane %v1862, 1
        %v1865 = vsel %vm1441, %v1863, %v1864
        %v1866 = vrot.slane %v1739, 2
        %v1867 = vrot.slane %v1852, 2
        %v1868 = vsel %vm1447, %v1866, %v1867
        %v1869 = vrot.slane %v1856, 2
        %v1870 = vsel %vm1447, %v1867, %v1869
        %v1875 = vsel %vm1746, %v1865, 0
        %v1878 = vsel %vm1746, %v1864, 0
        %v1881 = vsel %vm1218, %v1847, 0
        %v1884 = vsel %vm1218, %v1848, 0
        %1886 = vmatprep.subr.bf16.mxu0 0
        %1887 = vmatpush1.bf16.msra.mxu0 0
        %1888 = vmatprep.subr.bf16.mxu0 0
        %1889 = vmatpush1.bf16.msra.mxu0 0
        %1890 = vmatprep.subr.bf16.mxu0 0
        %1891 = vmatpush1.bf16.msra.mxu0 0
        %1892 = vmatprep.subr.bf16.mxu0 0
        %1893 = vmatpush1.bf16.msra.mxu0 0
        %1894 = vmatprep.subr.bf16.mxu0 0
        %1895 = vmatpush1.bf16.msra.mxu0 0
        %1896 = vmatprep.subr.bf16.mxu0 0
        %1897 = vmatpush1.bf16.msra.mxu0 0
        %1898 = vmatprep.subr.bf16.mxu0 %v1884
        %1899 = vmatpush1.bf16.msra.mxu0 %v1881
        %1900 = vmatprep.subr.bf16.mxu0 %v1846
        %1901 = vmatpush1.bf16.msra.mxu0 %v1845
        %1902 = vmatprep.subr.bf16.mxu0 0
        %1903 = vmatpush2.bf16.msra.mxu0 0
        %1904 = vmatprep.subr.bf16.mxu0 0
        %1905 = vmatpush2.bf16.msra.mxu0 0
        %1906 = vmatprep.subr.bf16.mxu0 0
        %1907 = vmatpush2.bf16.msra.mxu0 0
        %1908 = vmatprep.subr.bf16.mxu0 0
        %1909 = vmatpush2.bf16.msra.mxu0 0
        %1910 = vmatprep.subr.bf16.mxu0 0
        %1911 = vmatpush2.bf16.msra.mxu0 0
        %1912 = vmatprep.subr.bf16.mxu0 0
        %1913 = vmatpush2.bf16.msra.mxu0 0
        %1914 = vmatprep.subr.bf16.mxu0 0
        %1915 = vmatpush2.bf16.msra.mxu0 0
        %1916 = vmatprep.subr.bf16.mxu0 0
        %1917 = vmatpush2.bf16.msra.mxu0 0
        %1918 = vmatprep.mubr.bf16.mxu0 0
        %1919 = vmatmul.mubr.bf16.gmra.mxu0 %v1875
        %v1920 = vpop.f32.mrf.mxu0
        %v1921 = vadd.f32 %v1868, %v1920
        %v1922 = vpop.f32.mrf.mxu0
        %v1923 = vadd.f32 %v1868, %v1922
        %v1924 = vpop.f32.mrf.mxu0
        %v1925 = vadd.f32 %v1870, %v1924
        %v1926 = vpop.f32.mrf.mxu0
        %v1927 = vadd.f32 %v1870, %v1926
        %1928 = vmatprep.mubr.bf16.mxu0 0
        %1929 = vmatmul.mubr.bf16.gmra.mxu0 %v1878
        %v1930 = vpop.f32.mrf.mxu0
        %v1931 = vadd.f32 %v1869, %v1930
        %v1932 = vpop.f32.mrf.mxu0
        %v1933 = vadd.f32 %v1869, %v1932
        %v1934 = vpop.f32.mrf.mxu0
        %v1935 = vpop.f32.mrf.mxu0
        %1936 = vdwg.mxu0
        %v1937 = vxor.u32 %v1925, 2147483648
        %v1938 = vxor.u32 %v1927, 2147483648
        %v1939 = vxor.u32 %v1931, 2147483648
        %v1940 = vxor.u32 %v1933, 2147483648
        %v1941 = vmul.f32 %v1937, 1.442695
        %v1942 = vpow.pop %v1941
        %v1943 = vmul.f32 %v1938, 1.442695
        %v1944 = vpow.pop %v1943
        %v1945 = vmul.f32 %v1939, 1.442695
        %v1946 = vpow.pop %v1945
        %v1947 = vmul.f32 %v1940, 1.442695
        %v1948 = vpow.pop %v1947
        %v1949 = vadd.f32 %v1942, 1.0
        %v1950 = vadd.f32 %v1944, 1.0
        %v1951 = vadd.f32 %v1946, 1.0
        %v1952 = vadd.f32 %v1948, 1.0
        %v1953 = vrcp.pop %v1949
        %v1954 = vmul.f32 1.0, %v1953
        %v1955 = vrcp.pop %v1950
        %v1956 = vmul.f32 1.0, %v1955
        %v1957 = vrcp.pop %v1951
        %v1958 = vmul.f32 1.0, %v1957
        %v1959 = vrcp.pop %v1952
        %v1960 = vmul.f32 1.0, %v1959
        %v1965 = vrot.slane %v1954, 2
        %v1966 = vrot.slane %v1958, 2
        %v1967 = vsel %vm1447, %v1965, %v1966
        %v1968 = vrot.slane %v1956, 2
        %v1969 = vrot.slane %v1960, 2
        %v1970 = vsel %vm1447, %v1968, %v1969
        %v1975 = vmul.f32 %v1921, %v1967
        %v1976 = vmul.f32 %v1923, %v1970
        %v1977 = vmul.f32 %v1925, %v1966
        %v1978 = vmul.f32 %v1927, %v1969
        %v1979 = vadd.f32 %v1149, %v1975
        %v1980 = vadd.f32 %v1150, %v1976
        %v1981 = vadd.f32 %v1158, %v1977
        %v1982 = vadd.f32 %v1159, %v1978
        %v1983 = vld [vmem:[%s10] sm:$0xf]
        %v1984 = vld [vmem:[%s10 + $0x4] sm:$0xf]
        %v1985 = vld [vmem:[%s11] sm:$0xff]
        %v1986 = vld [vmem:[%s11 + $0x8] sm:$0xff]
        %v1987 = vpack.c.bf16 %v1981, %v1979
        %v1988 = vpack.c.bf16 %v1982, %v1980
        %1990 = vset.pattern.permute.xlu0 0
        %1991 = vperm.xlu0 %1990, %v1985
        %v1992 = vpop.permute.xlu0 %1991
        %1995 = vset.pattern.permute.xlu0 0
        %1996 = vperm.xlu0 %1995, %v1986
        %v1997 = vpop.permute.xlu0 %1996
        %v2001 = vunpack.c.l.b16 %v1983
        %v2002 = vunpack.c.l.b16 %v1984
        %v2003 = vpack.c.b16 %v2002, %v2001
        %vm2004 = vcmask 80896
        %v2006 = vsel %vm2004, %v2003, 0
        %vm2008 = vcmask 1044480
        %v2010 = vsel %vm2008, %v1987, 0
        %v2013 = vsel %vm2008, %v1988, 0
        %2015 = vmatprep.subr.bf16.mxu0 0
        %2016 = vmatpush1.bf16.msra.mxu0 0
        %2017 = vmatprep.subr.bf16.mxu0 0
        %2018 = vmatpush1.bf16.msra.mxu0 0
        %2019 = vmatprep.subr.bf16.mxu0 0
        %2020 = vmatpush1.bf16.msra.mxu0 0
        %2021 = vmatprep.subr.bf16.mxu0 0
        %2022 = vmatpush1.bf16.msra.mxu0 0
        %2023 = vmatprep.subr.bf16.mxu0 0
        %2024 = vmatpush1.bf16.msra.mxu0 0
        %2025 = vmatprep.subr.bf16.mxu0 0
        %2026 = vmatpush1.bf16.msra.mxu0 0
        %2027 = vmatprep.subr.bf16.mxu0 0
        %2028 = vmatpush1.bf16.msra.mxu0 0
        %2029 = vmatprep.subr.bf16.mxu0 %v2013
        %2030 = vmatpush1.bf16.msra.mxu0 %v2010
        %2031 = vmatprep.subr.bf16.mxu0 0
        %2032 = vmatpush2.bf16.msra.mxu0 0
        %2033 = vmatprep.subr.bf16.mxu0 0
        %2034 = vmatpush2.bf16.msra.mxu0 0
        %2035 = vmatprep.subr.bf16.mxu0 0
        %2036 = vmatpush2.bf16.msra.mxu0 0
        %2037 = vmatprep.subr.bf16.mxu0 0
        %2038 = vmatpush2.bf16.msra.mxu0 0
        %2039 = vmatprep.subr.bf16.mxu0 0
        %2040 = vmatpush2.bf16.msra.mxu0 0
        %2041 = vmatprep.subr.bf16.mxu0 0
        %2042 = vmatpush2.bf16.msra.mxu0 0
        %2043 = vmatprep.subr.bf16.mxu0 0
        %2044 = vmatpush2.bf16.msra.mxu0 0
        %2045 = vmatprep.subr.bf16.mxu0 0
        %2046 = vmatpush2.bf16.msra.mxu0 0
        %2047 = vmatprep.mubr.bf16.mxu0 0
        %2048 = vmatmul.mubr.bf16.gmra.mxu0 %v2006
        %v2049 = vpop.f32.mrf.mxu0
        %v2050 = vadd.f32 %v1992, %v2049
        %v2051 = vpop.f32.mrf.mxu0
        %v2052 = vadd.f32 %v1992, %v2051
        %v2053 = vpop.f32.mrf.mxu0
        %v2054 = vadd.f32 %v1997, %v2053
        %v2055 = vpop.f32.mrf.mxu0
        %v2056 = vadd.f32 %v1997, %v2055
        %2057 = vdwg.mxu0
        %v2058 = vlaneseq
        %v2059 = vshrl.u32 %v2058, 7
        %v2060 = vadd.s32 %v2059, 8
        %v2061 = vadd.s32 %v2059, 16
        %v2062 = vadd.s32 %v2059, 24
        %v2063 = vadd.s32 %v2059, 32
        %v2064 = vadd.s32 %v2059, 40
        %v2065 = vadd.s32 %v2059, 48
        %v2066 = vadd.s32 %v2059, 56
        %v2067 = vadd.s32 %v2059, 64
        %v2068 = vadd.s32 %v2059, 72
        %v2069 = vadd.s32 %v2059, 80
        %v2070 = vadd.s32 %v2059, 88
        %v2071 = vadd.s32 %v2059, 96
        %v2072 = vadd.s32 %v2059, 104
        %v2073 = vadd.s32 %v2059, 112
        %v2074 = vadd.s32 %v2059, 120
        %v2075 = vadd.s32 %v2059, 128
        %v2076 = vadd.s32 %v2059, 136
        %v2077 = vadd.s32 %v2059, 144
        %v2078 = vadd.s32 %v2059, 152
        %v2079 = vadd.s32 %v2059, 160
        %v2080 = vadd.s32 %v2059, 168
        %v2081 = vadd.s32 %v2059, 176
        %v2082 = vadd.s32 %v2059, 184
        %v2083 = vadd.s32 %v2059, 192
        %v2084 = vadd.s32 %v2059, 200
        %v2085 = vadd.s32 %v2059, 208
        %v2086 = vadd.s32 %v2059, 216
        %v2087 = vadd.s32 %v2059, 224
        %v2088 = vadd.s32 %v2059, 232
        %v2089 = vadd.s32 %v2059, 240
        %v2090 = vadd.s32 %v2059, 248
        %vm2091 = vcmp.le.s32.totalorder %v545, %v2059
        %vm2092 = vcmp.le.s32.totalorder %v546, %v2059
        %vm2093 = vcmp.le.s32.totalorder %v545, %v2060
        %vm2094 = vcmp.le.s32.totalorder %v546, %v2060
        %vm2095 = vcmp.le.s32.totalorder %v545, %v2061
        %vm2096 = vcmp.le.s32.totalorder %v546, %v2061
        %vm2097 = vcmp.le.s32.totalorder %v545, %v2062
        %vm2098 = vcmp.le.s32.totalorder %v546, %v2062
        %vm2099 = vcmp.le.s32.totalorder %v545, %v2063
        %vm2100 = vcmp.le.s32.totalorder %v546, %v2063
        %vm2101 = vcmp.le.s32.totalorder %v545, %v2064
        %vm2102 = vcmp.le.s32.totalorder %v546, %v2064
        %vm2103 = vcmp.le.s32.totalorder %v545, %v2065
        %vm2104 = vcmp.le.s32.totalorder %v546, %v2065
        %vm2105 = vcmp.le.s32.totalorder %v545, %v2066
        %vm2106 = vcmp.le.s32.totalorder %v546, %v2066
        %vm2107 = vcmp.le.s32.totalorder %v545, %v2067
        %vm2108 = vcmp.le.s32.totalorder %v546, %v2067
        %vm2109 = vcmp.le.s32.totalorder %v545, %v2068
        %vm2110 = vcmp.le.s32.totalorder %v546, %v2068
        %vm2111 = vcmp.le.s32.totalorder %v545, %v2069
        %vm2112 = vcmp.le.s32.totalorder %v546, %v2069
        %vm2113 = vcmp.le.s32.totalorder %v545, %v2070
        %vm2114 = vcmp.le.s32.totalorder %v546, %v2070
        %vm2115 = vcmp.le.s32.totalorder %v545, %v2071
        %vm2116 = vcmp.le.s32.totalorder %v546, %v2071
        %vm2117 = vcmp.le.s32.totalorder %v545, %v2072
        %vm2118 = vcmp.le.s32.totalorder %v546, %v2072
        %vm2119 = vcmp.le.s32.totalorder %v545, %v2073
        %vm2120 = vcmp.le.s32.totalorder %v546, %v2073
        %vm2121 = vcmp.le.s32.totalorder %v545, %v2074
        %vm2122 = vcmp.le.s32.totalorder %v546, %v2074
        %vm2123 = vcmp.le.s32.totalorder %v545, %v2075
        %vm2124 = vcmp.le.s32.totalorder %v546, %v2075
        %vm2125 = vcmp.le.s32.totalorder %v545, %v2076
        %vm2126 = vcmp.le.s32.totalorder %v546, %v2076
        %vm2127 = vcmp.le.s32.totalorder %v545, %v2077
        %vm2128 = vcmp.le.s32.totalorder %v546, %v2077
        %vm2129 = vcmp.le.s32.totalorder %v545, %v2078
        %vm2130 = vcmp.le.s32.totalorder %v546, %v2078
        %vm2131 = vcmp.le.s32.totalorder %v545, %v2079
        %vm2132 = vcmp.le.s32.totalorder %v546, %v2079
        %vm2133 = vcmp.le.s32.totalorder %v545, %v2080
        %vm2134 = vcmp.le.s32.totalorder %v546, %v2080
        %vm2135 = vcmp.le.s32.totalorder %v545, %v2081
        %vm2136 = vcmp.le.s32.totalorder %v546, %v2081
        %vm2137 = vcmp.le.s32.totalorder %v545, %v2082
        %vm2138 = vcmp.le.s32.totalorder %v546, %v2082
        %vm2139 = vcmp.le.s32.totalorder %v545, %v2083
        %vm2140 = vcmp.le.s32.totalorder %v546, %v2083
        %vm2141 = vcmp.le.s32.totalorder %v545, %v2084
        %vm2142 = vcmp.le.s32.totalorder %v546, %v2084
        %vm2143 = vcmp.le.s32.totalorder %v545, %v2085
        %vm2144 = vcmp.le.s32.totalorder %v546, %v2085
        %vm2145 = vcmp.le.s32.totalorder %v545, %v2086
        %vm2146 = vcmp.le.s32.totalorder %v546, %v2086
        %vm2147 = vcmp.le.s32.totalorder %v545, %v2087
        %vm2148 = vcmp.le.s32.totalorder %v546, %v2087
        %vm2149 = vcmp.le.s32.totalorder %v545, %v2088
        %vm2150 = vcmp.le.s32.totalorder %v546, %v2088
        %vm2151 = vcmp.le.s32.totalorder %v545, %v2089
        %vm2152 = vcmp.le.s32.totalorder %v546, %v2089
        %vm2153 = vcmp.le.s32.totalorder %v545, %v2090
        %vm2154 = vcmp.le.s32.totalorder %v546, %v2090
        %v2155 = vsel %vm2091, 0.0, -1e+10
        %v2156 = vsel %vm2092, 0.0, -1e+10
        %v2157 = vsel %vm2093, 0.0, -1e+10
        %v2158 = vsel %vm2094, 0.0, -1e+10
        %v2159 = vsel %vm2095, 0.0, -1e+10
        %v2160 = vsel %vm2096, 0.0, -1e+10
        %v2161 = vsel %vm2097, 0.0, -1e+10
        %v2162 = vsel %vm2098, 0.0, -1e+10
        %v2163 = vsel %vm2099, 0.0, -1e+10
        %v2164 = vsel %vm2100, 0.0, -1e+10
        %v2165 = vsel %vm2101, 0.0, -1e+10
        %v2166 = vsel %vm2102, 0.0, -1e+10
        %v2167 = vsel %vm2103, 0.0, -1e+10
        %v2168 = vsel %vm2104, 0.0, -1e+10
        %v2169 = vsel %vm2105, 0.0, -1e+10
        %v2170 = vsel %vm2106, 0.0, -1e+10
        %v2171 = vsel %vm2107, 0.0, -1e+10
        %v2172 = vsel %vm2108, 0.0, -1e+10
        %v2173 = vsel %vm2109, 0.0, -1e+10
        %v2174 = vsel %vm2110, 0.0, -1e+10
        %v2175 = vsel %vm2111, 0.0, -1e+10
        %v2176 = vsel %vm2112, 0.0, -1e+10
        %v2177 = vsel %vm2113, 0.0, -1e+10
        %v2178 = vsel %vm2114, 0.0, -1e+10
        %v2179 = vsel %vm2115, 0.0, -1e+10
        %v2180 = vsel %vm2116, 0.0, -1e+10
        %v2181 = vsel %vm2117, 0.0, -1e+10
        %v2182 = vsel %vm2118, 0.0, -1e+10
        %v2183 = vsel %vm2119, 0.0, -1e+10
        %v2184 = vsel %vm2120, 0.0, -1e+10
        %v2185 = vsel %vm2121, 0.0, -1e+10
        %v2186 = vsel %vm2122, 0.0, -1e+10
        %v2187 = vsel %vm2123, 0.0, -1e+10
        %v2188 = vsel %vm2124, 0.0, -1e+10
        %v2189 = vsel %vm2125, 0.0, -1e+10
        %v2190 = vsel %vm2126, 0.0, -1e+10
        %v2191 = vsel %vm2127, 0.0, -1e+10
        %v2192 = vsel %vm2128, 0.0, -1e+10
        %v2193 = vsel %vm2129, 0.0, -1e+10
        %v2194 = vsel %vm2130, 0.0, -1e+10
        %v2195 = vsel %vm2131, 0.0, -1e+10
        %v2196 = vsel %vm2132, 0.0, -1e+10
        %v2197 = vsel %vm2133, 0.0, -1e+10
        %v2198 = vsel %vm2134, 0.0, -1e+10
        %v2199 = vsel %vm2135, 0.0, -1e+10
        %v2200 = vsel %vm2136, 0.0, -1e+10
        %v2201 = vsel %vm2137, 0.0, -1e+10
        %v2202 = vsel %vm2138, 0.0, -1e+10
        %v2203 = vsel %vm2139, 0.0, -1e+10
        %v2204 = vsel %vm2140, 0.0, -1e+10
        %v2205 = vsel %vm2141, 0.0, -1e+10
        %v2206 = vsel %vm2142, 0.0, -1e+10
        %v2207 = vsel %vm2143, 0.0, -1e+10
        %v2208 = vsel %vm2144, 0.0, -1e+10
        %v2209 = vsel %vm2145, 0.0, -1e+10
        %v2210 = vsel %vm2146, 0.0, -1e+10
        %v2211 = vsel %vm2147, 0.0, -1e+10
        %v2212 = vsel %vm2148, 0.0, -1e+10
        %v2213 = vsel %vm2149, 0.0, -1e+10
        %v2214 = vsel %vm2150, 0.0, -1e+10
        %v2215 = vsel %vm2151, 0.0, -1e+10
        %v2216 = vsel %vm2152, 0.0, -1e+10
        %v2217 = vsel %vm2153, 0.0, -1e+10
        %v2218 = vsel %vm2154, 0.0, -1e+10
        %v2219 = vpack.c.bf16 %v1703, %v1699
        %v2220 = vpack.c.bf16 %v1705, %v1701
        %v2221 = vpack.c.bf16 %v1713, %v1709
        %v2222 = vpack.c.bf16 %v1715, %v1711
        %v2223 = vpack.c.bf16 %v2054, %v2050
        %v2224 = vpack.c.bf16 %v2056, %v2052
        %2225 = vxpose.xlu0.c.b16.start [1/8] %v2223, 128
        %2226 = vxpose.xlu0.c.b16.cont [2/8] 0, 128
        %2227 = vxpose.xlu0.c.b16.cont [3/8] 0, 128
        %2228 = vxpose.xlu0.c.b16.cont [4/8] 0, 128
        %2229 = vxpose.xlu0.c.b16.cont [5/8] 0, 128
        %2230 = vxpose.xlu0.c.b16.cont [6/8] 0, 128
        %2231 = vxpose.xlu0.c.b16.cont [7/8] 0, 128
        %2232 = vxpose.xlu0.c.b16.end [8/8] 0, 128
        %v2233 = vpop.trf.xlu0
        %v2234 = vpop.trf.xlu0
        %v2235 = vpop.trf.xlu0
        %v2236 = vpop.trf.xlu0
        %v2237 = vpop.trf.xlu0
        %v2238 = vpop.trf.xlu0
        %v2239 = vpop.trf.xlu0
        %v2240 = vpop.trf.xlu0
        %2241 = vxpose.xlu0.c.b16.start [1/8] %v2224, 128
        %2242 = vxpose.xlu0.c.b16.cont [2/8] 0, 128
        %2243 = vxpose.xlu0.c.b16.cont [3/8] 0, 128
        %2244 = vxpose.xlu0.c.b16.cont [4/8] 0, 128
        %2245 = vxpose.xlu0.c.b16.cont [5/8] 0, 128
        %2246 = vxpose.xlu0.c.b16.cont [6/8] 0, 128
        %2247 = vxpose.xlu0.c.b16.cont [7/8] 0, 128
        %2248 = vxpose.xlu0.c.b16.end [8/8] 0, 128
        %v2249 = vpop.trf.xlu0
        %v2250 = vpop.trf.xlu0
        %v2251 = vpop.trf.xlu0
        %v2252 = vpop.trf.xlu0
        %v2253 = vpop.trf.xlu0
        %v2254 = vpop.trf.xlu0
        %v2255 = vpop.trf.xlu0
        %v2256 = vpop.trf.xlu0
        %vm2257 = vcmask 64512
        %v2259 = vsel %vm2257, %v2233, 0
        %v2262 = vsel %vm2257, %v2234, 0
        %v2265 = vsel %vm2257, %v2235, 0
        %v2268 = vsel %vm2257, %v2236, 0
        %v2271 = vsel %vm2257, %v2237, 0
        %v2274 = vsel %vm2257, %v2238, 0
        %v2277 = vsel %vm2257, %v2239, 0
        %v2280 = vsel %vm2257, %v2240, 0
        %v2283 = vsel %vm2257, %v2249, 0
        %v2286 = vsel %vm2257, %v2250, 0
        %v2289 = vsel %vm2257, %v2251, 0
        %v2292 = vsel %vm2257, %v2252, 0
        %v2295 = vsel %vm2257, %v2253, 0
        %v2298 = vsel %vm2257, %v2254, 0
        %v2301 = vsel %vm2257, %v2255, 0
        %v2304 = vsel %vm2257, %v2256, 0
        %vm2306 = vcmask 1043456
        %v2308 = vsel %vm2306, %v2219, 0
        %v2311 = vsel %vm2306, %v2220, 0
        %2313 = vmatprep.subr.bf16.mxu0 0
        %2314 = vmatpush1.bf16.msra.mxu0 0
        %2315 = vmatprep.subr.bf16.mxu0 0
        %2316 = vmatpush1.bf16.msra.mxu0 0
        %2317 = vmatprep.subr.bf16.mxu0 0
        %2318 = vmatpush1.bf16.msra.mxu0 0
        %2319 = vmatprep.subr.bf16.mxu0 0
        %2320 = vmatpush1.bf16.msra.mxu0 0
        %2321 = vmatprep.subr.bf16.mxu0 0
        %2322 = vmatpush1.bf16.msra.mxu0 0
        %2323 = vmatprep.subr.bf16.mxu0 0
        %2324 = vmatpush1.bf16.msra.mxu0 0
        %2325 = vmatprep.subr.bf16.mxu0 0
        %2326 = vmatpush1.bf16.msra.mxu0 0
        %2327 = vmatprep.subr.bf16.mxu0 %v2311
        %2328 = vmatpush1.bf16.msra.mxu0 %v2308
        %2329 = vmatprep.subr.bf16.mxu0 0
        %2330 = vmatpush2.bf16.msra.mxu0 0
        %2331 = vmatprep.subr.bf16.mxu0 0
        %2332 = vmatpush2.bf16.msra.mxu0 0
        %2333 = vmatprep.subr.bf16.mxu0 0
        %2334 = vmatpush2.bf16.msra.mxu0 0
        %2335 = vmatprep.subr.bf16.mxu0 0
        %2336 = vmatpush2.bf16.msra.mxu0 0
        %2337 = vmatprep.subr.bf16.mxu0 0
        %2338 = vmatpush2.bf16.msra.mxu0 0
        %2339 = vmatprep.subr.bf16.mxu0 0
        %2340 = vmatpush2.bf16.msra.mxu0 0
        %2341 = vmatprep.subr.bf16.mxu0 0
        %2342 = vmatpush2.bf16.msra.mxu0 0
        %2343 = vmatprep.subr.bf16.mxu0 0
        %2344 = vmatpush2.bf16.msra.mxu0 0
        %2345 = vmatprep.mubr.bf16.mxu0 0
        %2346 = vmatmul.mubr.bf16.gmra.mxu0 %v2259
        %v2347 = vpop.f32.mrf.mxu0
        %v2348 = vadd.f32 %v2155, %v2347
        %v2349 = vpop.f32.mrf.mxu0
        %v2350 = vadd.f32 %v2156, %v2349
        %v2351 = vpop.f32.mrf.mxu0
        %v2352 = vadd.f32 %v2157, %v2351
        %v2353 = vpop.f32.mrf.mxu0
        %v2354 = vadd.f32 %v2158, %v2353
        %2355 = vmatprep.mubr.bf16.mxu0 0
        %2356 = vmatmul.mubr.bf16.gmra.mxu0 %v2262
        %v2357 = vpop.f32.mrf.mxu0
        %v2358 = vadd.f32 %v2159, %v2357
        %v2359 = vpop.f32.mrf.mxu0
        %v2360 = vadd.f32 %v2160, %v2359
        %v2361 = vpop.f32.mrf.mxu0
        %v2362 = vadd.f32 %v2161, %v2361
        %v2363 = vpop.f32.mrf.mxu0
        %v2364 = vadd.f32 %v2162, %v2363
        %2365 = vmatprep.mubr.bf16.mxu0 0
        %2366 = vmatmul.mubr.bf16.gmra.mxu0 %v2265
        %v2367 = vpop.f32.mrf.mxu0
        %v2368 = vadd.f32 %v2163, %v2367
        %v2369 = vpop.f32.mrf.mxu0
        %v2370 = vadd.f32 %v2164, %v2369
        %v2371 = vpop.f32.mrf.mxu0
        %v2372 = vadd.f32 %v2165, %v2371
        %v2373 = vpop.f32.mrf.mxu0
        %v2374 = vadd.f32 %v2166, %v2373
        %2375 = vmatprep.mubr.bf16.mxu0 0
        %2376 = vmatmul.mubr.bf16.gmra.mxu0 %v2268
        %v2377 = vpop.f32.mrf.mxu0
        %v2378 = vadd.f32 %v2167, %v2377
        %v2379 = vpop.f32.mrf.mxu0
        %v2380 = vadd.f32 %v2168, %v2379
        %v2381 = vpop.f32.mrf.mxu0
        %v2382 = vadd.f32 %v2169, %v2381
        %v2383 = vpop.f32.mrf.mxu0
        %v2384 = vadd.f32 %v2170, %v2383
        %2385 = vmatprep.mubr.bf16.mxu0 0
        %2386 = vmatmul.mubr.bf16.gmra.mxu0 %v2271
        %v2387 = vpop.f32.mrf.mxu0
        %v2388 = vadd.f32 %v2171, %v2387
        %v2389 = vpop.f32.mrf.mxu0
        %v2390 = vadd.f32 %v2172, %v2389
        %v2391 = vpop.f32.mrf.mxu0
        %v2392 = vadd.f32 %v2173, %v2391
        %v2393 = vpop.f32.mrf.mxu0
        %v2394 = vadd.f32 %v2174, %v2393
        %2395 = vmatprep.mubr.bf16.mxu0 0
        %2396 = vmatmul.mubr.bf16.gmra.mxu0 %v2274
        %v2397 = vpop.f32.mrf.mxu0
        %v2398 = vadd.f32 %v2175, %v2397
        %v2399 = vpop.f32.mrf.mxu0
        %v2400 = vadd.f32 %v2176, %v2399
        %v2401 = vpop.f32.mrf.mxu0
        %v2402 = vadd.f32 %v2177, %v2401
        %v2403 = vpop.f32.mrf.mxu0
        %v2404 = vadd.f32 %v2178, %v2403
        %2405 = vmatprep.mubr.bf16.mxu0 0
        %2406 = vmatmul.mubr.bf16.gmra.mxu0 %v2277
        %v2407 = vpop.f32.mrf.mxu0
        %v2408 = vadd.f32 %v2179, %v2407
        %v2409 = vpop.f32.mrf.mxu0
        %v2410 = vadd.f32 %v2180, %v2409
        %v2411 = vpop.f32.mrf.mxu0
        %v2412 = vadd.f32 %v2181, %v2411
        %v2413 = vpop.f32.mrf.mxu0
        %v2414 = vadd.f32 %v2182, %v2413
        %2415 = vmatprep.mubr.bf16.mxu0 0
        %2416 = vmatmul.mubr.bf16.gmra.mxu0 %v2280
        %v2417 = vpop.f32.mrf.mxu0
        %v2418 = vadd.f32 %v2183, %v2417
        %v2419 = vpop.f32.mrf.mxu0
        %v2420 = vadd.f32 %v2184, %v2419
        %v2421 = vpop.f32.mrf.mxu0
        %v2422 = vadd.f32 %v2185, %v2421
        %v2423 = vpop.f32.mrf.mxu0
        %v2424 = vadd.f32 %v2186, %v2423
        %2425 = vmatprep.mubr.bf16.mxu0 0
        %2426 = vmatmul.mubr.bf16.gmra.mxu0 %v2283
        %v2427 = vpop.f32.mrf.mxu0
        %v2428 = vadd.f32 %v2187, %v2427
        %v2429 = vpop.f32.mrf.mxu0
        %v2430 = vadd.f32 %v2188, %v2429
        %v2431 = vpop.f32.mrf.mxu0
        %v2432 = vadd.f32 %v2189, %v2431
        %v2433 = vpop.f32.mrf.mxu0
        %v2434 = vadd.f32 %v2190, %v2433
        %2435 = vmatprep.mubr.bf16.mxu0 0
        %2436 = vmatmul.mubr.bf16.gmra.mxu0 %v2286
        %v2437 = vpop.f32.mrf.mxu0
        %v2438 = vadd.f32 %v2191, %v2437
        %v2439 = vpop.f32.mrf.mxu0
        %v2440 = vadd.f32 %v2192, %v2439
        %v2441 = vpop.f32.mrf.mxu0
        %v2442 = vadd.f32 %v2193, %v2441
        %v2443 = vpop.f32.mrf.mxu0
        %v2444 = vadd.f32 %v2194, %v2443
        %2445 = vmatprep.mubr.bf16.mxu0 0
        %2446 = vmatmul.mubr.bf16.gmra.mxu0 %v2289
        %v2447 = vpop.f32.mrf.mxu0
        %v2448 = vadd.f32 %v2195, %v2447
        %v2449 = vpop.f32.mrf.mxu0
        %v2450 = vadd.f32 %v2196, %v2449
        %v2451 = vpop.f32.mrf.mxu0
        %v2452 = vadd.f32 %v2197, %v2451
        %v2453 = vpop.f32.mrf.mxu0
        %v2454 = vadd.f32 %v2198, %v2453
        %2455 = vmatprep.mubr.bf16.mxu0 0
        %2456 = vmatmul.mubr.bf16.gmra.mxu0 %v2292
        %v2457 = vpop.f32.mrf.mxu0
        %v2458 = vadd.f32 %v2199, %v2457
        %v2459 = vpop.f32.mrf.mxu0
        %v2460 = vadd.f32 %v2200, %v2459
        %v2461 = vpop.f32.mrf.mxu0
        %v2462 = vadd.f32 %v2201, %v2461
        %v2463 = vpop.f32.mrf.mxu0
        %v2464 = vadd.f32 %v2202, %v2463
        %2465 = vmatprep.mubr.bf16.mxu0 0
        %2466 = vmatmul.mubr.bf16.gmra.mxu0 %v2295
        %v2467 = vpop.f32.mrf.mxu0
        %v2468 = vadd.f32 %v2203, %v2467
        %v2469 = vpop.f32.mrf.mxu0
        %v2470 = vadd.f32 %v2204, %v2469
        %v2471 = vpop.f32.mrf.mxu0
        %v2472 = vadd.f32 %v2205, %v2471
        %v2473 = vpop.f32.mrf.mxu0
        %v2474 = vadd.f32 %v2206, %v2473
        %2475 = vmatprep.mubr.bf16.mxu0 0
        %2476 = vmatmul.mubr.bf16.gmra.mxu0 %v2298
        %v2477 = vpop.f32.mrf.mxu0
        %v2478 = vadd.f32 %v2207, %v2477
        %v2479 = vpop.f32.mrf.mxu0
        %v2480 = vadd.f32 %v2208, %v2479
        %v2481 = vpop.f32.mrf.mxu0
        %v2482 = vadd.f32 %v2209, %v2481
        %v2483 = vpop.f32.mrf.mxu0
        %v2484 = vadd.f32 %v2210, %v2483
        %2485 = vmatprep.mubr.bf16.mxu0 0
        %2486 = vmatmul.mubr.bf16.gmra.mxu0 %v2301
        %v2487 = vpop.f32.mrf.mxu0
        %v2488 = vadd.f32 %v2211, %v2487
        %v2489 = vpop.f32.mrf.mxu0
        %v2490 = vadd.f32 %v2212, %v2489
        %v2491 = vpop.f32.mrf.mxu0
        %v2492 = vadd.f32 %v2213, %v2491
        %v2493 = vpop.f32.mrf.mxu0
        %v2494 = vadd.f32 %v2214, %v2493
        %2495 = vmatprep.mubr.bf16.mxu0 0
        %2496 = vmatmul.mubr.bf16.gmra.mxu0 %v2304
        %v2497 = vpop.f32.mrf.mxu0
        %v2498 = vadd.f32 %v2215, %v2497
        %v2499 = vpop.f32.mrf.mxu0
        %v2500 = vadd.f32 %v2216, %v2499
        %v2501 = vpop.f32.mrf.mxu0
        %v2502 = vadd.f32 %v2217, %v2501
        %v2503 = vpop.f32.mrf.mxu0
        %v2504 = vadd.f32 %v2218, %v2503
        %2505 = vdwg.mxu0
        %v2506 = vmax.f32 %v2348, %v2350
        %2507 = vmax.xlane.f32.xlu0 %v2506
        %v2508 = vpop.xlane.xlu0 %2507
        %v2509 = vmax.f32 %v2352, %v2354
        %2510 = vmax.xlane.f32.xlu0 %v2509
        %v2511 = vpop.xlane.xlu0 %2510
        %v2512 = vmax.f32 %v2358, %v2360
        %2513 = vmax.xlane.f32.xlu0 %v2512
        %v2514 = vpop.xlane.xlu0 %2513
        %v2515 = vmax.f32 %v2362, %v2364
        %2516 = vmax.xlane.f32.xlu0 %v2515
        %v2517 = vpop.xlane.xlu0 %2516
        %v2518 = vmax.f32 %v2368, %v2370
        %2519 = vmax.xlane.f32.xlu0 %v2518
        %v2520 = vpop.xlane.xlu0 %2519
        %v2521 = vmax.f32 %v2372, %v2374
        %2522 = vmax.xlane.f32.xlu0 %v2521
        %v2523 = vpop.xlane.xlu0 %2522
        %v2524 = vmax.f32 %v2378, %v2380
        %2525 = vmax.xlane.f32.xlu0 %v2524
        %v2526 = vpop.xlane.xlu0 %2525
        %v2527 = vmax.f32 %v2382, %v2384
        %2528 = vmax.xlane.f32.xlu0 %v2527
        %v2529 = vpop.xlane.xlu0 %2528
        %v2530 = vmax.f32 %v2388, %v2390
        %2531 = vmax.xlane.f32.xlu0 %v2530
        %v2532 = vpop.xlane.xlu0 %2531
        %v2533 = vmax.f32 %v2392, %v2394
        %2534 = vmax.xlane.f32.xlu0 %v2533
        %v2535 = vpop.xlane.xlu0 %2534
        %v2536 = vmax.f32 %v2398, %v2400
        %2537 = vmax.xlane.f32.xlu0 %v2536
        %v2538 = vpop.xlane.xlu0 %2537
        %v2539 = vmax.f32 %v2402, %v2404
        %2540 = vmax.xlane.f32.xlu0 %v2539
        %v2541 = vpop.xlane.xlu0 %2540
        %v2542 = vmax.f32 %v2408, %v2410
        %2543 = vmax.xlane.f32.xlu0 %v2542
        %v2544 = vpop.xlane.xlu0 %2543
        %v2545 = vmax.f32 %v2412, %v2414
        %2546 = vmax.xlane.f32.xlu0 %v2545
        %v2547 = vpop.xlane.xlu0 %2546
        %v2548 = vmax.f32 %v2418, %v2420
        %2549 = vmax.xlane.f32.xlu0 %v2548
        %v2550 = vpop.xlane.xlu0 %2549
        %v2551 = vmax.f32 %v2422, %v2424
        %2552 = vmax.xlane.f32.xlu0 %v2551
        %v2553 = vpop.xlane.xlu0 %2552
        %v2554 = vmax.f32 %v2428, %v2430
        %2555 = vmax.xlane.f32.xlu0 %v2554
        %v2556 = vpop.xlane.xlu0 %2555
        %v2557 = vmax.f32 %v2432, %v2434
        %2558 = vmax.xlane.f32.xlu0 %v2557
        %v2559 = vpop.xlane.xlu0 %2558
        %v2560 = vmax.f32 %v2438, %v2440
        %2561 = vmax.xlane.f32.xlu0 %v2560
        %v2562 = vpop.xlane.xlu0 %2561
        %v2563 = vmax.f32 %v2442, %v2444
        %2564 = vmax.xlane.f32.xlu0 %v2563
        %v2565 = vpop.xlane.xlu0 %2564
        %v2566 = vmax.f32 %v2448, %v2450
        %2567 = vmax.xlane.f32.xlu0 %v2566
        %v2568 = vpop.xlane.xlu0 %2567
        %v2569 = vmax.f32 %v2452, %v2454
        %2570 = vmax.xlane.f32.xlu0 %v2569
        %v2571 = vpop.xlane.xlu0 %2570
        %v2572 = vmax.f32 %v2458, %v2460
        %2573 = vmax.xlane.f32.xlu0 %v2572
        %v2574 = vpop.xlane.xlu0 %2573
        %v2575 = vmax.f32 %v2462, %v2464
        %2576 = vmax.xlane.f32.xlu0 %v2575
        %v2577 = vpop.xlane.xlu0 %2576
        %v2578 = vmax.f32 %v2468, %v2470
        %2579 = vmax.xlane.f32.xlu0 %v2578
        %v2580 = vpop.xlane.xlu0 %2579
        %v2581 = vmax.f32 %v2472, %v2474
        %2582 = vmax.xlane.f32.xlu0 %v2581
        %v2583 = vpop.xlane.xlu0 %2582
        %v2584 = vmax.f32 %v2478, %v2480
        %2585 = vmax.xlane.f32.xlu0 %v2584
        %v2586 = vpop.xlane.xlu0 %2585
        %v2587 = vmax.f32 %v2482, %v2484
        %2588 = vmax.xlane.f32.xlu0 %v2587
        %v2589 = vpop.xlane.xlu0 %2588
        %v2590 = vmax.f32 %v2488, %v2490
        %2591 = vmax.xlane.f32.xlu0 %v2590
        %v2592 = vpop.xlane.xlu0 %2591
        %v2593 = vmax.f32 %v2492, %v2494
        %2594 = vmax.xlane.f32.xlu0 %v2593
        %v2595 = vpop.xlane.xlu0 %2594
        %v2596 = vmax.f32 %v2498, %v2500
        %2597 = vmax.xlane.f32.xlu0 %v2596
        %v2598 = vpop.xlane.xlu0 %2597
        %v2599 = vmax.f32 %v2502, %v2504
        %2600 = vmax.xlane.f32.xlu0 %v2599
        %v2601 = vpop.xlane.xlu0 %2600
        %v2602 = vsub.f32 %v2348, %v2508
        %v2603 = vsub.f32 %v2350, %v2508
        %v2604 = vsub.f32 %v2352, %v2511
        %v2605 = vsub.f32 %v2354, %v2511
        %v2606 = vsub.f32 %v2358, %v2514
        %v2607 = vsub.f32 %v2360, %v2514
        %v2608 = vsub.f32 %v2362, %v2517
        %v2609 = vsub.f32 %v2364, %v2517
        %v2610 = vsub.f32 %v2368, %v2520
        %v2611 = vsub.f32 %v2370, %v2520
        %v2612 = vsub.f32 %v2372, %v2523
        %v2613 = vsub.f32 %v2374, %v2523
        %v2614 = vsub.f32 %v2378, %v2526
        %v2615 = vsub.f32 %v2380, %v2526
        %v2616 = vsub.f32 %v2382, %v2529
        %v2617 = vsub.f32 %v2384, %v2529
        %v2618 = vsub.f32 %v2388, %v2532
        %v2619 = vsub.f32 %v2390, %v2532
        %v2620 = vsub.f32 %v2392, %v2535
        %v2621 = vsub.f32 %v2394, %v2535
        %v2622 = vsub.f32 %v2398, %v2538
        %v2623 = vsub.f32 %v2400, %v2538
        %v2624 = vsub.f32 %v2402, %v2541
        %v2625 = vsub.f32 %v2404, %v2541
        %v2626 = vsub.f32 %v2408, %v2544
        %v2627 = vsub.f32 %v2410, %v2544
        %v2628 = vsub.f32 %v2412, %v2547
        %v2629 = vsub.f32 %v2414, %v2547
        %v2630 = vsub.f32 %v2418, %v2550
        %v2631 = vsub.f32 %v2420, %v2550
        %v2632 = vsub.f32 %v2422, %v2553
        %v2633 = vsub.f32 %v2424, %v2553
        %v2634 = vsub.f32 %v2428, %v2556
        %v2635 = vsub.f32 %v2430, %v2556
        %v2636 = vsub.f32 %v2432, %v2559
        %v2637 = vsub.f32 %v2434, %v2559
        %v2638 = vsub.f32 %v2438, %v2562
        %v2639 = vsub.f32 %v2440, %v2562
        %v2640 = vsub.f32 %v2442, %v2565
        %v2641 = vsub.f32 %v2444, %v2565
        %v2642 = vsub.f32 %v2448, %v2568
        %v2643 = vsub.f32 %v2450, %v2568
        %v2644 = vsub.f32 %v2452, %v2571
        %v2645 = vsub.f32 %v2454, %v2571
        %v2646 = vsub.f32 %v2458, %v2574
        %v2647 = vsub.f32 %v2460, %v2574
        %v2648 = vsub.f32 %v2462, %v2577
        %v2649 = vsub.f32 %v2464, %v2577
        %v2650 = vsub.f32 %v2468, %v2580
        %v2651 = vsub.f32 %v2470, %v2580
        %v2652 = vsub.f32 %v2472, %v2583
        %v2653 = vsub.f32 %v2474, %v2583
        %v2654 = vsub.f32 %v2478, %v2586
        %v2655 = vsub.f32 %v2480, %v2586
        %v2656 = vsub.f32 %v2482, %v2589
        %v2657 = vsub.f32 %v2484, %v2589
        %v2658 = vsub.f32 %v2488, %v2592
        %v2659 = vsub.f32 %v2490, %v2592
        %v2660 = vsub.f32 %v2492, %v2595
        %v2661 = vsub.f32 %v2494, %v2595
        %v2662 = vsub.f32 %v2498, %v2598
        %v2663 = vsub.f32 %v2500, %v2598
        %v2664 = vsub.f32 %v2502, %v2601
        %v2665 = vsub.f32 %v2504, %v2601
        %v2666 = vmul.f32 %v2602, 1.442695
        %v2667 = vpow.pop %v2666
        %v2668 = vmul.f32 %v2603, 1.442695
        %v2669 = vpow.pop %v2668
        %v2670 = vmul.f32 %v2604, 1.442695
        %v2671 = vpow.pop %v2670
        %v2672 = vmul.f32 %v2605, 1.442695
        %v2673 = vpow.pop %v2672
        %v2674 = vmul.f32 %v2606, 1.442695
        %v2675 = vpow.pop %v2674
        %v2676 = vmul.f32 %v2607, 1.442695
        %v2677 = vpow.pop %v2676
        %v2678 = vmul.f32 %v2608, 1.442695
        %v2679 = vpow.pop %v2678
        %v2680 = vmul.f32 %v2609, 1.442695
        %v2681 = vpow.pop %v2680
        %v2682 = vmul.f32 %v2610, 1.442695
        %v2683 = vpow.pop %v2682
        %v2684 = vmul.f32 %v2611, 1.442695
        %v2685 = vpow.pop %v2684
        %v2686 = vmul.f32 %v2612, 1.442695
        %v2687 = vpow.pop %v2686
        %v2688 = vmul.f32 %v2613, 1.442695
        %v2689 = vpow.pop %v2688
        %v2690 = vmul.f32 %v2614, 1.442695
        %v2691 = vpow.pop %v2690
        %v2692 = vmul.f32 %v2615, 1.442695
        %v2693 = vpow.pop %v2692
        %v2694 = vmul.f32 %v2616, 1.442695
        %v2695 = vpow.pop %v2694
        %v2696 = vmul.f32 %v2617, 1.442695
        %v2697 = vpow.pop %v2696
        %v2698 = vmul.f32 %v2618, 1.442695
        %v2699 = vpow.pop %v2698
        %v2700 = vmul.f32 %v2619, 1.442695
        %v2701 = vpow.pop %v2700
        %v2702 = vmul.f32 %v2620, 1.442695
        %v2703 = vpow.pop %v2702
        %v2704 = vmul.f32 %v2621, 1.442695
        %v2705 = vpow.pop %v2704
        %v2706 = vmul.f32 %v2622, 1.442695
        %v2707 = vpow.pop %v2706
        %v2708 = vmul.f32 %v2623, 1.442695
        %v2709 = vpow.pop %v2708
        %v2710 = vmul.f32 %v2624, 1.442695
        %v2711 = vpow.pop %v2710
        %v2712 = vmul.f32 %v2625, 1.442695
        %v2713 = vpow.pop %v2712
        %v2714 = vmul.f32 %v2626, 1.442695
        %v2715 = vpow.pop %v2714
        %v2716 = vmul.f32 %v2627, 1.442695
        %v2717 = vpow.pop %v2716
        %v2718 = vmul.f32 %v2628, 1.442695
        %v2719 = vpow.pop %v2718
        %v2720 = vmul.f32 %v2629, 1.442695
        %v2721 = vpow.pop %v2720
        %v2722 = vmul.f32 %v2630, 1.442695
        %v2723 = vpow.pop %v2722
        %v2724 = vmul.f32 %v2631, 1.442695
        %v2725 = vpow.pop %v2724
        %v2726 = vmul.f32 %v2632, 1.442695
        %v2727 = vpow.pop %v2726
        %v2728 = vmul.f32 %v2633, 1.442695
        %v2729 = vpow.pop %v2728
        %v2730 = vmul.f32 %v2634, 1.442695
        %v2731 = vpow.pop %v2730
        %v2732 = vmul.f32 %v2635, 1.442695
        %v2733 = vpow.pop %v2732
        %v2734 = vmul.f32 %v2636, 1.442695
        %v2735 = vpow.pop %v2734
        %v2736 = vmul.f32 %v2637, 1.442695
        %v2737 = vpow.pop %v2736
        %v2738 = vmul.f32 %v2638, 1.442695
        %v2739 = vpow.pop %v2738
        %v2740 = vmul.f32 %v2639, 1.442695
        %v2741 = vpow.pop %v2740
        %v2742 = vmul.f32 %v2640, 1.442695
        %v2743 = vpow.pop %v2742
        %v2744 = vmul.f32 %v2641, 1.442695
        %v2745 = vpow.pop %v2744
        %v2746 = vmul.f32 %v2642, 1.442695
        %v2747 = vpow.pop %v2746
        %v2748 = vmul.f32 %v2643, 1.442695
        %v2749 = vpow.pop %v2748
        %v2750 = vmul.f32 %v2644, 1.442695
        %v2751 = vpow.pop %v2750
        %v2752 = vmul.f32 %v2645, 1.442695
        %v2753 = vpow.pop %v2752
        %v2754 = vmul.f32 %v2646, 1.442695
        %v2755 = vpow.pop %v2754
        %v2756 = vmul.f32 %v2647, 1.442695
        %v2757 = vpow.pop %v2756
        %v2758 = vmul.f32 %v2648, 1.442695
        %v2759 = vpow.pop %v2758
        %v2760 = vmul.f32 %v2649, 1.442695
        %v2761 = vpow.pop %v2760
        %v2762 = vmul.f32 %v2650, 1.442695
        %v2763 = vpow.pop %v2762
        %v2764 = vmul.f32 %v2651, 1.442695
        %v2765 = vpow.pop %v2764
        %v2766 = vmul.f32 %v2652, 1.442695
        %v2767 = vpow.pop %v2766
        %v2768 = vmul.f32 %v2653, 1.442695
        %v2769 = vpow.pop %v2768
        %v2770 = vmul.f32 %v2654, 1.442695
        %v2771 = vpow.pop %v2770
        %v2772 = vmul.f32 %v2655, 1.442695
        %v2773 = vpow.pop %v2772
        %v2774 = vmul.f32 %v2656, 1.442695
        %v2775 = vpow.pop %v2774
        %v2776 = vmul.f32 %v2657, 1.442695
        %v2777 = vpow.pop %v2776
        %v2778 = vmul.f32 %v2658, 1.442695
        %v2779 = vpow.pop %v2778
        %v2780 = vmul.f32 %v2659, 1.442695
        %v2781 = vpow.pop %v2780
        %v2782 = vmul.f32 %v2660, 1.442695
        %v2783 = vpow.pop %v2782
        %v2784 = vmul.f32 %v2661, 1.442695
        %v2785 = vpow.pop %v2784
        %v2786 = vmul.f32 %v2662, 1.442695
        %v2787 = vpow.pop %v2786
        %v2788 = vmul.f32 %v2663, 1.442695
        %v2789 = vpow.pop %v2788
        %v2790 = vmul.f32 %v2664, 1.442695
        %v2791 = vpow.pop %v2790
        %v2792 = vmul.f32 %v2665, 1.442695
        %v2793 = vpow.pop %v2792
        %v2794 = vadd.f32 %v2667, %v2669
        %2795 = vadd.xlane.f32.xlu0 %v2794
        %v2796 = vpop.xlane.xlu0 %2795
        %v2797 = vadd.f32 %v2671, %v2673
        %2798 = vadd.xlane.f32.xlu0 %v2797
        %v2799 = vpop.xlane.xlu0 %2798
        %v2800 = vadd.f32 %v2675, %v2677
        %2801 = vadd.xlane.f32.xlu0 %v2800
        %v2802 = vpop.xlane.xlu0 %2801
        %v2803 = vadd.f32 %v2679, %v2681
        %2804 = vadd.xlane.f32.xlu0 %v2803
        %v2805 = vpop.xlane.xlu0 %2804
        %v2806 = vadd.f32 %v2683, %v2685
        %2807 = vadd.xlane.f32.xlu0 %v2806
        %v2808 = vpop.xlane.xlu0 %2807
        %v2809 = vadd.f32 %v2687, %v2689
        %2810 = vadd.xlane.f32.xlu0 %v2809
        %v2811 = vpop.xlane.xlu0 %2810
        %v2812 = vadd.f32 %v2691, %v2693
        %2813 = vadd.xlane.f32.xlu0 %v2812
        %v2814 = vpop.xlane.xlu0 %2813
        %v2815 = vadd.f32 %v2695, %v2697
        %2816 = vadd.xlane.f32.xlu0 %v2815
        %v2817 = vpop.xlane.xlu0 %2816
        %v2818 = vadd.f32 %v2699, %v2701
        %2819 = vadd.xlane.f32.xlu0 %v2818
        %v2820 = vpop.xlane.xlu0 %2819
        %v2821 = vadd.f32 %v2703, %v2705
        %2822 = vadd.xlane.f32.xlu0 %v2821
        %v2823 = vpop.xlane.xlu0 %2822
        %v2824 = vadd.f32 %v2707, %v2709
        %2825 = vadd.xlane.f32.xlu0 %v2824
        %v2826 = vpop.xlane.xlu0 %2825
        %v2827 = vadd.f32 %v2711, %v2713
        %2828 = vadd.xlane.f32.xlu0 %v2827
        %v2829 = vpop.xlane.xlu0 %2828
        %v2830 = vadd.f32 %v2715, %v2717
        %2831 = vadd.xlane.f32.xlu0 %v2830
        %v2832 = vpop.xlane.xlu0 %2831
        %v2833 = vadd.f32 %v2719, %v2721
        %2834 = vadd.xlane.f32.xlu0 %v2833
        %v2835 = vpop.xlane.xlu0 %2834
        %v2836 = vadd.f32 %v2723, %v2725
        %2837 = vadd.xlane.f32.xlu0 %v2836
        %v2838 = vpop.xlane.xlu0 %2837
        %v2839 = vadd.f32 %v2727, %v2729
        %2840 = vadd.xlane.f32.xlu0 %v2839
        %v2841 = vpop.xlane.xlu0 %2840
        %v2842 = vadd.f32 %v2731, %v2733
        %2843 = vadd.xlane.f32.xlu0 %v2842
        %v2844 = vpop.xlane.xlu0 %2843
        %v2845 = vadd.f32 %v2735, %v2737
        %2846 = vadd.xlane.f32.xlu0 %v2845
        %v2847 = vpop.xlane.xlu0 %2846
        %v2848 = vadd.f32 %v2739, %v2741
        %2849 = vadd.xlane.f32.xlu0 %v2848
        %v2850 = vpop.xlane.xlu0 %2849
        %v2851 = vadd.f32 %v2743, %v2745
        %2852 = vadd.xlane.f32.xlu0 %v2851
        %v2853 = vpop.xlane.xlu0 %2852
        %v2854 = vadd.f32 %v2747, %v2749
        %2855 = vadd.xlane.f32.xlu0 %v2854
        %v2856 = vpop.xlane.xlu0 %2855
        %v2857 = vadd.f32 %v2751, %v2753
        %2858 = vadd.xlane.f32.xlu0 %v2857
        %v2859 = vpop.xlane.xlu0 %2858
        %v2860 = vadd.f32 %v2755, %v2757
        %2861 = vadd.xlane.f32.xlu0 %v2860
        %v2862 = vpop.xlane.xlu0 %2861
        %v2863 = vadd.f32 %v2759, %v2761
        %2864 = vadd.xlane.f32.xlu0 %v2863
        %v2865 = vpop.xlane.xlu0 %2864
        %v2866 = vadd.f32 %v2763, %v2765
        %2867 = vadd.xlane.f32.xlu0 %v2866
        %v2868 = vpop.xlane.xlu0 %2867
        %v2869 = vadd.f32 %v2767, %v2769
        %2870 = vadd.xlane.f32.xlu0 %v2869
        %v2871 = vpop.xlane.xlu0 %2870
        %v2872 = vadd.f32 %v2771, %v2773
        %2873 = vadd.xlane.f32.xlu0 %v2872
        %v2874 = vpop.xlane.xlu0 %2873
        %v2875 = vadd.f32 %v2775, %v2777
        %2876 = vadd.xlane.f32.xlu0 %v2875
        %v2877 = vpop.xlane.xlu0 %2876
        %v2878 = vadd.f32 %v2779, %v2781
        %2879 = vadd.xlane.f32.xlu0 %v2878
        %v2880 = vpop.xlane.xlu0 %2879
        %v2881 = vadd.f32 %v2783, %v2785
        %2882 = vadd.xlane.f32.xlu0 %v2881
        %v2883 = vpop.xlane.xlu0 %2882
        %v2884 = vadd.f32 %v2787, %v2789
        %2885 = vadd.xlane.f32.xlu0 %v2884
        %v2886 = vpop.xlane.xlu0 %2885
        %v2887 = vadd.f32 %v2791, %v2793
        %2888 = vadd.xlane.f32.xlu0 %v2887
        %v2889 = vpop.xlane.xlu0 %2888
        %v2890 = vrcp.pop %v2796
        %v2891 = vrcp.pop %v2799
        %v2892 = vrcp.pop %v2802
        %v2893 = vrcp.pop %v2805
        %v2894 = vrcp.pop %v2808
        %v2895 = vrcp.pop %v2811
        %v2896 = vrcp.pop %v2814
        %v2897 = vrcp.pop %v2817
        %v2898 = vrcp.pop %v2820
        %v2899 = vrcp.pop %v2823
        %v2900 = vrcp.pop %v2826
        %v2901 = vrcp.pop %v2829
        %v2902 = vrcp.pop %v2832
        %v2903 = vrcp.pop %v2835
        %v2904 = vrcp.pop %v2838
        %v2905 = vrcp.pop %v2841
        %v2906 = vrcp.pop %v2844
        %v2907 = vrcp.pop %v2847
        %v2908 = vrcp.pop %v2850
        %v2909 = vrcp.pop %v2853
        %v2910 = vrcp.pop %v2856
        %v2911 = vrcp.pop %v2859
        %v2912 = vrcp.pop %v2862
        %v2913 = vrcp.pop %v2865
        %v2914 = vrcp.pop %v2868
        %v2915 = vrcp.pop %v2871
        %v2916 = vrcp.pop %v2874
        %v2917 = vrcp.pop %v2877
        %v2918 = vrcp.pop %v2880
        %v2919 = vrcp.pop %v2883
        %v2920 = vrcp.pop %v2886
        %v2921 = vrcp.pop %v2889
        %v2922 = vmul.f32 %v2667, %v2890
        %v2923 = vmul.f32 %v2669, %v2890
        %v2924 = vmul.f32 %v2671, %v2891
        %v2925 = vmul.f32 %v2673, %v2891
        %v2926 = vmul.f32 %v2675, %v2892
        %v2927 = vmul.f32 %v2677, %v2892
        %v2928 = vmul.f32 %v2679, %v2893
        %v2929 = vmul.f32 %v2681, %v2893
        %v2930 = vmul.f32 %v2683, %v2894
        %v2931 = vmul.f32 %v2685, %v2894
        %v2932 = vmul.f32 %v2687, %v2895
        %v2933 = vmul.f32 %v2689, %v2895
        %v2934 = vmul.f32 %v2691, %v2896
        %v2935 = vmul.f32 %v2693, %v2896
        %v2936 = vmul.f32 %v2695, %v2897
        %v2937 = vmul.f32 %v2697, %v2897
        %v2938 = vmul.f32 %v2699, %v2898
        %v2939 = vmul.f32 %v2701, %v2898
        %v2940 = vmul.f32 %v2703, %v2899
        %v2941 = vmul.f32 %v2705, %v2899
        %v2942 = vmul.f32 %v2707, %v2900
        %v2943 = vmul.f32 %v2709, %v2900
        %v2944 = vmul.f32 %v2711, %v2901
        %v2945 = vmul.f32 %v2713, %v2901
        %v2946 = vmul.f32 %v2715, %v2902
        %v2947 = vmul.f32 %v2717, %v2902
        %v2948 = vmul.f32 %v2719, %v2903
        %v2949 = vmul.f32 %v2721, %v2903
        %v2950 = vmul.f32 %v2723, %v2904
        %v2951 = vmul.f32 %v2725, %v2904
        %v2952 = vmul.f32 %v2727, %v2905
        %v2953 = vmul.f32 %v2729, %v2905
        %v2954 = vmul.f32 %v2731, %v2906
        %v2955 = vmul.f32 %v2733, %v2906
        %v2956 = vmul.f32 %v2735, %v2907
        %v2957 = vmul.f32 %v2737, %v2907
        %v2958 = vmul.f32 %v2739, %v2908
        %v2959 = vmul.f32 %v2741, %v2908
        %v2960 = vmul.f32 %v2743, %v2909
        %v2961 = vmul.f32 %v2745, %v2909
        %v2962 = vmul.f32 %v2747, %v2910
        %v2963 = vmul.f32 %v2749, %v2910
        %v2964 = vmul.f32 %v2751, %v2911
        %v2965 = vmul.f32 %v2753, %v2911
        %v2966 = vmul.f32 %v2755, %v2912
        %v2967 = vmul.f32 %v2757, %v2912
        %v2968 = vmul.f32 %v2759, %v2913
        %v2969 = vmul.f32 %v2761, %v2913
        %v2970 = vmul.f32 %v2763, %v2914
        %v2971 = vmul.f32 %v2765, %v2914
        %v2972 = vmul.f32 %v2767, %v2915
        %v2973 = vmul.f32 %v2769, %v2915
        %v2974 = vmul.f32 %v2771, %v2916
        %v2975 = vmul.f32 %v2773, %v2916
        %v2976 = vmul.f32 %v2775, %v2917
        %v2977 = vmul.f32 %v2777, %v2917
        %v2978 = vmul.f32 %v2779, %v2918
        %v2979 = vmul.f32 %v2781, %v2918
        %v2980 = vmul.f32 %v2783, %v2919
        %v2981 = vmul.f32 %v2785, %v2919
        %v2982 = vmul.f32 %v2787, %v2920
        %v2983 = vmul.f32 %v2789, %v2920
        %v2984 = vmul.f32 %v2791, %v2921
        %v2985 = vmul.f32 %v2793, %v2921
        %v2986 = vpack.c.bf16 %v2924, %v2922
        %v2987 = vpack.c.bf16 %v2925, %v2923
        %v2988 = vpack.c.bf16 %v2928, %v2926
        %v2989 = vpack.c.bf16 %v2929, %v2927
        %v2990 = vpack.c.bf16 %v2932, %v2930
        %v2991 = vpack.c.bf16 %v2933, %v2931
        %v2992 = vpack.c.bf16 %v2936, %v2934
        %v2993 = vpack.c.bf16 %v2937, %v2935
        %v2994 = vpack.c.bf16 %v2940, %v2938
        %v2995 = vpack.c.bf16 %v2941, %v2939
        %v2996 = vpack.c.bf16 %v2944, %v2942
        %v2997 = vpack.c.bf16 %v2945, %v2943
        %v2998 = vpack.c.bf16 %v2948, %v2946
        %v2999 = vpack.c.bf16 %v2949, %v2947
        %v3000 = vpack.c.bf16 %v2952, %v2950
        %v3001 = vpack.c.bf16 %v2953, %v2951
        %v3002 = vpack.c.bf16 %v2956, %v2954
        %v3003 = vpack.c.bf16 %v2957, %v2955
        %v3004 = vpack.c.bf16 %v2960, %v2958
        %v3005 = vpack.c.bf16 %v2961, %v2959
        %v3006 = vpack.c.bf16 %v2964, %v2962
        %v3007 = vpack.c.bf16 %v2965, %v2963
        %v3008 = vpack.c.bf16 %v2968, %v2966
        %v3009 = vpack.c.bf16 %v2969, %v2967
        %v3010 = vpack.c.bf16 %v2972, %v2970
        %v3011 = vpack.c.bf16 %v2973, %v2971
        %v3012 = vpack.c.bf16 %v2976, %v2974
        %v3013 = vpack.c.bf16 %v2977, %v2975
        %v3014 = vpack.c.bf16 %v2980, %v2978
        %v3015 = vpack.c.bf16 %v2981, %v2979
        %v3016 = vpack.c.bf16 %v2984, %v2982
        %v3017 = vpack.c.bf16 %v2985, %v2983
        %3018 = vmatprep.subr.bf16.mxu0 %v3001
        %3019 = vmatpush1.bf16.xpose.msra.mxu0 %v3000
        %3020 = vmatprep.subr.bf16.mxu0 %v2999
        %3021 = vmatpush1.bf16.xpose.msra.mxu0 %v2998
        %3022 = vmatprep.subr.bf16.mxu0 %v2997
        %3023 = vmatpush1.bf16.xpose.msra.mxu0 %v2996
        %3024 = vmatprep.subr.bf16.mxu0 %v2995
        %3025 = vmatpush1.bf16.xpose.msra.mxu0 %v2994
        %3026 = vmatprep.subr.bf16.mxu0 %v2993
        %3027 = vmatpush1.bf16.xpose.msra.mxu0 %v2992
        %3028 = vmatprep.subr.bf16.mxu0 %v2991
        %3029 = vmatpush1.bf16.xpose.msra.mxu0 %v2990
        %3030 = vmatprep.subr.bf16.mxu0 %v2989
        %3031 = vmatpush1.bf16.xpose.msra.mxu0 %v2988
        %3032 = vmatprep.subr.bf16.mxu0 %v2987
        %3033 = vmatpush1.bf16.xpose.msra.mxu0 %v2986
        %3034 = vmatprep.subr.bf16.mxu0 %v3017
        %3035 = vmatpush2.bf16.xpose.msra.mxu0 %v3016
        %3036 = vmatprep.subr.bf16.mxu0 %v3015
        %3037 = vmatpush2.bf16.xpose.msra.mxu0 %v3014
        %3038 = vmatprep.subr.bf16.mxu0 %v3013
        %3039 = vmatpush2.bf16.xpose.msra.mxu0 %v3012
        %3040 = vmatprep.subr.bf16.mxu0 %v3011
        %3041 = vmatpush2.bf16.xpose.msra.mxu0 %v3010
        %3042 = vmatprep.subr.bf16.mxu0 %v3009
        %3043 = vmatpush2.bf16.xpose.msra.mxu0 %v3008
        %3044 = vmatprep.subr.bf16.mxu0 %v3007
        %3045 = vmatpush2.bf16.xpose.msra.mxu0 %v3006
        %3046 = vmatprep.subr.bf16.mxu0 %v3005
        %3047 = vmatpush2.bf16.xpose.msra.mxu0 %v3004
        %3048 = vmatprep.subr.bf16.mxu0 %v3003
        %3049 = vmatpush2.bf16.xpose.msra.mxu0 %v3002
        %3050 = vmatprep.mubr.bf16.mxu0 %v2222
        %3051 = vmatmul.mubr.bf16.gmra.mxu0 %v2221
        %v3052 = vpop.f32.mrf.mxu0
        %v3053 = vadd.f32 0.0, %v3052
        %v3054 = vpop.f32.mrf.mxu0
        %v3055 = vadd.f32 0.0, %v3054
        %v3056 = vpop.f32.mrf.mxu0
        %v3057 = vpop.f32.mrf.mxu0
        %3058 = vdwg.mxu0
        %v3061 = vrot.slane %v2223, 4
        %v3062 = vrot.slane %v2224, 4
        %3065 = vxpose.xlu0.c.b16.start [1/8] %v3061, 128
        %3066 = vxpose.xlu0.c.b16.cont [2/8] 0, 128
        %3067 = vxpose.xlu0.c.b16.cont [3/8] 0, 128
        %3068 = vxpose.xlu0.c.b16.cont [4/8] 0, 128
        %3069 = vxpose.xlu0.c.b16.cont [5/8] 0, 128
        %3070 = vxpose.xlu0.c.b16.cont [6/8] 0, 128
        %3071 = vxpose.xlu0.c.b16.cont [7/8] 0, 128
        %3072 = vxpose.xlu0.c.b16.end [8/8] 0, 128
        %v3073 = vpop.trf.xlu0
        %v3074 = vpop.trf.xlu0
        %v3075 = vpop.trf.xlu0
        %v3076 = vpop.trf.xlu0
        %v3077 = vpop.trf.xlu0
        %v3078 = vpop.trf.xlu0
        %v3079 = vpop.trf.xlu0
        %v3080 = vpop.trf.xlu0
        %3081 = vxpose.xlu0.c.b16.start [1/8] %v3062, 128
        %3082 = vxpose.xlu0.c.b16.cont [2/8] 0, 128
        %3083 = vxpose.xlu0.c.b16.cont [3/8] 0, 128
        %3084 = vxpose.xlu0.c.b16.cont [4/8] 0, 128
        %3085 = vxpose.xlu0.c.b16.cont [5/8] 0, 128
        %3086 = vxpose.xlu0.c.b16.cont [6/8] 0, 128
        %3087 = vxpose.xlu0.c.b16.cont [7/8] 0, 128
        %3088 = vxpose.xlu0.c.b16.end [8/8] 0, 128
        %v3089 = vpop.trf.xlu0
        %v3090 = vpop.trf.xlu0
        %v3091 = vpop.trf.xlu0
        %v3092 = vpop.trf.xlu0
        %v3093 = vpop.trf.xlu0
        %v3094 = vpop.trf.xlu0
        %v3095 = vpop.trf.xlu0
        %v3096 = vpop.trf.xlu0
        %v3099 = vrot.slane %v2219, 4
        %v3100 = vrot.slane %v2220, 4
        %v3102 = vsel %vm2257, %v3073, 0
        %v3105 = vsel %vm2257, %v3074, 0
        %v3108 = vsel %vm2257, %v3075, 0
        %v3111 = vsel %vm2257, %v3076, 0
        %v3114 = vsel %vm2257, %v3077, 0
        %v3117 = vsel %vm2257, %v3078, 0
        %v3120 = vsel %vm2257, %v3079, 0
        %v3123 = vsel %vm2257, %v3080, 0
        %v3126 = vsel %vm2257, %v3089, 0
        %v3129 = vsel %vm2257, %v3090, 0
        %v3132 = vsel %vm2257, %v3091, 0
        %v3135 = vsel %vm2257, %v3092, 0
        %v3138 = vsel %vm2257, %v3093, 0
        %v3141 = vsel %vm2257, %v3094, 0
        %v3144 = vsel %vm2257, %v3095, 0
        %v3147 = vsel %vm2257, %v3096, 0
        %v3150 = vsel %vm2306, %v3099, 0
        %v3153 = vsel %vm2306, %v3100, 0
        %3155 = vmatprep.subr.bf16.mxu0 0
        %3156 = vmatpush1.bf16.msra.mxu0 0
        %3157 = vmatprep.subr.bf16.mxu0 0
        %3158 = vmatpush1.bf16.msra.mxu0 0
        %3159 = vmatprep.subr.bf16.mxu0 0
        %3160 = vmatpush1.bf16.msra.mxu0 0
        %3161 = vmatprep.subr.bf16.mxu0 0
        %3162 = vmatpush1.bf16.msra.mxu0 0
        %3163 = vmatprep.subr.bf16.mxu0 0
        %3164 = vmatpush1.bf16.msra.mxu0 0
        %3165 = vmatprep.subr.bf16.mxu0 0
        %3166 = vmatpush1.bf16.msra.mxu0 0
        %3167 = vmatprep.subr.bf16.mxu0 0
        %3168 = vmatpush1.bf16.msra.mxu0 0
        %3169 = vmatprep.subr.bf16.mxu0 %v3153
        %3170 = vmatpush1.bf16.msra.mxu0 %v3150
        %3171 = vmatprep.subr.bf16.mxu0 0
        %3172 = vmatpush2.bf16.msra.mxu0 0
        %3173 = vmatprep.subr.bf16.mxu0 0
        %3174 = vmatpush2.bf16.msra.mxu0 0
        %3175 = vmatprep.subr.bf16.mxu0 0
        %3176 = vmatpush2.bf16.msra.mxu0 0
        %3177 = vmatprep.subr.bf16.mxu0 0
        %3178 = vmatpush2.bf16.msra.mxu0 0
        %3179 = vmatprep.subr.bf16.mxu0 0
        %3180 = vmatpush2.bf16.msra.mxu0 0
        %3181 = vmatprep.subr.bf16.mxu0 0
        %3182 = vmatpush2.bf16.msra.mxu0 0
        %3183 = vmatprep.subr.bf16.mxu0 0
        %3184 = vmatpush2.bf16.msra.mxu0 0
        %3185 = vmatprep.subr.bf16.mxu0 0
        %3186 = vmatpush2.bf16.msra.mxu0 0
        %3187 = vmatprep.mubr.bf16.mxu0 0
        %3188 = vmatmul.mubr.bf16.gmra.mxu0 %v3102
        %v3189 = vpop.f32.mrf.mxu0
        %v3190 = vadd.f32 %v2155, %v3189
        %v3191 = vpop.f32.mrf.mxu0
        %v3192 = vadd.f32 %v2156, %v3191
        %v3193 = vpop.f32.mrf.mxu0
        %v3194 = vadd.f32 %v2157, %v3193
        %v3195 = vpop.f32.mrf.mxu0
        %v3196 = vadd.f32 %v2158, %v3195
        %3197 = vmatprep.mubr.bf16.mxu0 0
        %3198 = vmatmul.mubr.bf16.gmra.mxu0 %v3105
        %v3199 = vpop.f32.mrf.mxu0
        %v3200 = vadd.f32 %v2159, %v3199
        %v3201 = vpop.f32.mrf.mxu0
        %v3202 = vadd.f32 %v2160, %v3201
        %v3203 = vpop.f32.mrf.mxu0
        %v3204 = vadd.f32 %v2161, %v3203
        %v3205 = vpop.f32.mrf.mxu0
        %v3206 = vadd.f32 %v2162, %v3205
        %3207 = vmatprep.mubr.bf16.mxu0 0
        %3208 = vmatmul.mubr.bf16.gmra.mxu0 %v3108
        %v3209 = vpop.f32.mrf.mxu0
        %v3210 = vadd.f32 %v2163, %v3209
        %v3211 = vpop.f32.mrf.mxu0
        %v3212 = vadd.f32 %v2164, %v3211
        %v3213 = vpop.f32.mrf.mxu0
        %v3214 = vadd.f32 %v2165, %v3213
        %v3215 = vpop.f32.mrf.mxu0
        %v3216 = vadd.f32 %v2166, %v3215
        %3217 = vmatprep.mubr.bf16.mxu0 0
        %3218 = vmatmul.mubr.bf16.gmra.mxu0 %v3111
        %v3219 = vpop.f32.mrf.mxu0
        %v3220 = vadd.f32 %v2167, %v3219
        %v3221 = vpop.f32.mrf.mxu0
        %v3222 = vadd.f32 %v2168, %v3221
        %v3223 = vpop.f32.mrf.mxu0
        %v3224 = vadd.f32 %v2169, %v3223
        %v3225 = vpop.f32.mrf.mxu0
        %v3226 = vadd.f32 %v2170, %v3225
        %3227 = vmatprep.mubr.bf16.mxu0 0
        %3228 = vmatmul.mubr.bf16.gmra.mxu0 %v3114
        %v3229 = vpop.f32.mrf.mxu0
        %v3230 = vadd.f32 %v2171, %v3229
        %v3231 = vpop.f32.mrf.mxu0
        %v3232 = vadd.f32 %v2172, %v3231
        %v3233 = vpop.f32.mrf.mxu0
        %v3234 = vadd.f32 %v2173, %v3233
        %v3235 = vpop.f32.mrf.mxu0
        %v3236 = vadd.f32 %v2174, %v3235
        %3237 = vmatprep.mubr.bf16.mxu0 0
        %3238 = vmatmul.mubr.bf16.gmra.mxu0 %v3117
        %v3239 = vpop.f32.mrf.mxu0
        %v3240 = vadd.f32 %v2175, %v3239
        %v3241 = vpop.f32.mrf.mxu0
        %v3242 = vadd.f32 %v2176, %v3241
        %v3243 = vpop.f32.mrf.mxu0
        %v3244 = vadd.f32 %v2177, %v3243
        %v3245 = vpop.f32.mrf.mxu0
        %v3246 = vadd.f32 %v2178, %v3245
        %3247 = vmatprep.mubr.bf16.mxu0 0
        %3248 = vmatmul.mubr.bf16.gmra.mxu0 %v3120
        %v3249 = vpop.f32.mrf.mxu0
        %v3250 = vadd.f32 %v2179, %v3249
        %v3251 = vpop.f32.mrf.mxu0
        %v3252 = vadd.f32 %v2180, %v3251
        %v3253 = vpop.f32.mrf.mxu0
        %v3254 = vadd.f32 %v2181, %v3253
        %v3255 = vpop.f32.mrf.mxu0
        %v3256 = vadd.f32 %v2182, %v3255
        %3257 = vmatprep.mubr.bf16.mxu0 0
        %3258 = vmatmul.mubr.bf16.gmra.mxu0 %v3123
        %v3259 = vpop.f32.mrf.mxu0
        %v3260 = vadd.f32 %v2183, %v3259
        %v3261 = vpop.f32.mrf.mxu0
        %v3262 = vadd.f32 %v2184, %v3261
        %v3263 = vpop.f32.mrf.mxu0
        %v3264 = vadd.f32 %v2185, %v3263
        %v3265 = vpop.f32.mrf.mxu0
        %v3266 = vadd.f32 %v2186, %v3265
        %3267 = vmatprep.mubr.bf16.mxu0 0
        %3268 = vmatmul.mubr.bf16.gmra.mxu0 %v3126
        %v3269 = vpop.f32.mrf.mxu0
        %v3270 = vadd.f32 %v2187, %v3269
        %v3271 = vpop.f32.mrf.mxu0
        %v3272 = vadd.f32 %v2188, %v3271
        %v3273 = vpop.f32.mrf.mxu0
        %v3274 = vadd.f32 %v2189, %v3273
        %v3275 = vpop.f32.mrf.mxu0
        %v3276 = vadd.f32 %v2190, %v3275
        %3277 = vmatprep.mubr.bf16.mxu0 0
        %3278 = vmatmul.mubr.bf16.gmra.mxu0 %v3129
        %v3279 = vpop.f32.mrf.mxu0
        %v3280 = vadd.f32 %v2191, %v3279
        %v3281 = vpop.f32.mrf.mxu0
        %v3282 = vadd.f32 %v2192, %v3281
        %v3283 = vpop.f32.mrf.mxu0
        %v3284 = vadd.f32 %v2193, %v3283
        %v3285 = vpop.f32.mrf.mxu0
        %v3286 = vadd.f32 %v2194, %v3285
        %3287 = vmatprep.mubr.bf16.mxu0 0
        %3288 = vmatmul.mubr.bf16.gmra.mxu0 %v3132
        %v3289 = vpop.f32.mrf.mxu0
        %v3290 = vadd.f32 %v2195, %v3289
        %v3291 = vpop.f32.mrf.mxu0
        %v3292 = vadd.f32 %v2196, %v3291
        %v3293 = vpop.f32.mrf.mxu0
        %v3294 = vadd.f32 %v2197, %v3293
        %v3295 = vpop.f32.mrf.mxu0
        %v3296 = vadd.f32 %v2198, %v3295
        %3297 = vmatprep.mubr.bf16.mxu0 0
        %3298 = vmatmul.mubr.bf16.gmra.mxu0 %v3135
        %v3299 = vpop.f32.mrf.mxu0
        %v3300 = vadd.f32 %v2199, %v3299
        %v3301 = vpop.f32.mrf.mxu0
        %v3302 = vadd.f32 %v2200, %v3301
        %v3303 = vpop.f32.mrf.mxu0
        %v3304 = vadd.f32 %v2201, %v3303
        %v3305 = vpop.f32.mrf.mxu0
        %v3306 = vadd.f32 %v2202, %v3305
        %3307 = vmatprep.mubr.bf16.mxu0 0
        %3308 = vmatmul.mubr.bf16.gmra.mxu0 %v3138
        %v3309 = vpop.f32.mrf.mxu0
        %v3310 = vadd.f32 %v2203, %v3309
        %v3311 = vpop.f32.mrf.mxu0
        %v3312 = vadd.f32 %v2204, %v3311
        %v3313 = vpop.f32.mrf.mxu0
        %v3314 = vadd.f32 %v2205, %v3313
        %v3315 = vpop.f32.mrf.mxu0
        %v3316 = vadd.f32 %v2206, %v3315
        %3317 = vmatprep.mubr.bf16.mxu0 0
        %3318 = vmatmul.mubr.bf16.gmra.mxu0 %v3141
        %v3319 = vpop.f32.mrf.mxu0
        %v3320 = vadd.f32 %v2207, %v3319
        %v3321 = vpop.f32.mrf.mxu0
        %v3322 = vadd.f32 %v2208, %v3321
        %v3323 = vpop.f32.mrf.mxu0
        %v3324 = vadd.f32 %v2209, %v3323
        %v3325 = vpop.f32.mrf.mxu0
        %v3326 = vadd.f32 %v2210, %v3325
        %3327 = vmatprep.mubr.bf16.mxu0 0
        %3328 = vmatmul.mubr.bf16.gmra.mxu0 %v3144
        %v3329 = vpop.f32.mrf.mxu0
        %v3330 = vadd.f32 %v2211, %v3329
        %v3331 = vpop.f32.mrf.mxu0
        %v3332 = vadd.f32 %v2212, %v3331
        %v3333 = vpop.f32.mrf.mxu0
        %v3334 = vadd.f32 %v2213, %v3333
        %v3335 = vpop.f32.mrf.mxu0
        %v3336 = vadd.f32 %v2214, %v3335
        %3337 = vmatprep.mubr.bf16.mxu0 0
        %3338 = vmatmul.mubr.bf16.gmra.mxu0 %v3147
        %v3339 = vpop.f32.mrf.mxu0
        %v3340 = vadd.f32 %v2215, %v3339
        %v3341 = vpop.f32.mrf.mxu0
        %v3342 = vadd.f32 %v2216, %v3341
        %v3343 = vpop.f32.mrf.mxu0
        %v3344 = vadd.f32 %v2217, %v3343
        %v3345 = vpop.f32.mrf.mxu0
        %v3346 = vadd.f32 %v2218, %v3345
        %3347 = vdwg.mxu0
        %v3348 = vmax.f32 %v3190, %v3192
        %3349 = vmax.xlane.f32.xlu0 %v3348
        %v3350 = vpop.xlane.xlu0 %3349
        %v3351 = vmax.f32 %v3194, %v3196
        %3352 = vmax.xlane.f32.xlu0 %v3351
        %v3353 = vpop.xlane.xlu0 %3352
        %v3354 = vmax.f32 %v3200, %v3202
        %3355 = vmax.xlane.f32.xlu0 %v3354
        %v3356 = vpop.xlane.xlu0 %3355
        %v3357 = vmax.f32 %v3204, %v3206
        %3358 = vmax.xlane.f32.xlu0 %v3357
        %v3359 = vpop.xlane.xlu0 %3358
        %v3360 = vmax.f32 %v3210, %v3212
        %3361 = vmax.xlane.f32.xlu0 %v3360
        %v3362 = vpop.xlane.xlu0 %3361
        %v3363 = vmax.f32 %v3214, %v3216
        %3364 = vmax.xlane.f32.xlu0 %v3363
        %v3365 = vpop.xlane.xlu0 %3364
        %v3366 = vmax.f32 %v3220, %v3222
        %3367 = vmax.xlane.f32.xlu0 %v3366
        %v3368 = vpop.xlane.xlu0 %3367
        %v3369 = vmax.f32 %v3224, %v3226
        %3370 = vmax.xlane.f32.xlu0 %v3369
        %v3371 = vpop.xlane.xlu0 %3370
        %v3372 = vmax.f32 %v3230, %v3232
        %3373 = vmax.xlane.f32.xlu0 %v3372
        %v3374 = vpop.xlane.xlu0 %3373
        %v3375 = vmax.f32 %v3234, %v3236
        %3376 = vmax.xlane.f32.xlu0 %v3375
        %v3377 = vpop.xlane.xlu0 %3376
        %v3378 = vmax.f32 %v3240, %v3242
        %3379 = vmax.xlane.f32.xlu0 %v3378
        %v3380 = vpop.xlane.xlu0 %3379
        %v3381 = vmax.f32 %v3244, %v3246
        %3382 = vmax.xlane.f32.xlu0 %v3381
        %v3383 = vpop.xlane.xlu0 %3382
        %v3384 = vmax.f32 %v3250, %v3252
        %3385 = vmax.xlane.f32.xlu0 %v3384
        %v3386 = vpop.xlane.xlu0 %3385
        %v3387 = vmax.f32 %v3254, %v3256
        %3388 = vmax.xlane.f32.xlu0 %v3387
        %v3389 = vpop.xlane.xlu0 %3388
        %v3390 = vmax.f32 %v3260, %v3262
        %3391 = vmax.xlane.f32.xlu0 %v3390
        %v3392 = vpop.xlane.xlu0 %3391
        %v3393 = vmax.f32 %v3264, %v3266
        %3394 = vmax.xlane.f32.xlu0 %v3393
        %v3395 = vpop.xlane.xlu0 %3394
        %v3396 = vmax.f32 %v3270, %v3272
        %3397 = vmax.xlane.f32.xlu0 %v3396
        %v3398 = vpop.xlane.xlu0 %3397
        %v3399 = vmax.f32 %v3274, %v3276
        %3400 = vmax.xlane.f32.xlu0 %v3399
        %v3401 = vpop.xlane.xlu0 %3400
        %v3402 = vmax.f32 %v3280, %v3282
        %3403 = vmax.xlane.f32.xlu0 %v3402
        %v3404 = vpop.xlane.xlu0 %3403
        %v3405 = vmax.f32 %v3284, %v3286
        %3406 = vmax.xlane.f32.xlu0 %v3405
        %v3407 = vpop.xlane.xlu0 %3406
        %v3408 = vmax.f32 %v3290, %v3292
        %3409 = vmax.xlane.f32.xlu0 %v3408
        %v3410 = vpop.xlane.xlu0 %3409
        %v3411 = vmax.f32 %v3294, %v3296
        %3412 = vmax.xlane.f32.xlu0 %v3411
        %v3413 = vpop.xlane.xlu0 %3412
        %v3414 = vmax.f32 %v3300, %v3302
        %3415 = vmax.xlane.f32.xlu0 %v3414
        %v3416 = vpop.xlane.xlu0 %3415
        %v3417 = vmax.f32 %v3304, %v3306
        %3418 = vmax.xlane.f32.xlu0 %v3417
        %v3419 = vpop.xlane.xlu0 %3418
        %v3420 = vmax.f32 %v3310, %v3312
        %3421 = vmax.xlane.f32.xlu0 %v3420
        %v3422 = vpop.xlane.xlu0 %3421
        %v3423 = vmax.f32 %v3314, %v3316
        %3424 = vmax.xlane.f32.xlu0 %v3423
        %v3425 = vpop.xlane.xlu0 %3424
        %v3426 = vmax.f32 %v3320, %v3322
        %3427 = vmax.xlane.f32.xlu0 %v3426
        %v3428 = vpop.xlane.xlu0 %3427
        %v3429 = vmax.f32 %v3324, %v3326
        %3430 = vmax.xlane.f32.xlu0 %v3429
        %v3431 = vpop.xlane.xlu0 %3430
        %v3432 = vmax.f32 %v3330, %v3332
        %3433 = vmax.xlane.f32.xlu0 %v3432
        %v3434 = vpop.xlane.xlu0 %3433
        %v3435 = vmax.f32 %v3334, %v3336
        %3436 = vmax.xlane.f32.xlu0 %v3435
        %v3437 = vpop.xlane.xlu0 %3436
        %v3438 = vmax.f32 %v3340, %v3342
        %3439 = vmax.xlane.f32.xlu0 %v3438
        %v3440 = vpop.xlane.xlu0 %3439
        %v3441 = vmax.f32 %v3344, %v3346
        %3442 = vmax.xlane.f32.xlu0 %v3441
        %v3443 = vpop.xlane.xlu0 %3442
        %v3444 = vsub.f32 %v3190, %v3350
        %v3445 = vsub.f32 %v3192, %v3350
        %v3446 = vsub.f32 %v3194, %v3353
        %v3447 = vsub.f32 %v3196, %v3353
        %v3448 = vsub.f32 %v3200, %v3356
        %v3449 = vsub.f32 %v3202, %v3356
        %v3450 = vsub.f32 %v3204, %v3359
        %v3451 = vsub.f32 %v3206, %v3359
        %v3452 = vsub.f32 %v3210, %v3362
        %v3453 = vsub.f32 %v3212, %v3362
        %v3454 = vsub.f32 %v3214, %v3365
        %v3455 = vsub.f32 %v3216, %v3365
        %v3456 = vsub.f32 %v3220, %v3368
        %v3457 = vsub.f32 %v3222, %v3368
        %v3458 = vsub.f32 %v3224, %v3371
        %v3459 = vsub.f32 %v3226, %v3371
        %v3460 = vsub.f32 %v3230, %v3374
        %v3461 = vsub.f32 %v3232, %v3374
        %v3462 = vsub.f32 %v3234, %v3377
        %v3463 = vsub.f32 %v3236, %v3377
        %v3464 = vsub.f32 %v3240, %v3380
        %v3465 = vsub.f32 %v3242, %v3380
        %v3466 = vsub.f32 %v3244, %v3383
        %v3467 = vsub.f32 %v3246, %v3383
        %v3468 = vsub.f32 %v3250, %v3386
        %v3469 = vsub.f32 %v3252, %v3386
        %v3470 = vsub.f32 %v3254, %v3389
        %v3471 = vsub.f32 %v3256, %v3389
        %v3472 = vsub.f32 %v3260, %v3392
        %v3473 = vsub.f32 %v3262, %v3392
        %v3474 = vsub.f32 %v3264, %v3395
        %v3475 = vsub.f32 %v3266, %v3395
        %v3476 = vsub.f32 %v3270, %v3398
        %v3477 = vsub.f32 %v3272, %v3398
        %v3478 = vsub.f32 %v3274, %v3401
        %v3479 = vsub.f32 %v3276, %v3401
        %v3480 = vsub.f32 %v3280, %v3404
        %v3481 = vsub.f32 %v3282, %v3404
        %v3482 = vsub.f32 %v3284, %v3407
        %v3483 = vsub.f32 %v3286, %v3407
        %v3484 = vsub.f32 %v3290, %v3410
        %v3485 = vsub.f32 %v3292, %v3410
        %v3486 = vsub.f32 %v3294, %v3413
        %v3487 = vsub.f32 %v3296, %v3413
        %v3488 = vsub.f32 %v3300, %v3416
        %v3489 = vsub.f32 %v3302, %v3416
        %v3490 = vsub.f32 %v3304, %v3419
        %v3491 = vsub.f32 %v3306, %v3419
        %v3492 = vsub.f32 %v3310, %v3422
        %v3493 = vsub.f32 %v3312, %v3422
        %v3494 = vsub.f32 %v3314, %v3425
        %v3495 = vsub.f32 %v3316, %v3425
        %v3496 = vsub.f32 %v3320, %v3428
        %v3497 = vsub.f32 %v3322, %v3428
        %v3498 = vsub.f32 %v3324, %v3431
        %v3499 = vsub.f32 %v3326, %v3431
        %v3500 = vsub.f32 %v3330, %v3434
        %v3501 = vsub.f32 %v3332, %v3434
        %v3502 = vsub.f32 %v3334, %v3437
        %v3503 = vsub.f32 %v3336, %v3437
        %v3504 = vsub.f32 %v3340, %v3440
        %v3505 = vsub.f32 %v3342, %v3440
        %v3506 = vsub.f32 %v3344, %v3443
        %v3507 = vsub.f32 %v3346, %v3443
        %v3508 = vmul.f32 %v3444, 1.442695
        %v3509 = vpow.pop %v3508
        %v3510 = vmul.f32 %v3445, 1.442695
        %v3511 = vpow.pop %v3510
        %v3512 = vmul.f32 %v3446, 1.442695
        %v3513 = vpow.pop %v3512
        %v3514 = vmul.f32 %v3447, 1.442695
        %v3515 = vpow.pop %v3514
        %v3516 = vmul.f32 %v3448, 1.442695
        %v3517 = vpow.pop %v3516
        %v3518 = vmul.f32 %v3449, 1.442695
        %v3519 = vpow.pop %v3518
        %v3520 = vmul.f32 %v3450, 1.442695
        %v3521 = vpow.pop %v3520
        %v3522 = vmul.f32 %v3451, 1.442695
        %v3523 = vpow.pop %v3522
        %v3524 = vmul.f32 %v3452, 1.442695
        %v3525 = vpow.pop %v3524
        %v3526 = vmul.f32 %v3453, 1.442695
        %v3527 = vpow.pop %v3526
        %v3528 = vmul.f32 %v3454, 1.442695
        %v3529 = vpow.pop %v3528
        %v3530 = vmul.f32 %v3455, 1.442695
        %v3531 = vpow.pop %v3530
        %v3532 = vmul.f32 %v3456, 1.442695
        %v3533 = vpow.pop %v3532
        %v3534 = vmul.f32 %v3457, 1.442695
        %v3535 = vpow.pop %v3534
        %v3536 = vmul.f32 %v3458, 1.442695
        %v3537 = vpow.pop %v3536
        %v3538 = vmul.f32 %v3459, 1.442695
        %v3539 = vpow.pop %v3538
        %v3540 = vmul.f32 %v3460, 1.442695
        %v3541 = vpow.pop %v3540
        %v3542 = vmul.f32 %v3461, 1.442695
        %v3543 = vpow.pop %v3542
        %v3544 = vmul.f32 %v3462, 1.442695
        %v3545 = vpow.pop %v3544
        %v3546 = vmul.f32 %v3463, 1.442695
        %v3547 = vpow.pop %v3546
        %v3548 = vmul.f32 %v3464, 1.442695
        %v3549 = vpow.pop %v3548
        %v3550 = vmul.f32 %v3465, 1.442695
        %v3551 = vpow.pop %v3550
        %v3552 = vmul.f32 %v3466, 1.442695
        %v3553 = vpow.pop %v3552
        %v3554 = vmul.f32 %v3467, 1.442695
        %v3555 = vpow.pop %v3554
        %v3556 = vmul.f32 %v3468, 1.442695
        %v3557 = vpow.pop %v3556
        %v3558 = vmul.f32 %v3469, 1.442695
        %v3559 = vpow.pop %v3558
        %v3560 = vmul.f32 %v3470, 1.442695
        %v3561 = vpow.pop %v3560
        %v3562 = vmul.f32 %v3471, 1.442695
        %v3563 = vpow.pop %v3562
        %v3564 = vmul.f32 %v3472, 1.442695
        %v3565 = vpow.pop %v3564
        %v3566 = vmul.f32 %v3473, 1.442695
        %v3567 = vpow.pop %v3566
        %v3568 = vmul.f32 %v3474, 1.442695
        %v3569 = vpow.pop %v3568
        %v3570 = vmul.f32 %v3475, 1.442695
        %v3571 = vpow.pop %v3570
        %v3572 = vmul.f32 %v3476, 1.442695
        %v3573 = vpow.pop %v3572
        %v3574 = vmul.f32 %v3477, 1.442695
        %v3575 = vpow.pop %v3574
        %v3576 = vmul.f32 %v3478, 1.442695
        %v3577 = vpow.pop %v3576
        %v3578 = vmul.f32 %v3479, 1.442695
        %v3579 = vpow.pop %v3578
        %v3580 = vmul.f32 %v3480, 1.442695
        %v3581 = vpow.pop %v3580
        %v3582 = vmul.f32 %v3481, 1.442695
        %v3583 = vpow.pop %v3582
        %v3584 = vmul.f32 %v3482, 1.442695
        %v3585 = vpow.pop %v3584
        %v3586 = vmul.f32 %v3483, 1.442695
        %v3587 = vpow.pop %v3586
        %v3588 = vmul.f32 %v3484, 1.442695
        %v3589 = vpow.pop %v3588
        %v3590 = vmul.f32 %v3485, 1.442695
        %v3591 = vpow.pop %v3590
        %v3592 = vmul.f32 %v3486, 1.442695
        %v3593 = vpow.pop %v3592
        %v3594 = vmul.f32 %v3487, 1.442695
        %v3595 = vpow.pop %v3594
        %v3596 = vmul.f32 %v3488, 1.442695
        %v3597 = vpow.pop %v3596
        %v3598 = vmul.f32 %v3489, 1.442695
        %v3599 = vpow.pop %v3598
        %v3600 = vmul.f32 %v3490, 1.442695
        %v3601 = vpow.pop %v3600
        %v3602 = vmul.f32 %v3491, 1.442695
        %v3603 = vpow.pop %v3602
        %v3604 = vmul.f32 %v3492, 1.442695
        %v3605 = vpow.pop %v3604
        %v3606 = vmul.f32 %v3493, 1.442695
        %v3607 = vpow.pop %v3606
        %v3608 = vmul.f32 %v3494, 1.442695
        %v3609 = vpow.pop %v3608
        %v3610 = vmul.f32 %v3495, 1.442695
        %v3611 = vpow.pop %v3610
        %v3612 = vmul.f32 %v3496, 1.442695
        %v3613 = vpow.pop %v3612
        %v3614 = vmul.f32 %v3497, 1.442695
        %v3615 = vpow.pop %v3614
        %v3616 = vmul.f32 %v3498, 1.442695
        %v3617 = vpow.pop %v3616
        %v3618 = vmul.f32 %v3499, 1.442695
        %v3619 = vpow.pop %v3618
        %v3620 = vmul.f32 %v3500, 1.442695
        %v3621 = vpow.pop %v3620
        %v3622 = vmul.f32 %v3501, 1.442695
        %v3623 = vpow.pop %v3622
        %v3624 = vmul.f32 %v3502, 1.442695
        %v3625 = vpow.pop %v3624
        %v3626 = vmul.f32 %v3503, 1.442695
        %v3627 = vpow.pop %v3626
        %v3628 = vmul.f32 %v3504, 1.442695
        %v3629 = vpow.pop %v3628
        %v3630 = vmul.f32 %v3505, 1.442695
        %v3631 = vpow.pop %v3630
        %v3632 = vmul.f32 %v3506, 1.442695
        %v3633 = vpow.pop %v3632
        %v3634 = vmul.f32 %v3507, 1.442695
        %v3635 = vpow.pop %v3634
        %v3636 = vadd.f32 %v3509, %v3511
        %3637 = vadd.xlane.f32.xlu0 %v3636
        %v3638 = vpop.xlane.xlu0 %3637
        %v3639 = vadd.f32 %v3513, %v3515
        %3640 = vadd.xlane.f32.xlu0 %v3639
        %v3641 = vpop.xlane.xlu0 %3640
        %v3642 = vadd.f32 %v3517, %v3519
        %3643 = vadd.xlane.f32.xlu0 %v3642
        %v3644 = vpop.xlane.xlu0 %3643
        %v3645 = vadd.f32 %v3521, %v3523
        %3646 = vadd.xlane.f32.xlu0 %v3645
        %v3647 = vpop.xlane.xlu0 %3646
        %v3648 = vadd.f32 %v3525, %v3527
        %3649 = vadd.xlane.f32.xlu0 %v3648
        %v3650 = vpop.xlane.xlu0 %3649
        %v3651 = vadd.f32 %v3529, %v3531
        %3652 = vadd.xlane.f32.xlu0 %v3651
        %v3653 = vpop.xlane.xlu0 %3652
        %v3654 = vadd.f32 %v3533, %v3535
        %3655 = vadd.xlane.f32.xlu0 %v3654
        %v3656 = vpop.xlane.xlu0 %3655
        %v3657 = vadd.f32 %v3537, %v3539
        %3658 = vadd.xlane.f32.xlu0 %v3657
        %v3659 = vpop.xlane.xlu0 %3658
        %v3660 = vadd.f32 %v3541, %v3543
        %3661 = vadd.xlane.f32.xlu0 %v3660
        %v3662 = vpop.xlane.xlu0 %3661
        %v3663 = vadd.f32 %v3545, %v3547
        %3664 = vadd.xlane.f32.xlu0 %v3663
        %v3665 = vpop.xlane.xlu0 %3664
        %v3666 = vadd.f32 %v3549, %v3551
        %3667 = vadd.xlane.f32.xlu0 %v3666
        %v3668 = vpop.xlane.xlu0 %3667
        %v3669 = vadd.f32 %v3553, %v3555
        %3670 = vadd.xlane.f32.xlu0 %v3669
        %v3671 = vpop.xlane.xlu0 %3670
        %v3672 = vadd.f32 %v3557, %v3559
        %3673 = vadd.xlane.f32.xlu0 %v3672
        %v3674 = vpop.xlane.xlu0 %3673
        %v3675 = vadd.f32 %v3561, %v3563
        %3676 = vadd.xlane.f32.xlu0 %v3675
        %v3677 = vpop.xlane.xlu0 %3676
        %v3678 = vadd.f32 %v3565, %v3567
        %3679 = vadd.xlane.f32.xlu0 %v3678
        %v3680 = vpop.xlane.xlu0 %3679
        %v3681 = vadd.f32 %v3569, %v3571
        %3682 = vadd.xlane.f32.xlu0 %v3681
        %v3683 = vpop.xlane.xlu0 %3682
        %v3684 = vadd.f32 %v3573, %v3575
        %3685 = vadd.xlane.f32.xlu0 %v3684
        %v3686 = vpop.xlane.xlu0 %3685
        %v3687 = vadd.f32 %v3577, %v3579
        %3688 = vadd.xlane.f32.xlu0 %v3687
        %v3689 = vpop.xlane.xlu0 %3688
        %v3690 = vadd.f32 %v3581, %v3583
        %3691 = vadd.xlane.f32.xlu0 %v3690
        %v3692 = vpop.xlane.xlu0 %3691
        %v3693 = vadd.f32 %v3585, %v3587
        %3694 = vadd.xlane.f32.xlu0 %v3693
        %v3695 = vpop.xlane.xlu0 %3694
        %v3696 = vadd.f32 %v3589, %v3591
        %3697 = vadd.xlane.f32.xlu0 %v3696
        %v3698 = vpop.xlane.xlu0 %3697
        %v3699 = vadd.f32 %v3593, %v3595
        %3700 = vadd.xlane.f32.xlu0 %v3699
        %v3701 = vpop.xlane.xlu0 %3700
        %v3702 = vadd.f32 %v3597, %v3599
        %3703 = vadd.xlane.f32.xlu0 %v3702
        %v3704 = vpop.xlane.xlu0 %3703
        %v3705 = vadd.f32 %v3601, %v3603
        %3706 = vadd.xlane.f32.xlu0 %v3705
        %v3707 = vpop.xlane.xlu0 %3706
        %v3708 = vadd.f32 %v3605, %v3607
        %3709 = vadd.xlane.f32.xlu0 %v3708
        %v3710 = vpop.xlane.xlu0 %3709
        %v3711 = vadd.f32 %v3609, %v3611
        %3712 = vadd.xlane.f32.xlu0 %v3711
        %v3713 = vpop.xlane.xlu0 %3712
        %v3714 = vadd.f32 %v3613, %v3615
        %3715 = vadd.xlane.f32.xlu0 %v3714
        %v3716 = vpop.xlane.xlu0 %3715
        %v3717 = vadd.f32 %v3617, %v3619
        %3718 = vadd.xlane.f32.xlu0 %v3717
        %v3719 = vpop.xlane.xlu0 %3718
        %v3720 = vadd.f32 %v3621, %v3623
        %3721 = vadd.xlane.f32.xlu0 %v3720
        %v3722 = vpop.xlane.xlu0 %3721
        %v3723 = vadd.f32 %v3625, %v3627
        %3724 = vadd.xlane.f32.xlu0 %v3723
        %v3725 = vpop.xlane.xlu0 %3724
        %v3726 = vadd.f32 %v3629, %v3631
        %3727 = vadd.xlane.f32.xlu0 %v3726
        %v3728 = vpop.xlane.xlu0 %3727
        %v3729 = vadd.f32 %v3633, %v3635
        %3730 = vadd.xlane.f32.xlu0 %v3729
        %v3731 = vpop.xlane.xlu0 %3730
        %v3732 = vrcp.pop %v3638
        %v3733 = vrcp.pop %v3641
        %v3734 = vrcp.pop %v3644
        %v3735 = vrcp.pop %v3647
        %v3736 = vrcp.pop %v3650
        %v3737 = vrcp.pop %v3653
        %v3738 = vrcp.pop %v3656
        %v3739 = vrcp.pop %v3659
        %v3740 = vrcp.pop %v3662
        %v3741 = vrcp.pop %v3665
        %v3742 = vrcp.pop %v3668
        %v3743 = vrcp.pop %v3671
        %v3744 = vrcp.pop %v3674
        %v3745 = vrcp.pop %v3677
        %v3746 = vrcp.pop %v3680
        %v3747 = vrcp.pop %v3683
        %v3748 = vrcp.pop %v3686
        %v3749 = vrcp.pop %v3689
        %v3750 = vrcp.pop %v3692
        %v3751 = vrcp.pop %v3695
        %v3752 = vrcp.pop %v3698
        %v3753 = vrcp.pop %v3701
        %v3754 = vrcp.pop %v3704
        %v3755 = vrcp.pop %v3707
        %v3756 = vrcp.pop %v3710
        %v3757 = vrcp.pop %v3713
        %v3758 = vrcp.pop %v3716
        %v3759 = vrcp.pop %v3719
        %v3760 = vrcp.pop %v3722
        %v3761 = vrcp.pop %v3725
        %v3762 = vrcp.pop %v3728
        %v3763 = vrcp.pop %v3731
        %v3764 = vmul.f32 %v3509, %v3732
        %v3765 = vmul.f32 %v3511, %v3732
        %v3766 = vmul.f32 %v3513, %v3733
        %v3767 = vmul.f32 %v3515, %v3733
        %v3768 = vmul.f32 %v3517, %v3734
        %v3769 = vmul.f32 %v3519, %v3734
        %v3770 = vmul.f32 %v3521, %v3735
        %v3771 = vmul.f32 %v3523, %v3735
        %v3772 = vmul.f32 %v3525, %v3736
        %v3773 = vmul.f32 %v3527, %v3736
        %v3774 = vmul.f32 %v3529, %v3737
        %v3775 = vmul.f32 %v3531, %v3737
        %v3776 = vmul.f32 %v3533, %v3738
        %v3777 = vmul.f32 %v3535, %v3738
        %v3778 = vmul.f32 %v3537, %v3739
        %v3779 = vmul.f32 %v3539, %v3739
        %v3780 = vmul.f32 %v3541, %v3740
        %v3781 = vmul.f32 %v3543, %v3740
        %v3782 = vmul.f32 %v3545, %v3741
        %v3783 = vmul.f32 %v3547, %v3741
        %v3784 = vmul.f32 %v3549, %v3742
        %v3785 = vmul.f32 %v3551, %v3742
        %v3786 = vmul.f32 %v3553, %v3743
        %v3787 = vmul.f32 %v3555, %v3743
        %v3788 = vmul.f32 %v3557, %v3744
        %v3789 = vmul.f32 %v3559, %v3744
        %v3790 = vmul.f32 %v3561, %v3745
        %v3791 = vmul.f32 %v3563, %v3745
        %v3792 = vmul.f32 %v3565, %v3746
        %v3793 = vmul.f32 %v3567, %v3746
        %v3794 = vmul.f32 %v3569, %v3747
        %v3795 = vmul.f32 %v3571, %v3747
        %v3796 = vmul.f32 %v3573, %v3748
        %v3797 = vmul.f32 %v3575, %v3748
        %v3798 = vmul.f32 %v3577, %v3749
        %v3799 = vmul.f32 %v3579, %v3749
        %v3800 = vmul.f32 %v3581, %v3750
        %v3801 = vmul.f32 %v3583, %v3750
        %v3802 = vmul.f32 %v3585, %v3751
        %v3803 = vmul.f32 %v3587, %v3751
        %v3804 = vmul.f32 %v3589, %v3752
        %v3805 = vmul.f32 %v3591, %v3752
        %v3806 = vmul.f32 %v3593, %v3753
        %v3807 = vmul.f32 %v3595, %v3753
        %v3808 = vmul.f32 %v3597, %v3754
        %v3809 = vmul.f32 %v3599, %v3754
        %v3810 = vmul.f32 %v3601, %v3755
        %v3811 = vmul.f32 %v3603, %v3755
        %v3812 = vmul.f32 %v3605, %v3756
        %v3813 = vmul.f32 %v3607, %v3756
        %v3814 = vmul.f32 %v3609, %v3757
        %v3815 = vmul.f32 %v3611, %v3757
        %v3816 = vmul.f32 %v3613, %v3758
        %v3817 = vmul.f32 %v3615, %v3758
        %v3818 = vmul.f32 %v3617, %v3759
        %v3819 = vmul.f32 %v3619, %v3759
        %v3820 = vmul.f32 %v3621, %v3760
        %v3821 = vmul.f32 %v3623, %v3760
        %v3822 = vmul.f32 %v3625, %v3761
        %v3823 = vmul.f32 %v3627, %v3761
        %v3824 = vmul.f32 %v3629, %v3762
        %v3825 = vmul.f32 %v3631, %v3762
        %v3826 = vmul.f32 %v3633, %v3763
        %v3827 = vmul.f32 %v3635, %v3763
        %v3828 = vpack.c.bf16 %v3766, %v3764
        %v3829 = vpack.c.bf16 %v3767, %v3765
        %v3830 = vpack.c.bf16 %v3770, %v3768
        %v3831 = vpack.c.bf16 %v3771, %v3769
        %v3832 = vpack.c.bf16 %v3774, %v3772
        %v3833 = vpack.c.bf16 %v3775, %v3773
        %v3834 = vpack.c.bf16 %v3778, %v3776
        %v3835 = vpack.c.bf16 %v3779, %v3777
        %v3836 = vpack.c.bf16 %v3782, %v3780
        %v3837 = vpack.c.bf16 %v3783, %v3781
        %v3838 = vpack.c.bf16 %v3786, %v3784
        %v3839 = vpack.c.bf16 %v3787, %v3785
        %v3840 = vpack.c.bf16 %v3790, %v3788
        %v3841 = vpack.c.bf16 %v3791, %v3789
        %v3842 = vpack.c.bf16 %v3794, %v3792
        %v3843 = vpack.c.bf16 %v3795, %v3793
        %v3844 = vpack.c.bf16 %v3798, %v3796
        %v3845 = vpack.c.bf16 %v3799, %v3797
        %v3846 = vpack.c.bf16 %v3802, %v3800
        %v3847 = vpack.c.bf16 %v3803, %v3801
        %v3848 = vpack.c.bf16 %v3806, %v3804
        %v3849 = vpack.c.bf16 %v3807, %v3805
        %v3850 = vpack.c.bf16 %v3810, %v3808
        %v3851 = vpack.c.bf16 %v3811, %v3809
        %v3852 = vpack.c.bf16 %v3814, %v3812
        %v3853 = vpack.c.bf16 %v3815, %v3813
        %v3854 = vpack.c.bf16 %v3818, %v3816
        %v3855 = vpack.c.bf16 %v3819, %v3817
        %v3856 = vpack.c.bf16 %v3822, %v3820
        %v3857 = vpack.c.bf16 %v3823, %v3821
        %v3858 = vpack.c.bf16 %v3826, %v3824
        %v3859 = vpack.c.bf16 %v3827, %v3825
        %v3862 = vrot.slane %v2221, 4
        %v3863 = vrot.slane %v2222, 4
        %3866 = vmatprep.subr.bf16.mxu0 %v3843
        %3867 = vmatpush1.bf16.xpose.msra.mxu0 %v3842
        %3868 = vmatprep.subr.bf16.mxu0 %v3841
        %3869 = vmatpush1.bf16.xpose.msra.mxu0 %v3840
        %3870 = vmatprep.subr.bf16.mxu0 %v3839
        %3871 = vmatpush1.bf16.xpose.msra.mxu0 %v3838
        %3872 = vmatprep.subr.bf16.mxu0 %v3837
        %3873 = vmatpush1.bf16.xpose.msra.mxu0 %v3836
        %3874 = vmatprep.subr.bf16.mxu0 %v3835
        %3875 = vmatpush1.bf16.xpose.msra.mxu0 %v3834
        %3876 = vmatprep.subr.bf16.mxu0 %v3833
        %3877 = vmatpush1.bf16.xpose.msra.mxu0 %v3832
        %3878 = vmatprep.subr.bf16.mxu0 %v3831
        %3879 = vmatpush1.bf16.xpose.msra.mxu0 %v3830
        %3880 = vmatprep.subr.bf16.mxu0 %v3829
        %3881 = vmatpush1.bf16.xpose.msra.mxu0 %v3828
        %3882 = vmatprep.subr.bf16.mxu0 %v3859
        %3883 = vmatpush2.bf16.xpose.msra.mxu0 %v3858
        %3884 = vmatprep.subr.bf16.mxu0 %v3857
        %3885 = vmatpush2.bf16.xpose.msra.mxu0 %v3856
        %3886 = vmatprep.subr.bf16.mxu0 %v3855
        %3887 = vmatpush2.bf16.xpose.msra.mxu0 %v3854
        %3888 = vmatprep.subr.bf16.mxu0 %v3853
        %3889 = vmatpush2.bf16.xpose.msra.mxu0 %v3852
        %3890 = vmatprep.subr.bf16.mxu0 %v3851
        %3891 = vmatpush2.bf16.xpose.msra.mxu0 %v3850
        %3892 = vmatprep.subr.bf16.mxu0 %v3849
        %3893 = vmatpush2.bf16.xpose.msra.mxu0 %v3848
        %3894 = vmatprep.subr.bf16.mxu0 %v3847
        %3895 = vmatpush2.bf16.xpose.msra.mxu0 %v3846
        %3896 = vmatprep.subr.bf16.mxu0 %v3845
        %3897 = vmatpush2.bf16.xpose.msra.mxu0 %v3844
        %3898 = vmatprep.mubr.bf16.mxu0 %v3863
        %3899 = vmatmul.mubr.bf16.gmra.mxu0 %v3862
        %v3900 = vpop.f32.mrf.mxu0
        %v3901 = vadd.f32 0.0, %v3900
        %v3902 = vpop.f32.mrf.mxu0
        %v3903 = vadd.f32 0.0, %v3902
        %v3904 = vpop.f32.mrf.mxu0
        %v3905 = vpop.f32.mrf.mxu0
        %3906 = vdwg.mxu0
        %v3907 = vld [vmem:[%s12] sm:$0xf]
        %v3908 = vld [vmem:[%s12 + $0x4] sm:$0xf]
        %v3909 = vld [vmem:[%s12 + $0x8] sm:$0xf]
        %v3910 = vld [vmem:[%s13] sm:$0xff]
        %v3911 = vld [vmem:[%s13 + $0x8] sm:$0xff]
        %v3912 = vld [vmem:[%s13 + $0x10] sm:$0xff]
        %v3913 = vld [vmem:[%s14] sm:$0xf]
        %v3914 = vld [vmem:[%s15] sm:$0xff]
        %v3915 = vpack.c.bf16 %v1208, %v1200
        %v3916 = vpack.c.bf16 %v1209, %v1201
        %3918 = vset.pattern.permute.xlu0 0
        %3919 = vperm.xlu0 %3918, %v3910
        %v3920 = vpop.permute.xlu0 %3919
        %vm3922 = vcmask 130048
        %v3924 = vsel %vm3922, %v3907, 0
        %3926 = vmatprep.subr.bf16.mxu0 0
        %3927 = vmatpush1.bf16.msra.mxu0 0
        %3928 = vmatprep.subr.bf16.mxu0 0
        %3929 = vmatpush1.bf16.msra.mxu0 0
        %3930 = vmatprep.subr.bf16.mxu0 0
        %3931 = vmatpush1.bf16.msra.mxu0 0
        %3932 = vmatprep.subr.bf16.mxu0 0
        %3933 = vmatpush1.bf16.msra.mxu0 0
        %3934 = vmatprep.subr.bf16.mxu0 0
        %3935 = vmatpush1.bf16.msra.mxu0 0
        %3936 = vmatprep.subr.bf16.mxu0 0
        %3937 = vmatpush1.bf16.msra.mxu0 0
        %3938 = vmatprep.subr.bf16.mxu0 0
        %3939 = vmatpush1.bf16.msra.mxu0 0
        %3940 = vmatprep.subr.bf16.mxu0 %v3916
        %3941 = vmatpush1.bf16.msra.mxu0 %v3915
        %3942 = vmatprep.subr.bf16.mxu0 0
        %3943 = vmatpush2.bf16.msra.mxu0 0
        %3944 = vmatprep.subr.bf16.mxu0 0
        %3945 = vmatpush2.bf16.msra.mxu0 0
        %3946 = vmatprep.subr.bf16.mxu0 0
        %3947 = vmatpush2.bf16.msra.mxu0 0
        %3948 = vmatprep.subr.bf16.mxu0 0
        %3949 = vmatpush2.bf16.msra.mxu0 0
        %3950 = vmatprep.subr.bf16.mxu0 0
        %3951 = vmatpush2.bf16.msra.mxu0 0
        %3952 = vmatprep.subr.bf16.mxu0 0
        %3953 = vmatpush2.bf16.msra.mxu0 0
        %3954 = vmatprep.subr.bf16.mxu0 0
        %3955 = vmatpush2.bf16.msra.mxu0 0
        %3956 = vmatprep.subr.bf16.mxu0 0
        %3957 = vmatpush2.bf16.msra.mxu0 0
        %3958 = vmatprep.mubr.bf16.mxu0 0
        %3959 = vmatmul.mubr.bf16.gmra.mxu0 %v3924
        %v3960 = vpop.f32.mrf.mxu0
        %v3961 = vadd.f32 %v3920, %v3960
        %v3962 = vpop.f32.mrf.mxu0
        %v3963 = vadd.f32 %v3920, %v3962
        %v3964 = vpop.f32.mrf.mxu0
        %v3965 = vpop.f32.mrf.mxu0
        %3966 = vdwg.mxu0
        %v3967 = vand.u32 2147483647, %v3053
        %v3968 = vand.u32 2147483647, %v3055
        %v3969 = vand.u32 2147483647, %v3901
        %v3970 = vand.u32 2147483647, %v3903
        %v3971 = vsub.f32 0.0, %v3967
        %v3972 = vsub.f32 0.0, %v3968
        %v3973 = vsub.f32 0.0, %v3969
        %v3974 = vsub.f32 0.0, %v3970
        %v3975 = vmul.f32 %v3971, 1.442695
        %v3976 = vpow.pop %v3975
        %v3977 = vmul.f32 %v3972, 1.442695
        %v3978 = vpow.pop %v3977
        %v3979 = vmul.f32 %v3973, 1.442695
        %v3980 = vpow.pop %v3979
        %v3981 = vmul.f32 %v3974, 1.442695
        %v3982 = vpow.pop %v3981
        %v3983 = vsub.f32 %v3976, 1.0
        %v3984 = vsub.f32 %v3978, 1.0
        %v3985 = vsub.f32 %v3980, 1.0
        %v3986 = vsub.f32 %v3982, 1.0
        %vm3987 = vcmp.gt.f32.partialorder %v3053, 0.0
        %vm3988 = vcmp.gt.f32.partialorder %v3055, 0.0
        %vm3989 = vcmp.gt.f32.partialorder %v3901, 0.0
        %vm3990 = vcmp.gt.f32.partialorder %v3903, 0.0
        %v3991 = vsel %vm3987, %v3053, %v3983
        %v3992 = vsel %vm3988, %v3055, %v3984
        %v3993 = vsel %vm3989, %v3901, %v3985
        %v3994 = vsel %vm3990, %v3903, %v3986
        %v3995 = vsub.f32 0.0, %v3053
        %v3996 = vsub.f32 0.0, %v3055
        %v3997 = vsub.f32 0.0, %v3901
        %v3998 = vsub.f32 0.0, %v3903
        %v3999 = vsel %vm3987, %v3983, %v3995
        %v4000 = vsel %vm3988, %v3984, %v3996
        %v4001 = vsel %vm3989, %v3985, %v3997
        %v4002 = vsel %vm3990, %v3986, %v3998
        %v4003 = vpack.c.bf16 %v3993, %v3991
        %v4004 = vpack.c.bf16 %v3994, %v3992
        %v4005 = vpack.c.bf16 %v4001, %v3999
        %v4006 = vpack.c.bf16 %v4002, %v4000
        %4008 = vset.pattern.permute.xlu0 0
        %4009 = vperm.xlu0 %4008, %v3914
        %v4010 = vpop.permute.xlu0 %4009
        %vm4012 = vcmask 261120
        %v4014 = vsel %vm4012, %v3913, 0
        %4016 = vmatprep.subr.bf16.mxu0 0
        %4017 = vmatpush1.bf16.msra.mxu0 0
        %4018 = vmatprep.subr.bf16.mxu0 0
        %4019 = vmatpush1.bf16.msra.mxu0 0
        %4020 = vmatprep.subr.bf16.mxu0 0
        %4021 = vmatpush1.bf16.msra.mxu0 0
        %4022 = vmatprep.subr.bf16.mxu0 0
        %4023 = vmatpush1.bf16.msra.mxu0 0
        %4024 = vmatprep.subr.bf16.mxu0 0
        %4025 = vmatpush1.bf16.msra.mxu0 0
        %4026 = vmatprep.subr.bf16.mxu0 0
        %4027 = vmatpush1.bf16.msra.mxu0 0
        %4028 = vmatprep.subr.bf16.mxu0 %v4006
        %4029 = vmatpush1.bf16.msra.mxu0 %v4005
        %4030 = vmatprep.subr.bf16.mxu0 %v4004
        %4031 = vmatpush1.bf16.msra.mxu0 %v4003
        %4032 = vmatprep.subr.bf16.mxu0 0
        %4033 = vmatpush2.bf16.msra.mxu0 0
        %4034 = vmatprep.subr.bf16.mxu0 0
        %4035 = vmatpush2.bf16.msra.mxu0 0
        %4036 = vmatprep.subr.bf16.mxu0 0
        %4037 = vmatpush2.bf16.msra.mxu0 0
        %4038 = vmatprep.subr.bf16.mxu0 0
        %4039 = vmatpush2.bf16.msra.mxu0 0
        %4040 = vmatprep.subr.bf16.mxu0 0
        %4041 = vmatpush2.bf16.msra.mxu0 0
        %4042 = vmatprep.subr.bf16.mxu0 0
        %4043 = vmatpush2.bf16.msra.mxu0 0
        %4044 = vmatprep.subr.bf16.mxu0 0
        %4045 = vmatpush2.bf16.msra.mxu0 0
        %4046 = vmatprep.subr.bf16.mxu0 0
        %4047 = vmatpush2.bf16.msra.mxu0 0
        %4048 = vmatprep.mubr.bf16.mxu0 0
        %4049 = vmatmul.mubr.bf16.gmra.mxu0 %v4014
        %v4050 = vpop.f32.mrf.mxu0
        %v4051 = vadd.f32 %v4010, %v4050
        %v4052 = vpop.f32.mrf.mxu0
        %v4053 = vadd.f32 %v4010, %v4052
        %v4054 = vpop.f32.mrf.mxu0
        %v4055 = vpop.f32.mrf.mxu0
        %4056 = vdwg.mxu0
        %v4057 = vadd.f32 %v3961, %v4051
        %v4058 = vadd.f32 %v3963, %v4053
        %v4059 = vand.u32 2147483647, %v4057
        %v4060 = vand.u32 2147483647, %v4058
        %v4061 = vsub.f32 0.0, %v4059
        %v4062 = vsub.f32 0.0, %v4060
        %v4063 = vmul.f32 %v4061, 1.442695
        %v4064 = vpow.pop %v4063
        %v4065 = vmul.f32 %v4062, 1.442695
        %v4066 = vpow.pop %v4065
        %v4067 = vsub.f32 %v4064, 1.0
        %v4068 = vsub.f32 %v4066, 1.0
        %vm4069 = vcmp.gt.f32.partialorder %v4057, 0.0
        %vm4070 = vcmp.gt.f32.partialorder %v4058, 0.0
        %v4071 = vsel %vm4069, %v4057, %v4067
        %v4072 = vsel %vm4070, %v4058, %v4068
        %v4073 = vsub.f32 0.0, %v4057
        %v4074 = vsub.f32 0.0, %v4058
        %v4075 = vsel %vm4069, %v4067, %v4073
        %v4076 = vsel %vm4070, %v4068, %v4074
        %v4077 = vpack.c.bf16 %v4075, %v4071
        %v4078 = vpack.c.bf16 %v4076, %v4072
        %4080 = vset.pattern.permute.xlu0 0
        %4081 = vperm.xlu0 %4080, %v3911
        %v4082 = vpop.permute.xlu0 %4081
        %4085 = vset.pattern.permute.xlu0 0
        %4086 = vperm.xlu0 %4085, %v3912
        %v4087 = vpop.permute.xlu0 %4086
        %v4091 = vunpack.c.l.b16 %v3908
        %v4092 = vunpack.c.l.b16 %v3909
        %v4093 = vpack.c.b16 %v4092, %v4091
        %v4095 = vsel %vm3922, %v4093, 0
        %4097 = vmatprep.subr.bf16.mxu0 0
        %4098 = vmatpush1.bf16.msra.mxu0 0
        %4099 = vmatprep.subr.bf16.mxu0 0
        %4100 = vmatpush1.bf16.msra.mxu0 0
        %4101 = vmatprep.subr.bf16.mxu0 0
        %4102 = vmatpush1.bf16.msra.mxu0 0
        %4103 = vmatprep.subr.bf16.mxu0 0
        %4104 = vmatpush1.bf16.msra.mxu0 0
        %4105 = vmatprep.subr.bf16.mxu0 0
        %4106 = vmatpush1.bf16.msra.mxu0 0
        %4107 = vmatprep.subr.bf16.mxu0 0
        %4108 = vmatpush1.bf16.msra.mxu0 0
        %4109 = vmatprep.subr.bf16.mxu0 0
        %4110 = vmatpush1.bf16.msra.mxu0 0
        %4111 = vmatprep.subr.bf16.mxu0 %v4078
        %4112 = vmatpush1.bf16.msra.mxu0 %v4077
        %4113 = vmatprep.subr.bf16.mxu0 0
        %4114 = vmatpush2.bf16.msra.mxu0 0
        %4115 = vmatprep.subr.bf16.mxu0 0
        %4116 = vmatpush2.bf16.msra.mxu0 0
        %4117 = vmatprep.subr.bf16.mxu0 0
        %4118 = vmatpush2.bf16.msra.mxu0 0
        %4119 = vmatprep.subr.bf16.mxu0 0
        %4120 = vmatpush2.bf16.msra.mxu0 0
        %4121 = vmatprep.subr.bf16.mxu0 0
        %4122 = vmatpush2.bf16.msra.mxu0 0
        %4123 = vmatprep.subr.bf16.mxu0 0
        %4124 = vmatpush2.bf16.msra.mxu0 0
        %4125 = vmatprep.subr.bf16.mxu0 0
        %4126 = vmatpush2.bf16.msra.mxu0 0
        %4127 = vmatprep.subr.bf16.mxu0 0
        %4128 = vmatpush2.bf16.msra.mxu0 0
        %4129 = vmatprep.mubr.bf16.mxu0 0
        %4130 = vmatmul.mubr.bf16.gmra.mxu0 %v4095
        %v4131 = vpop.f32.mrf.mxu0
        %v4132 = vadd.f32 %v4082, %v4131
        %v4133 = vpop.f32.mrf.mxu0
        %v4134 = vadd.f32 %v4082, %v4133
        %v4135 = vpop.f32.mrf.mxu0
        %v4136 = vadd.f32 %v4087, %v4135
        %v4137 = vpop.f32.mrf.mxu0
        %v4138 = vadd.f32 %v4087, %v4137
        %4139 = vdwg.mxu0
        %v4140 = vxor.u32 %v4136, 2147483648
        %v4141 = vxor.u32 %v4138, 2147483648
        %v4142 = vmul.f32 %v4140, 1.442695
        %v4143 = vpow.pop %v4142
        %v4144 = vmul.f32 %v4141, 1.442695
        %v4145 = vpow.pop %v4144
        %v4146 = vadd.f32 %v4143, 1.0
        %v4147 = vadd.f32 %v4145, 1.0
        %v4148 = vrcp.pop %v4146
        %v4149 = vmul.f32 1.0, %v4148
        %v4150 = vrcp.pop %v4147
        %v4151 = vmul.f32 1.0, %v4150
        %v4152 = vmul.f32 %v4132, %v4149
        %v4153 = vmul.f32 %v4134, %v4151
        %v4154 = vadd.f32 %v1149, %v4152
        %v4155 = vadd.f32 %v1150, %v4153
        %4156 = vst [vmem:[%s529] sm:$0xff] %v4154
        %4157 = vst [vmem:[%s529 + $0x8] sm:$0xff] %v4155
        %s4158 = sand.u32 %s384, 1
        %s4159 = scalar_lea.sflag [#allocation3], %s4158
        %s4160 = sand.u32 %s384, 1
        %s4161 = smul.addr %s4160, 16
        %s4162 = scalar_lea.vmem [#allocation2], %s4161
        // Predicated region
        $region85: #{tpu_custom_call.1} parent=83 // pred_check
          %p4163 = pneg %p394
        $region86: #{tpu_custom_call.1} parent=83 // pred_check_branch
          %4165 = sbr.rel (%p4163) target = $region88
        $region87: #{tpu_custom_call.1} parent=83 // pred_region
          %s4167 = ssub.s32 256, 256
          %4168 = vsyncadd %s4159, %s4167
          %s4169 = smul.addr %s30, 2
          %s4170 = smul.addr %s4169, 128
          %s4171 = scalar_lea.hbm %s16, %s4170
          %s4173 = sshll.u32 %s4162, 4
          %s4174 = int_to_ptr.vmem [resolvable:$true] %s4173
          %4176 = dma.vmem_to_hbm [thread:$0]  %s4174, 256, %s4171, %s4159
        $region88: #{tpu_custom_call.1} parent=83 // pred_fallthru
          _
      $region84: #{tpu_custom_call.1} parent=5 // pred_fallthru
        _
      %p4177 = scmp.le.s32.totalorder 2, %s25
      // Predicated region
      $region89: #{tpu_custom_call.1} parent=5 // pred_check
        %p4178 = pneg %p4177
      $region90: #{tpu_custom_call.1} parent=5 // pred_check_branch
        %4180 = sbr.rel (%p4178) target = $region92
      $region91: #{tpu_custom_call.1} parent=5 // pred_region
        %s4181 = ssub.s32 %s25, 2
        // Predicated region
        $region93: #{tpu_custom_call.1} parent=91 // pred_check
          %p4182 = pneg %p400
        $region94: #{tpu_custom_call.1} parent=91 // pred_check_branch
          %4184 = sbr.rel (%p4182) target = $region96
        $region95: #{tpu_custom_call.1} parent=91 // pred_region
          %s4185 = sand.u32 %s385, 1
          %s4186 = scalar_lea.sflag [#allocation3], %s4185
          %s4187 = sand.u32 %s385, 1
          %s4188 = smul.addr %s4187, 16
          %s4189 = scalar_lea.vmem [#allocation2], %s4188
          %4190 = dma.done %s4186, 256
        $region96: #{tpu_custom_call.1} parent=91 // pred_fallthru
          _
      $region92: #{tpu_custom_call.1} parent=5 // pred_fallthru
        _
    $region6: #{tpu_custom_call.1} parent=1 // loop_footer
      %s29 = sadd.s32 1, %s25
    $region7: #{tpu_custom_call.1} parent=1 // loop_footer_branch
      %24 = sbr.rel target = $region3
    $region8: #{tpu_custom_call.1} parent=1 // loop_exit
      _
    %4191 = vsyncpa [#allocation3], 1
    %s4192 = scalar_lea.sflag [#allocation3], 1
    %4193 = vsyncpa %s4192, 1

</llo_original>
